<compile_context>
chip_gen: v6e
topology: v6e:2x2x1
jax: 0.10.0
libtpu: 0.0.40
codegen_flags: <defaults>
</compile_context>

<pallas_src>
from functools import partial

import jax
import jax.numpy as jnp
from jax.experimental import pallas as pl
from jax.experimental.pallas import tpu as pltpu

EPS_BN = 1e-5
K_NN = 3
_PAD_POS = 1e6      # coordinate for padded sub-points (huge distance -> never selected)
_MASKED = 1e30      # distance used to mask already-selected neighbours


def _round_up(n, m):
    return ((n + m - 1) // m) * m


def _pick_cols_tile(n_cols, cap=1024):
    """Largest tile <= cap that divides n_cols (n_cols is a multiple of 128)."""
    t = min(cap, n_cols)
    while n_cols % t:
        t //= 2
    return t


def _pick_query_tile(s_pad, c_out, n):
    """Largest multiple-of-128 query tile whose (S, T) working set fits a conservative
    VMEM budget (sized for v7x's 64 MiB physical / 32 MiB scoped VMEM)."""
    budget = 20 * 1024 * 1024
    # ~6 live f32/int32 (S, T)-sized intermediates + the lane-dense I/O columns.
    bytes_per_col = (6 * s_pad + 4 * (c_out + 3)) * 4
    tile = 1024
    while tile > 128 and tile * bytes_per_col > budget:
        tile //= 2
    return min(tile, _round_up(n, 128))


# ------------------------------------------------------------------------------
# Pass 1: tiled Linear + per-channel sum / sum-of-squares (BatchNorm batch stats).
# x_t is (C_in, Np), points on lanes; zero-padded columns contribute nothing
# (there is no bias term, so a zero column maps to a zero h column).
# ------------------------------------------------------------------------------
def _linear_stats_kernel(x_ref, w_ref, sum_ref, sq_ref):
    @pl.when(pl.program_id(0) == 0)
    def _init():
        sum_ref[...] = jnp.zeros_like(sum_ref)
        sq_ref[...] = jnp.zeros_like(sq_ref)

    # h_t = W^T @ x_t  ->  (C_out, tile)
    h = jnp.dot(w_ref[...], x_ref[...], preferred_element_type=jnp.float32)
    sum_ref[...] += jnp.sum(h, axis=1, keepdims=True)
    sq_ref[...] += jnp.sum(h * h, axis=1, keepdims=True)


def _linear_stats(x_t, w_t, *, tile):
    c_in, n_pad = x_t.shape
    c_out = w_t.shape[0]
    return pl.pallas_call(
        _linear_stats_kernel,
        out_shape=(jax.ShapeDtypeStruct((c_out, 1), jnp.float32),
                   jax.ShapeDtypeStruct((c_out, 1), jnp.float32)),
        grid=(n_pad // tile,),
        in_specs=[pl.BlockSpec((c_in, tile), lambda i: (0, i)),
                  pl.BlockSpec((c_out, c_in), lambda i: (0, 0))],
        out_specs=(pl.BlockSpec((c_out, 1), lambda i: (0, 0)),
                   pl.BlockSpec((c_out, 1), lambda i: (0, 0))),
        compiler_params=pltpu.CompilerParams(
            dimension_semantics=("arbitrary",)),   # output blocks are revisited accumulators
    )(x_t, w_t)


def _fold_bn(sums, sumsqs, n_true, gamma, beta):
    """Fold training-mode BatchNorm1d into per-channel scale/shift: y = scale*h + shift."""
    mean = sums[:, 0] / n_true
    var = jnp.maximum(sumsqs[:, 0] / n_true - mean * mean, 0.0)   # biased variance
    scale = gamma.astype(jnp.float32) * jax.lax.rsqrt(var + EPS_BN)
    shift = beta.astype(jnp.float32) - mean * scale
    return jnp.stack([scale, shift], axis=1)                       # (C_out, 2)


# ------------------------------------------------------------------------------
# Pass 2 (sub level only): tiled Linear -> scale/shift -> ReLU, producing the
# interpolation source features h_sub in lane-dense (C_out, S) layout.
# ------------------------------------------------------------------------------
def _mlp_apply_kernel(x_ref, w_ref, ss_ref, o_ref):
    h = jnp.dot(w_ref[...], x_ref[...], preferred_element_type=jnp.float32)
    o_ref[...] = jnp.maximum(h * ss_ref[:, 0:1] + ss_ref[:, 1:2], 0.0)


def _mlp_apply(x_t, w_t, ss, *, tile):
    c_in, n_pad = x_t.shape
    c_out = w_t.shape[0]
    return pl.pallas_call(
        _mlp_apply_kernel,
        out_shape=jax.ShapeDtypeStruct((c_out, n_pad), jnp.float32),
        grid=(n_pad // tile,),
        in_specs=[pl.BlockSpec((c_in, tile), lambda i: (0, i)),
                  pl.BlockSpec((c_out, c_in), lambda i: (0, 0)),
                  pl.BlockSpec((c_out, 2), lambda i: (0, 0))],
        out_specs=pl.BlockSpec((c_out, tile), lambda i: (0, i)),
        compiler_params=pltpu.CompilerParams(dimension_semantics=("parallel",)),
    )(x_t, w_t, ss)


# ------------------------------------------------------------------------------
# Fused kernel: knn_interpolate(k=3) + mlp(x) (Linear/BN/ReLU) + residual add.
# Grid tiles the query-point axis (lanes); pos_sub / h_sub stay resident.
# ------------------------------------------------------------------------------
def _knn_mlp_kernel(pos_sub_ref, pos_t_ref, h_sub_ref, x_t_ref, w_x_ref, ss_x_ref,
                    o_ref, *, interp_dtype):
    s_pad = pos_sub_ref.shape[0]
    t = pos_t_ref.shape[1]

    # Squared distances (S, T) from direct coordinate differences.
    d2 = None
    for d in range(3):
        diff = pos_sub_ref[:, d:d + 1] - pos_t_ref[d:d + 1, :]     # (S,1)-(1,T) -> (S,T)
        d2 = diff * diff if d2 is None else d2 + diff * diff

    # Iterative top-3: accumulate a single (S, T) weight matrix, ONE gather matmul after.
    iota_s = jax.lax.broadcasted_iota(jnp.int32, (s_pad, t), 0)
    w_acc = jnp.zeros((s_pad, t), jnp.float32)
    for _ in range(K_NN):
        dmin = jnp.min(d2, axis=0, keepdims=True)                            # (1, T)
        sel = jnp.min(jnp.where(d2 <= dmin, iota_s, s_pad), axis=0,
                      keepdims=True)                                         # (1, T)
        one_hot = iota_s == sel                                              # (S, T)
        w = pl.reciprocal(jnp.maximum(dmin, 1e-16), approx=True)             # 1/clamp(d^2)
        w_acc = w_acc + jnp.where(one_hot, w, 0.0)
        d2 = jnp.where(one_hot, _MASKED, d2)
    # TODO(synk): if the true number of sub-points is < 3, re-selected padded entries add
    # ~1e-12 spurious weight (torch_geometric handles k > num_points differently).

    num = jnp.dot(h_sub_ref[...].astype(interp_dtype), w_acc.astype(interp_dtype),
                  preferred_element_type=jnp.float32)                        # (C, T)
    den = jnp.sum(w_acc, axis=0, keepdims=True)                              # (1, T)
    interp = num * pl.reciprocal(den, approx=True)

    # Fused mlp(x): Linear (bias folds into BN) -> scale/shift -> ReLU, + residual add.
    h = jnp.dot(w_x_ref[...], x_t_ref[...], preferred_element_type=jnp.float32)
    h = jnp.maximum(h * ss_x_ref[:, 0:1] + ss_x_ref[:, 1:2], 0.0)
    o_ref[...] = h + interp


def transition_up(x, x_sub, pos, pos_sub, params, *, query_tile=None,
                  interp_dtype=jnp.float32):
    """TransitionUp forward. x:(N,out_ch), x_sub:(N_sub,in_ch), pos:(N,3), pos_sub:(N_sub,3)."""
    n, c_out = x.shape
    s, _ = x_sub.shape
    f32 = jnp.float32

    # --- layout plumbing (outside the kernels): channels-major transpose + padding so
    #     every Pallas block is lane/sublane aligned (no divisibility asserts).
    s_pad = _round_up(max(s, K_NN), 128)
    tile = query_tile or _pick_query_tile(s_pad, c_out, n)
    n_pad = _round_up(n, tile)

    pos_t = jnp.pad(pos.astype(f32).T, ((0, 0), (0, n_pad - n)))              # (3, Np)
    x_t = jnp.pad(x.astype(f32).T, ((0, 0), (0, n_pad - n)))                  # (C, Np)
    x_sub_t = jnp.pad(x_sub.astype(f32).T, ((0, 0), (0, s_pad - s)))          # (Cin, Sp)
    pos_sub_p = jnp.pad(pos_sub.astype(f32), ((0, s_pad - s), (0, 0)),
                        constant_values=_PAD_POS)                             # (Sp, 3)

    w_sub_t = params["w_sub"].astype(f32).T                                   # (C, Cin)
    w_x_t = params["w"].astype(f32).T                                         # (C, C)

    # --- BatchNorm batch statistics (tiled Linear + reduce), folded to scale/shift.
    sub_tile = _pick_cols_tile(s_pad)
    s_sum, s_sq = _linear_stats(x_sub_t, w_sub_t, tile=sub_tile)
    x_sum, x_sq = _linear_stats(x_t, w_x_t, tile=tile)
    ss_sub = _fold_bn(s_sum, s_sq, s, params["g_sub"], params["be_sub"])
    ss_x = _fold_bn(x_sum, x_sq, n, params["g"], params["be"])

    # --- mlp_sub applied once -> interpolation source features (C, Sp), lane-dense.
    h_sub_t = _mlp_apply(x_sub_t, w_sub_t, ss_sub, tile=sub_tile)

    # --- fused kNN interpolation + mlp(x) + residual.
    kernel = partial(_knn_mlp_kernel, interp_dtype=interp_dtype)
    out_t = pl.pallas_call(
        kernel,
        out_shape=jax.ShapeDtypeStruct((c_out, n_pad), f32),
        grid=(n_pad // tile,),
        in_specs=[
            pl.BlockSpec((s_pad, 3), lambda i: (0, 0)),        # pos_sub (resident)
            pl.BlockSpec((3, tile), lambda i: (0, i)),         # pos tile (lane-dense)
            pl.BlockSpec((c_out, s_pad), lambda i: (0, 0)),    # h_sub (resident)
            pl.BlockSpec((c_out, tile), lambda i: (0, i)),     # x tile (lane-dense)
            pl.BlockSpec((c_out, c_out), lambda i: (0, 0)),    # mlp(x) weight
            pl.BlockSpec((c_out, 2), lambda i: (0, 0)),        # mlp(x) BN scale/shift
        ],
        out_specs=pl.BlockSpec((c_out, tile), lambda i: (0, i)),
        compiler_params=pltpu.CompilerParams(
            dimension_semantics=("parallel",),                 # megacore / v7x sharding
            vmem_limit_bytes=48 * 1024 * 1024),
    )(pos_sub_p, pos_t, h_sub_t, x_t, w_x_t, ss_x)

    return out_t[:, :n].T                                      # back to (N, C)


if __name__ == "__main__":
    key = jax.random.PRNGKey(0)
    in_channels, out_channels = 32, 16
    N, N_sub = 512, 96

    k1, k2, k3, k4, k5, k6 = jax.random.split(key, 6)
    x = jax.random.normal(k1, (N, out_channels), jnp.float32)         # skip-connection feats
    x_sub = jax.random.normal(k2, (N_sub, in_channels), jnp.float32)  # coarse-level feats
    pos = jax.random.normal(k3, (N, 3), jnp.float32)
    pos_sub = jax.random.normal(k4, (N_sub, 3), jnp.float32)

    # Linear weights random, BatchNorm gamma=1 / beta=0 (PyTorch defaults). Linear biases
    # are omitted: training-mode BatchNorm subtracts the batch mean, so they cancel exactly.
    params = {
        "w_sub": 0.1 * jax.random.normal(k5, (in_channels, out_channels), jnp.float32),
        "g_sub": jnp.ones((out_channels,), jnp.float32),
        "be_sub": jnp.zeros((out_channels,), jnp.float32),
        "w": 0.1 * jax.random.normal(k6, (out_channels, out_channels), jnp.float32),
        "g": jnp.ones((out_channels,), jnp.float32),
        "be": jnp.zeros((out_channels,), jnp.float32),
    }

    out = jax.jit(transition_up)(x, x_sub, pos, pos_sub, params)
    jax.block_until_ready(out)
    assert out.shape == (N, out_channels) and out.dtype == jnp.float32

    # Pure-JAX reference (loose tolerance: kernel uses EUP approximate reciprocals).
    def reference(x, x_sub, pos, pos_sub, params):
        def mlp(h, w, g, b):
            h = h @ w
            mu = jnp.mean(h, axis=0)
            var = jnp.mean((h - mu) ** 2, axis=0)
            return jnp.maximum((h - mu) * jax.lax.rsqrt(var + EPS_BN) * g + b, 0.0)

        h_sub = mlp(x_sub, params["w_sub"], params["g_sub"], params["be_sub"])
        d2 = jnp.sum((pos[:, None, :] - pos_sub[None, :, :]) ** 2, axis=-1)
        _, idx = jax.lax.top_k(-d2, K_NN)
        dk = jnp.take_along_axis(d2, idx, axis=1)
        w = 1.0 / jnp.maximum(dk, 1e-16)
        interp = jnp.einsum("nk,nkc->nc", w, h_sub[idx]) / jnp.sum(w, axis=1, keepdims=True)
        return mlp(x, params["w"], params["g"], params["be"]) + interp

    ref = reference(x, x_sub, pos, pos_sub, params)
    rel_err = float(jnp.max(jnp.abs(out - ref)) / (jnp.max(jnp.abs(ref)) + 1e-6))
    assert rel_err < 5e-2, f"mismatch vs reference: rel_err={rel_err}"
    print("KERNEL_OK")
</pallas_src>

<mosaic_0001>
module attributes {stable_mosaic.version = 11 : i64} {
  func.func @_linear_stats_kernel(%arg0: i32, %arg1: memref<32x128xf32, #tpu.memory_space<vmem>>, %arg2: memref<16x32xf32, #tpu.memory_space<vmem>>, %arg3: memref<16x1xf32, #tpu.memory_space<vmem>>, %arg4: memref<16x1xf32, #tpu.memory_space<vmem>>) attributes {dimension_semantics = [#tpu.dimension_semantics<arbitrary>], iteration_bounds = array<i64: 1>, scalar_prefetch = 0 : i64, scratch_operands = 0 : i64, tpu.core_type = #tpu.core_type<tc>, window_params = [{transform_indices = @transform_0, window_bounds = array<i64: 32, 128>}, {pipeline_mode = #tpu.pipeline_mode<synchronous>, transform_indices = @transform_1, window_bounds = array<i64: 16, 32>}, {pipeline_mode = #tpu.pipeline_mode<synchronous>, transform_indices = @transform_2, window_bounds = array<i64: 16, 1>}, {pipeline_mode = #tpu.pipeline_mode<synchronous>, transform_indices = @transform_3, window_bounds = array<i64: 16, 1>}]} {
    %c0_i32 = arith.constant 0 : i32
    %0 = arith.cmpi eq, %arg0, %c0_i32 : i32
    %1 = arith.extui %0 : i1 to i32
    %c0_i32_0 = arith.constant 0 : i32
    %2 = arith.cmpi ne, %1, %c0_i32_0 : i32
    scf.if %2 {
      %cst_14 = arith.constant 0.000000e+00 : f32
      %17 = vector.broadcast %cst_14 : f32 to vector<16x1xf32>
      %c0_15 = arith.constant 0 : index
      %c0_16 = arith.constant 0 : index
      %18 = vector.load %arg3[%c0_15, %c0_16] : memref<16x1xf32, #tpu.memory_space<vmem>>, vector<16x1xf32>
      tpu.vector_store %arg3[%c0_15, %c0_16], %17 {strides = array<i32>} : memref<16x1xf32, #tpu.memory_space<vmem>>, vector<16x1xf32>,
      %cst_17 = arith.constant 0.000000e+00 : f32
      %19 = vector.broadcast %cst_17 : f32 to vector<16x1xf32>
      %c0_18 = arith.constant 0 : index
      %c0_19 = arith.constant 0 : index
      %20 = vector.load %arg4[%c0_18, %c0_19] : memref<16x1xf32, #tpu.memory_space<vmem>>, vector<16x1xf32>
      tpu.vector_store %arg4[%c0_18, %c0_19], %19 {strides = array<i32>} : memref<16x1xf32, #tpu.memory_space<vmem>>, vector<16x1xf32>,
    } else {
    }
    %c0 = arith.constant 0 : index
    %c0_1 = arith.constant 0 : index
    %3 = vector.load %arg2[%c0, %c0_1] : memref<16x32xf32, #tpu.memory_space<vmem>>, vector<16x32xf32>
    %c0_2 = arith.constant 0 : index
    %c0_3 = arith.constant 0 : index
    %4 = vector.load %arg1[%c0_2, %c0_3] : memref<32x128xf32, #tpu.memory_space<vmem>>, vector<32x128xf32>
    %cst = arith.constant dense<0.000000e+00> : vector<16x128xf32>
    %5 = tpu.matmul %3, %4, %cst {dimension_numbers = #tpu.dot_dimension_numbers<[1], [0], [0], [1], [0, 0, 1, 1], [], []>} : vector<16x32xf32>, vector<32x128xf32>, vector<16x128xf32> -> vector<16x128xf32>
    %c0_4 = arith.constant 0 : index
    %c0_5 = arith.constant 0 : index
    %6 = vector.load %arg3[%c0_4, %c0_5] : memref<16x1xf32, #tpu.memory_space<vmem>>, vector<16x1xf32>
    %cst_6 = arith.constant dense<0.000000e+00> : vector<16xf32>
    %7 = vector.multi_reduction <add>, %5, %cst_6 [1] : vector<16x128xf32> to vector<16xf32>
    %8 = vector.shape_cast %7 : vector<16xf32> to vector<16x1xf32>
    %9 = arith.addf %6, %8 : vector<16x1xf32>
    %c0_7 = arith.constant 0 : index
    %c0_8 = arith.constant 0 : index
    %10 = vector.load %arg3[%c0_7, %c0_8] : memref<16x1xf32, #tpu.memory_space<vmem>>, vector<16x1xf32>
    tpu.vector_store %arg3[%c0_7, %c0_8], %9 {strides = array<i32>} : memref<16x1xf32, #tpu.memory_space<vmem>>, vector<16x1xf32>,
    %c0_9 = arith.constant 0 : index
    %c0_10 = arith.constant 0 : index
    %11 = vector.load %arg4[%c0_9, %c0_10] : memref<16x1xf32, #tpu.memory_space<vmem>>, vector<16x1xf32>
    %12 = arith.mulf %5, %5 : vector<16x128xf32>
    %cst_11 = arith.constant dense<0.000000e+00> : vector<16xf32>
    %13 = vector.multi_reduction <add>, %12, %cst_11 [1] : vector<16x128xf32> to vector<16xf32>
    %14 = vector.shape_cast %13 : vector<16xf32> to vector<16x1xf32>
    %15 = arith.addf %11, %14 : vector<16x1xf32>
    %c0_12 = arith.constant 0 : index
    %c0_13 = arith.constant 0 : index
    %16 = vector.load %arg4[%c0_12, %c0_13] : memref<16x1xf32, #tpu.memory_space<vmem>>, vector<16x1xf32>
    tpu.vector_store %arg4[%c0_12, %c0_13], %15 {strides = array<i32>} : memref<16x1xf32, #tpu.memory_space<vmem>>, vector<16x1xf32>,
    return
  }
  func.func @transform_0(%arg0: i32) -> (i32, i32) {
    %c0_i32 = arith.constant 0 : i32
    %c0_i32_0 = arith.constant 0 : i32
    return %c0_i32, %arg0 : i32, i32
  }
  func.func @transform_1(%arg0: i32) -> (i32, i32) {
    %c0_i32 = arith.constant 0 : i32
    %c0_i32_0 = arith.constant 0 : i32
    %c0_i32_1 = arith.constant 0 : i32
    return %c0_i32, %c0_i32_0 : i32, i32
  }
  func.func @transform_2(%arg0: i32) -> (i32, i32) {
    %c0_i32 = arith.constant 0 : i32
    %c0_i32_0 = arith.constant 0 : i32
    %c0_i32_1 = arith.constant 0 : i32
    return %c0_i32, %c0_i32_0 : i32, i32
  }
  func.func @transform_3(%arg0: i32) -> (i32, i32) {
    %c0_i32 = arith.constant 0 : i32
    %c0_i32_0 = arith.constant 0 : i32
    %c0_i32_1 = arith.constant 0 : i32
    return %c0_i32, %c0_i32_0 : i32, i32
  }
}

module attributes {stable_mosaic.version = 11 : i64} {
  func.func @_mlp_apply_kernel(%arg0: i32, %arg1: memref<32x128xf32, #tpu.memory_space<vmem>>, %arg2: memref<16x32xf32, #tpu.memory_space<vmem>>, %arg3: memref<16x2xf32, #tpu.memory_space<vmem>>, %arg4: memref<16x128xf32, #tpu.memory_space<vmem>>) attributes {dimension_semantics = [#tpu.dimension_semantics<parallel>], iteration_bounds = array<i64: 1>, scalar_prefetch = 0 : i64, scratch_operands = 0 : i64, tpu.core_type = #tpu.core_type<tc>, window_params = [{transform_indices = @transform_0, window_bounds = array<i64: 32, 128>}, {pipeline_mode = #tpu.pipeline_mode<synchronous>, transform_indices = @transform_1, window_bounds = array<i64: 16, 32>}, {pipeline_mode = #tpu.pipeline_mode<synchronous>, transform_indices = @transform_2, window_bounds = array<i64: 16, 2>}, {transform_indices = @transform_3, window_bounds = array<i64: 16, 128>}]} {
    %c0 = arith.constant 0 : index
    %c0_0 = arith.constant 0 : index
    %0 = vector.load %arg2[%c0, %c0_0] : memref<16x32xf32, #tpu.memory_space<vmem>>, vector<16x32xf32>
    %c0_1 = arith.constant 0 : index
    %c0_2 = arith.constant 0 : index
    %1 = vector.load %arg1[%c0_1, %c0_2] : memref<32x128xf32, #tpu.memory_space<vmem>>, vector<32x128xf32>
    %cst = arith.constant dense<0.000000e+00> : vector<16x128xf32>
    %2 = tpu.matmul %0, %1, %cst {dimension_numbers = #tpu.dot_dimension_numbers<[1], [0], [0], [1], [0, 0, 1, 1], [], []>} : vector<16x32xf32>, vector<32x128xf32>, vector<16x128xf32> -> vector<16x128xf32>
    %c0_3 = arith.constant 0 : index
    %c0_4 = arith.constant 0 : index
    %3 = vector.load %arg3[%c0_3, %c0_4] : memref<16x2xf32, #tpu.memory_space<vmem>>, vector<16x1xf32>
    %4 = vector.broadcast %3 : vector<16x1xf32> to vector<16x128xf32>
    %5 = arith.mulf %2, %4 : vector<16x128xf32>
    %c0_5 = arith.constant 0 : index
    %c1 = arith.constant 1 : index
    %6 = vector.load %arg3[%c0_5, %c1] : memref<16x2xf32, #tpu.memory_space<vmem>>, vector<16x1xf32>
    %7 = vector.broadcast %6 : vector<16x1xf32> to vector<16x128xf32>
    %8 = arith.addf %5, %7 : vector<16x128xf32>
    %cst_6 = arith.constant 0.000000e+00 : f32
    %9 = vector.broadcast %cst_6 : f32 to vector<16x128xf32>
    %10 = arith.maximumf %8, %9 : vector<16x128xf32>
    %c0_7 = arith.constant 0 : index
    %c0_8 = arith.constant 0 : index
    %11 = vector.load %arg4[%c0_7, %c0_8] : memref<16x128xf32, #tpu.memory_space<vmem>>, vector<16x128xf32>
    tpu.vector_store %arg4[%c0_7, %c0_8], %10 {strides = array<i32>} : memref<16x128xf32, #tpu.memory_space<vmem>>, vector<16x128xf32>,
    return
  }
  func.func @transform_0(%arg0: i32) -> (i32, i32) {
    %c0_i32 = arith.constant 0 : i32
    %c0_i32_0 = arith.constant 0 : i32
    return %c0_i32, %arg0 : i32, i32
  }
  func.func @transform_1(%arg0: i32) -> (i32, i32) {
    %c0_i32 = arith.constant 0 : i32
    %c0_i32_0 = arith.constant 0 : i32
    %c0_i32_1 = arith.constant 0 : i32
    return %c0_i32, %c0_i32_0 : i32, i32
  }
  func.func @transform_2(%arg0: i32) -> (i32, i32) {
    %c0_i32 = arith.constant 0 : i32
    %c0_i32_0 = arith.constant 0 : i32
    %c0_i32_1 = arith.constant 0 : i32
    return %c0_i32, %c0_i32_0 : i32, i32
  }
  func.func @transform_3(%arg0: i32) -> (i32, i32) {
    %c0_i32 = arith.constant 0 : i32
    %c0_i32_0 = arith.constant 0 : i32
    return %c0_i32, %arg0 : i32, i32
  }
}

module attributes {stable_mosaic.version = 11 : i64} {
  func.func @_linear_stats_kernel(%arg0: i32, %arg1: memref<16x512xf32, #tpu.memory_space<vmem>>, %arg2: memref<16x16xf32, #tpu.memory_space<vmem>>, %arg3: memref<16x1xf32, #tpu.memory_space<vmem>>, %arg4: memref<16x1xf32, #tpu.memory_space<vmem>>) attributes {dimension_semantics = [#tpu.dimension_semantics<arbitrary>], iteration_bounds = array<i64: 1>, scalar_prefetch = 0 : i64, scratch_operands = 0 : i64, tpu.core_type = #tpu.core_type<tc>, window_params = [{transform_indices = @transform_0, window_bounds = array<i64: 16, 512>}, {pipeline_mode = #tpu.pipeline_mode<synchronous>, transform_indices = @transform_1, window_bounds = array<i64: 16, 16>}, {pipeline_mode = #tpu.pipeline_mode<synchronous>, transform_indices = @transform_2, window_bounds = array<i64: 16, 1>}, {pipeline_mode = #tpu.pipeline_mode<synchronous>, transform_indices = @transform_3, window_bounds = array<i64: 16, 1>}]} {
    %c0_i32 = arith.constant 0 : i32
    %0 = arith.cmpi eq, %arg0, %c0_i32 : i32
    %1 = arith.extui %0 : i1 to i32
    %c0_i32_0 = arith.constant 0 : i32
    %2 = arith.cmpi ne, %1, %c0_i32_0 : i32
    scf.if %2 {
      %cst_14 = arith.constant 0.000000e+00 : f32
      %17 = vector.broadcast %cst_14 : f32 to vector<16x1xf32>
      %c0_15 = arith.constant 0 : index
      %c0_16 = arith.constant 0 : index
      %18 = vector.load %arg3[%c0_15, %c0_16] : memref<16x1xf32, #tpu.memory_space<vmem>>, vector<16x1xf32>
      tpu.vector_store %arg3[%c0_15, %c0_16], %17 {strides = array<i32>} : memref<16x1xf32, #tpu.memory_space<vmem>>, vector<16x1xf32>,
      %cst_17 = arith.constant 0.000000e+00 : f32
      %19 = vector.broadcast %cst_17 : f32 to vector<16x1xf32>
      %c0_18 = arith.constant 0 : index
      %c0_19 = arith.constant 0 : index
      %20 = vector.load %arg4[%c0_18, %c0_19] : memref<16x1xf32, #tpu.memory_space<vmem>>, vector<16x1xf32>
      tpu.vector_store %arg4[%c0_18, %c0_19], %19 {strides = array<i32>} : memref<16x1xf32, #tpu.memory_space<vmem>>, vector<16x1xf32>,
    } else {
    }
    %c0 = arith.constant 0 : index
    %c0_1 = arith.constant 0 : index
    %3 = vector.load %arg2[%c0, %c0_1] : memref<16x16xf32, #tpu.memory_space<vmem>>, vector<16x16xf32>
    %c0_2 = arith.constant 0 : index
    %c0_3 = arith.constant 0 : index
    %4 = vector.load %arg1[%c0_2, %c0_3] : memref<16x512xf32, #tpu.memory_space<vmem>>, vector<16x512xf32>
    %cst = arith.constant dense<0.000000e+00> : vector<16x512xf32>
    %5 = tpu.matmul %3, %4, %cst {dimension_numbers = #tpu.dot_dimension_numbers<[1], [0], [0], [1], [0, 0, 1, 1], [], []>} : vector<16x16xf32>, vector<16x512xf32>, vector<16x512xf32> -> vector<16x512xf32>
    %c0_4 = arith.constant 0 : index
    %c0_5 = arith.constant 0 : index
    %6 = vector.load %arg3[%c0_4, %c0_5] : memref<16x1xf32, #tpu.memory_space<vmem>>, vector<16x1xf32>
    %cst_6 = arith.constant dense<0.000000e+00> : vector<16xf32>
    %7 = vector.multi_reduction <add>, %5, %cst_6 [1] : vector<16x512xf32> to vector<16xf32>
    %8 = vector.shape_cast %7 : vector<16xf32> to vector<16x1xf32>
    %9 = arith.addf %6, %8 : vector<16x1xf32>
    %c0_7 = arith.constant 0 : index
    %c0_8 = arith.constant 0 : index
    %10 = vector.load %arg3[%c0_7, %c0_8] : memref<16x1xf32, #tpu.memory_space<vmem>>, vector<16x1xf32>
    tpu.vector_store %arg3[%c0_7, %c0_8], %9 {strides = array<i32>} : memref<16x1xf32, #tpu.memory_space<vmem>>, vector<16x1xf32>,
    %c0_9 = arith.constant 0 : index
    %c0_10 = arith.constant 0 : index
    %11 = vector.load %arg4[%c0_9, %c0_10] : memref<16x1xf32, #tpu.memory_space<vmem>>, vector<16x1xf32>
    %12 = arith.mulf %5, %5 : vector<16x512xf32>
    %cst_11 = arith.constant dense<0.000000e+00> : vector<16xf32>
    %13 = vector.multi_reduction <add>, %12, %cst_11 [1] : vector<16x512xf32> to vector<16xf32>
    %14 = vector.shape_cast %13 : vector<16xf32> to vector<16x1xf32>
    %15 = arith.addf %11, %14 : vector<16x1xf32>
    %c0_12 = arith.constant 0 : index
    %c0_13 = arith.constant 0 : index
    %16 = vector.load %arg4[%c0_12, %c0_13] : memref<16x1xf32, #tpu.memory_space<vmem>>, vector<16x1xf32>
    tpu.vector_store %arg4[%c0_12, %c0_13], %15 {strides = array<i32>} : memref<16x1xf32, #tpu.memory_space<vmem>>, vector<16x1xf32>,
    return
  }
  func.func @transform_0(%arg0: i32) -> (i32, i32) {
    %c0_i32 = arith.constant 0 : i32
    %c0_i32_0 = arith.constant 0 : i32
    return %c0_i32, %arg0 : i32, i32
  }
  func.func @transform_1(%arg0: i32) -> (i32, i32) {
    %c0_i32 = arith.constant 0 : i32
    %c0_i32_0 = arith.constant 0 : i32
    %c0_i32_1 = arith.constant 0 : i32
    return %c0_i32, %c0_i32_0 : i32, i32
  }
  func.func @transform_2(%arg0: i32) -> (i32, i32) {
    %c0_i32 = arith.constant 0 : i32
    %c0_i32_0 = arith.constant 0 : i32
    %c0_i32_1 = arith.constant 0 : i32
    return %c0_i32, %c0_i32_0 : i32, i32
  }
  func.func @transform_3(%arg0: i32) -> (i32, i32) {
    %c0_i32 = arith.constant 0 : i32
    %c0_i32_0 = arith.constant 0 : i32
    %c0_i32_1 = arith.constant 0 : i32
    return %c0_i32, %c0_i32_0 : i32, i32
  }
}

module attributes {stable_mosaic.version = 11 : i64} {
  func.func @_knn_mlp_kernel(%arg0: i32, %arg1: memref<128x3xf32, #tpu.memory_space<vmem>>, %arg2: memref<3x512xf32, #tpu.memory_space<vmem>>, %arg3: memref<16x128xf32, #tpu.memory_space<vmem>>, %arg4: memref<16x512xf32, #tpu.memory_space<vmem>>, %arg5: memref<16x16xf32, #tpu.memory_space<vmem>>, %arg6: memref<16x2xf32, #tpu.memory_space<vmem>>, %arg7: memref<16x512xf32, #tpu.memory_space<vmem>>) attributes {dimension_semantics = [#tpu.dimension_semantics<parallel>], iteration_bounds = array<i64: 1>, scalar_prefetch = 0 : i64, scratch_operands = 0 : i64, tpu.core_type = #tpu.core_type<tc>, window_params = [{pipeline_mode = #tpu.pipeline_mode<synchronous>, transform_indices = @transform_0, window_bounds = array<i64: 128, 3>}, {transform_indices = @transform_1, window_bounds = array<i64: 3, 512>}, {pipeline_mode = #tpu.pipeline_mode<synchronous>, transform_indices = @transform_2, window_bounds = array<i64: 16, 128>}, {transform_indices = @transform_3, window_bounds = array<i64: 16, 512>}, {pipeline_mode = #tpu.pipeline_mode<synchronous>, transform_indices = @transform_4, window_bounds = array<i64: 16, 16>}, {pipeline_mode = #tpu.pipeline_mode<synchronous>, transform_indices = @transform_5, window_bounds = array<i64: 16, 2>}, {transform_indices = @transform_6, window_bounds = array<i64: 16, 512>}]} {
    %c0 = arith.constant 0 : index
    %c0_0 = arith.constant 0 : index
    %0 = vector.load %arg1[%c0, %c0_0] : memref<128x3xf32, #tpu.memory_space<vmem>>, vector<128x1xf32>
    %c0_1 = arith.constant 0 : index
    %c0_2 = arith.constant 0 : index
    %1 = vector.load %arg2[%c0_1, %c0_2] : memref<3x512xf32, #tpu.memory_space<vmem>>, vector<1x512xf32>
    %2 = vector.broadcast %0 : vector<128x1xf32> to vector<128x512xf32>
    %3 = vector.broadcast %1 : vector<1x512xf32> to vector<128x512xf32>
    %4 = arith.subf %2, %3 : vector<128x512xf32>
    %5 = arith.mulf %4, %4 : vector<128x512xf32>
    %c0_3 = arith.constant 0 : index
    %c1 = arith.constant 1 : index
    %6 = vector.load %arg1[%c0_3, %c1] : memref<128x3xf32, #tpu.memory_space<vmem>>, vector<128x1xf32>
    %c1_4 = arith.constant 1 : index
    %c0_5 = arith.constant 0 : index
    %7 = vector.load %arg2[%c1_4, %c0_5] : memref<3x512xf32, #tpu.memory_space<vmem>>, vector<1x512xf32>
    %8 = vector.broadcast %6 : vector<128x1xf32> to vector<128x512xf32>
    %9 = vector.broadcast %7 : vector<1x512xf32> to vector<128x512xf32>
    %10 = arith.subf %8, %9 : vector<128x512xf32>
    %11 = arith.mulf %10, %10 : vector<128x512xf32>
    %12 = arith.addf %5, %11 : vector<128x512xf32>
    %c0_6 = arith.constant 0 : index
    %c2 = arith.constant 2 : index
    %13 = vector.load %arg1[%c0_6, %c2] : memref<128x3xf32, #tpu.memory_space<vmem>>, vector<128x1xf32>
    %c2_7 = arith.constant 2 : index
    %c0_8 = arith.constant 0 : index
    %14 = vector.load %arg2[%c2_7, %c0_8] : memref<3x512xf32, #tpu.memory_space<vmem>>, vector<1x512xf32>
    %15 = vector.broadcast %13 : vector<128x1xf32> to vector<128x512xf32>
    %16 = vector.broadcast %14 : vector<1x512xf32> to vector<128x512xf32>
    %17 = arith.subf %15, %16 : vector<128x512xf32>
    %18 = arith.mulf %17, %17 : vector<128x512xf32>
    %19 = arith.addf %12, %18 : vector<128x512xf32>
    %20 = tpu.iota {dimensions = array<i32: 0>} : vector<128x512xi32>
    %cst = arith.constant 0.000000e+00 : f32
    %21 = vector.broadcast %cst : f32 to vector<128x512xf32>
    %cst_9 = arith.constant dense<0x7F800000> : vector<512xf32>
    %22 = vector.multi_reduction <minimumf>, %19, %cst_9 [0] : vector<128x512xf32> to vector<512xf32>
    %23 = vector.shape_cast %22 : vector<512xf32> to vector<1x512xf32>
    %24 = vector.broadcast %23 : vector<1x512xf32> to vector<128x512xf32>
    %25 = arith.cmpf ole, %19, %24 : vector<128x512xf32>
    %c128_i32 = arith.constant 128 : i32
    %26 = vector.broadcast %c128_i32 : i32 to vector<128x512xi32>
    %27 = arith.select %25, %20, %26 : vector<128x512xi1>, vector<128x512xi32>
    %cst_10 = arith.constant dense<2147483647> : vector<512xi32>
    %28 = vector.multi_reduction <minsi>, %27, %cst_10 [0] : vector<128x512xi32> to vector<512xi32>
    %29 = vector.shape_cast %28 : vector<512xi32> to vector<1x512xi32>
    %30 = vector.broadcast %29 : vector<1x512xi32> to vector<128x512xi32>
    %31 = arith.cmpi eq, %20, %30 : vector<128x512xi32>
    %cst_11 = arith.constant 1.000000e-16 : f32
    %32 = vector.broadcast %cst_11 : f32 to vector<1x512xf32>
    %33 = arith.maximumf %23, %32 : vector<1x512xf32>
    %34 = tpu.reciprocal %33 {approx = true} : vector<1x512xf32> -> vector<1x512xf32>
    %cst_12 = arith.constant 0.000000e+00 : f32
    %35 = vector.shape_cast %34 : vector<1x512xf32> to vector<1x512xf32>
    %36 = vector.broadcast %35 : vector<1x512xf32> to vector<128x512xf32>
    %37 = vector.broadcast %cst_12 : f32 to vector<128x512xf32>
    %38 = arith.select %31, %36, %37 : vector<128x512xi1>, vector<128x512xf32>
    %39 = arith.addf %21, %38 : vector<128x512xf32>
    %cst_13 = arith.constant 1.000000e+30 : f32
    %40 = vector.broadcast %cst_13 : f32 to vector<128x512xf32>
    %41 = arith.select %31, %40, %19 : vector<128x512xi1>, vector<128x512xf32>
    %cst_14 = arith.constant dense<0x7F800000> : vector<512xf32>
    %42 = vector.multi_reduction <minimumf>, %41, %cst_14 [0] : vector<128x512xf32> to vector<512xf32>
    %43 = vector.shape_cast %42 : vector<512xf32> to vector<1x512xf32>
    %44 = vector.broadcast %43 : vector<1x512xf32> to vector<128x512xf32>
    %45 = arith.cmpf ole, %41, %44 : vector<128x512xf32>
    %c128_i32_15 = arith.constant 128 : i32
    %46 = vector.broadcast %c128_i32_15 : i32 to vector<128x512xi32>
    %47 = arith.select %45, %20, %46 : vector<128x512xi1>, vector<128x512xi32>
    %cst_16 = arith.constant dense<2147483647> : vector<512xi32>
    %48 = vector.multi_reduction <minsi>, %47, %cst_16 [0] : vector<128x512xi32> to vector<512xi32>
    %49 = vector.shape_cast %48 : vector<512xi32> to vector<1x512xi32>
    %50 = vector.broadcast %49 : vector<1x512xi32> to vector<128x512xi32>
    %51 = arith.cmpi eq, %20, %50 : vector<128x512xi32>
    %cst_17 = arith.constant 1.000000e-16 : f32
    %52 = vector.broadcast %cst_17 : f32 to vector<1x512xf32>
    %53 = arith.maximumf %43, %52 : vector<1x512xf32>
    %54 = tpu.reciprocal %53 {approx = true} : vector<1x512xf32> -> vector<1x512xf32>
    %cst_18 = arith.constant 0.000000e+00 : f32
    %55 = vector.shape_cast %54 : vector<1x512xf32> to vector<1x512xf32>
    %56 = vector.broadcast %55 : vector<1x512xf32> to vector<128x512xf32>
    %57 = vector.broadcast %cst_18 : f32 to vector<128x512xf32>
    %58 = arith.select %51, %56, %57 : vector<128x512xi1>, vector<128x512xf32>
    %59 = arith.addf %39, %58 : vector<128x512xf32>
    %cst_19 = arith.constant 1.000000e+30 : f32
    %60 = vector.broadcast %cst_19 : f32 to vector<128x512xf32>
    %61 = arith.select %51, %60, %41 : vector<128x512xi1>, vector<128x512xf32>
    %cst_20 = arith.constant dense<0x7F800000> : vector<512xf32>
    %62 = vector.multi_reduction <minimumf>, %61, %cst_20 [0] : vector<128x512xf32> to vector<512xf32>
    %63 = vector.shape_cast %62 : vector<512xf32> to vector<1x512xf32>
    %64 = vector.broadcast %63 : vector<1x512xf32> to vector<128x512xf32>
    %65 = arith.cmpf ole, %61, %64 : vector<128x512xf32>
    %c128_i32_21 = arith.constant 128 : i32
    %66 = vector.broadcast %c128_i32_21 : i32 to vector<128x512xi32>
    %67 = arith.select %65, %20, %66 : vector<128x512xi1>, vector<128x512xi32>
    %cst_22 = arith.constant dense<2147483647> : vector<512xi32>
    %68 = vector.multi_reduction <minsi>, %67, %cst_22 [0] : vector<128x512xi32> to vector<512xi32>
    %69 = vector.shape_cast %68 : vector<512xi32> to vector<1x512xi32>
    %70 = vector.broadcast %69 : vector<1x512xi32> to vector<128x512xi32>
    %71 = arith.cmpi eq, %20, %70 : vector<128x512xi32>
    %cst_23 = arith.constant 1.000000e-16 : f32
    %72 = vector.broadcast %cst_23 : f32 to vector<1x512xf32>
    %73 = arith.maximumf %63, %72 : vector<1x512xf32>
    %74 = tpu.reciprocal %73 {approx = true} : vector<1x512xf32> -> vector<1x512xf32>
    %cst_24 = arith.constant 0.000000e+00 : f32
    %75 = vector.shape_cast %74 : vector<1x512xf32> to vector<1x512xf32>
    %76 = vector.broadcast %75 : vector<1x512xf32> to vector<128x512xf32>
    %77 = vector.broadcast %cst_24 : f32 to vector<128x512xf32>
    %78 = arith.select %71, %76, %77 : vector<128x512xi1>, vector<128x512xf32>
    %79 = arith.addf %59, %78 : vector<128x512xf32>
    %c0_25 = arith.constant 0 : index
    %c0_26 = arith.constant 0 : index
    %80 = vector.load %arg3[%c0_25, %c0_26] : memref<16x128xf32, #tpu.memory_space<vmem>>, vector<16x128xf32>
    %cst_27 = arith.constant dense<0.000000e+00> : vector<16x512xf32>
    %81 = tpu.matmul %80, %79, %cst_27 {dimension_numbers = #tpu.dot_dimension_numbers<[1], [0], [0], [1], [0, 0, 1, 1], [], []>} : vector<16x128xf32>, vector<128x512xf32>, vector<16x512xf32> -> vector<16x512xf32>
    %cst_28 = arith.constant dense<0.000000e+00> : vector<512xf32>
    %82 = vector.multi_reduction <add>, %79, %cst_28 [0] : vector<128x512xf32> to vector<512xf32>
    %83 = vector.shape_cast %82 : vector<512xf32> to vector<1x512xf32>
    %84 = tpu.reciprocal %83 {approx = true} : vector<1x512xf32> -> vector<1x512xf32>
    %85 = vector.broadcast %84 : vector<1x512xf32> to vector<16x512xf32>
    %86 = arith.mulf %81, %85 : vector<16x512xf32>
    %c0_29 = arith.constant 0 : index
    %c0_30 = arith.constant 0 : index
    %87 = vector.load %arg5[%c0_29, %c0_30] : memref<16x16xf32, #tpu.memory_space<vmem>>, vector<16x16xf32>
    %c0_31 = arith.constant 0 : index
    %c0_32 = arith.constant 0 : index
    %88 = vector.load %arg4[%c0_31, %c0_32] : memref<16x512xf32, #tpu.memory_space<vmem>>, vector<16x512xf32>
    %cst_33 = arith.constant dense<0.000000e+00> : vector<16x512xf32>
    %89 = tpu.matmul %87, %88, %cst_33 {dimension_numbers = #tpu.dot_dimension_numbers<[1], [0], [0], [1], [0, 0, 1, 1], [], []>} : vector<16x16xf32>, vector<16x512xf32>, vector<16x512xf32> -> vector<16x512xf32>
    %c0_34 = arith.constant 0 : index
    %c0_35 = arith.constant 0 : index
    %90 = vector.load %arg6[%c0_34, %c0_35] : memref<16x2xf32, #tpu.memory_space<vmem>>, vector<16x1xf32>
    %91 = vector.broadcast %90 : vector<16x1xf32> to vector<16x512xf32>
    %92 = arith.mulf %89, %91 : vector<16x512xf32>
    %c0_36 = arith.constant 0 : index
    %c1_37 = arith.constant 1 : index
    %93 = vector.load %arg6[%c0_36, %c1_37] : memref<16x2xf32, #tpu.memory_space<vmem>>, vector<16x1xf32>
    %94 = vector.broadcast %93 : vector<16x1xf32> to vector<16x512xf32>
    %95 = arith.addf %92, %94 : vector<16x512xf32>
    %cst_38 = arith.constant 0.000000e+00 : f32
    %96 = vector.broadcast %cst_38 : f32 to vector<16x512xf32>
    %97 = arith.maximumf %95, %96 : vector<16x512xf32>
    %98 = arith.addf %97, %86 : vector<16x512xf32>
    %c0_39 = arith.constant 0 : index
    %c0_40 = arith.constant 0 : index
    %99 = vector.load %arg7[%c0_39, %c0_40] : memref<16x512xf32, #tpu.memory_space<vmem>>, vector<16x512xf32>
    tpu.vector_store %arg7[%c0_39, %c0_40], %98 {strides = array<i32>} : memref<16x512xf32, #tpu.memory_space<vmem>>, vector<16x512xf32>,
    return
  }
  func.func @transform_0(%arg0: i32) -> (i32, i32) {
    %c0_i32 = arith.constant 0 : i32
    %c0_i32_0 = arith.constant 0 : i32
    %c0_i32_1 = arith.constant 0 : i32
    return %c0_i32, %c0_i32_0 : i32, i32
  }
  func.func @transform_1(%arg0: i32) -> (i32, i32) {
    %c0_i32 = arith.constant 0 : i32
    %c0_i32_0 = arith.constant 0 : i32
    return %c0_i32, %arg0 : i32, i32
  }
  func.func @transform_2(%arg0: i32) -> (i32, i32) {
    %c0_i32 = arith.constant 0 : i32
    %c0_i32_0 = arith.constant 0 : i32
    %c0_i32_1 = arith.constant 0 : i32
    return %c0_i32, %c0_i32_0 : i32, i32
  }
  func.func @transform_3(%arg0: i32) -> (i32, i32) {
    %c0_i32 = arith.constant 0 : i32
    %c0_i32_0 = arith.constant 0 : i32
    return %c0_i32, %arg0 : i32, i32
  }
  func.func @transform_4(%arg0: i32) -> (i32, i32) {
    %c0_i32 = arith.constant 0 : i32
    %c0_i32_0 = arith.constant 0 : i32
    %c0_i32_1 = arith.constant 0 : i32
    return %c0_i32, %c0_i32_0 : i32, i32
  }
  func.func @transform_5(%arg0: i32) -> (i32, i32) {
    %c0_i32 = arith.constant 0 : i32
    %c0_i32_0 = arith.constant 0 : i32
    %c0_i32_1 = arith.constant 0 : i32
    return %c0_i32, %c0_i32_0 : i32, i32
  }
  func.func @transform_6(%arg0: i32) -> (i32, i32) {
    %c0_i32 = arith.constant 0 : i32
    %c0_i32_0 = arith.constant 0 : i32
    return %c0_i32, %arg0 : i32, i32
  }
}

</mosaic_0001>

<llo_original>
// kernel: transition_up.6
$region0: #{transition_up.6}
  #allocation0 [shape = 'u32[]', space=smem, size = 0x4, offset = 0x4, fixed_abs, tag = 'smem constant byte address 0x4 - core index']
  #allocation1 [shape = 'u32[144,128]{1,0:T(1,128)}', space=vmem, size = 0x12000, scoped, tag = 'internal scratch']
  %s0 = inlined_call_operand.vmem [shape: f32[32,128], index: 0, kind: input, shape index: {}]
  %s1 = inlined_call_operand.vmem [shape: f32[16,32], index: 1, kind: input, shape index: {}]
  %s2 = inlined_call_operand.vmem [shape: f32[16,2], index: 2, kind: input, shape index: {}]
  %s3 = inlined_call_operand.vmem [shape: f32[16,128], index: 3, kind: output, shape index: {}]
  %s4 = sld [smem:[#allocation0]]
  $region22: #{transition_up.6} parent=0
    _
  %s6 = ssub.s32 1, %s4
  %s7 = scalar_select 0, %s6, %s4
  // Predicated region
  $region2: #{transition_up.6} parent=0 // pred_check
    _
  $region3: #{transition_up.6} parent=0 // pred_check_branch
    %9 = sbr.rel (0) target = $region5
  $region4: #{transition_up.6} parent=0 // pred_region
    _
  $region5: #{transition_up.6} parent=0 // pred_fallthru
    _
  // Predicated region
  $region6: #{transition_up.6} parent=0 // pred_check
    _
  $region7: #{transition_up.6} parent=0 // pred_check_branch
    %11 = sbr.rel (0) target = $region9
  $region8: #{transition_up.6} parent=0 // pred_region
    _
  $region9: #{transition_up.6} parent=0 // pred_fallthru
    _
  // Predicated region
  $region10: #{transition_up.6} parent=0 // pred_check
    _
  $region11: #{transition_up.6} parent=0 // pred_check_branch
    %13 = sbr.rel (0) target = $region13
  $region12: #{transition_up.6} parent=0 // pred_region
    _
  $region13: #{transition_up.6} parent=0 // pred_fallthru
    _
  %v14 = vld [vmem:[%s1] sm:$0xff]
  %v15 = vld [vmem:[%s1 + $0x8] sm:$0xff]
  %v16 = vld [vmem:[%s0] sm:$0xff]
  %v17 = vld [vmem:[%s0 + $0x8] sm:$0xff]
  %v18 = vld [vmem:[%s0 + $0x10] sm:$0xff]
  %v19 = vld [vmem:[%s0 + $0x18] sm:$0xff]
  %vm20 = vcmask 261120
  %v22 = vsel %vm20, %v14, 0
  %v25 = vsel %vm20, %v15, 0
  %27 = vmatprep.subr.mxu0 0.0
  %28 = vmatpush1.msra.mxu0 0.0
  %29 = vmatprep.subr.mxu0 0.0
  %30 = vmatpush1.msra.mxu0 0.0
  %31 = vmatprep.subr.mxu0 0.0
  %32 = vmatpush1.msra.mxu0 0.0
  %33 = vmatprep.subr.mxu0 0.0
  %34 = vmatpush1.msra.mxu0 0.0
  %35 = vmatprep.subr.mxu0 0.0
  %36 = vmatpush1.msra.mxu0 0.0
  %37 = vmatprep.subr.mxu0 0.0
  %38 = vmatpush1.msra.mxu0 0.0
  %39 = vmatprep.subr.mxu0 0.0
  %40 = vmatpush1.msra.mxu0 0.0
  %41 = vmatprep.subr.mxu0 0.0
  %42 = vmatpush1.msra.mxu0 0.0
  %43 = vmatprep.subr.mxu0 0.0
  %44 = vmatpush1.msra.mxu0 0.0
  %45 = vmatprep.subr.mxu0 0.0
  %46 = vmatpush1.msra.mxu0 0.0
  %47 = vmatprep.subr.mxu0 0.0
  %48 = vmatpush1.msra.mxu0 0.0
  %49 = vmatprep.subr.mxu0 0.0
  %50 = vmatpush1.msra.mxu0 0.0
  %51 = vmatprep.subr.mxu0 0.0
  %52 = vmatpush1.msra.mxu0 %v19
  %53 = vmatprep.subr.mxu0 0.0
  %54 = vmatpush1.msra.mxu0 %v18
  %55 = vmatprep.subr.mxu0 0.0
  %56 = vmatpush1.msra.mxu0 %v17
  %57 = vmatprep.subr.mxu0 0.0
  %58 = vmatpush1.msra.mxu0 %v16
  %59 = vmatprep.subr.mxu0 0.0
  %60 = vmatpush2.msra.mxu0 0.0
  %61 = vmatprep.subr.mxu0 0.0
  %62 = vmatpush2.msra.mxu0 0.0
  %63 = vmatprep.subr.mxu0 0.0
  %64 = vmatpush2.msra.mxu0 0.0
  %65 = vmatprep.subr.mxu0 0.0
  %66 = vmatpush2.msra.mxu0 0.0
  %67 = vmatprep.subr.mxu0 0.0
  %68 = vmatpush2.msra.mxu0 0.0
  %69 = vmatprep.subr.mxu0 0.0
  %70 = vmatpush2.msra.mxu0 0.0
  %71 = vmatprep.subr.mxu0 0.0
  %72 = vmatpush2.msra.mxu0 0.0
  %73 = vmatprep.subr.mxu0 0.0
  %74 = vmatpush2.msra.mxu0 0.0
  %75 = vmatprep.subr.mxu0 0.0
  %76 = vmatpush2.msra.mxu0 0.0
  %77 = vmatprep.subr.mxu0 0.0
  %78 = vmatpush2.msra.mxu0 0.0
  %79 = vmatprep.subr.mxu0 0.0
  %80 = vmatpush2.msra.mxu0 0.0
  %81 = vmatprep.subr.mxu0 0.0
  %82 = vmatpush2.msra.mxu0 0.0
  %83 = vmatprep.subr.mxu0 0.0
  %84 = vmatpush2.msra.mxu0 0.0
  %85 = vmatprep.subr.mxu0 0.0
  %86 = vmatpush2.msra.mxu0 0.0
  %87 = vmatprep.subr.mxu0 0.0
  %88 = vmatpush2.msra.mxu0 0.0
  %89 = vmatprep.subr.mxu0 0.0
  %90 = vmatpush2.msra.mxu0 0.0
  %91 = vmatprep.mubr.f32.mxu0 0.0
  %92 = vmatmul.mubr.f32.gmra.mxu0 %v22
  %v93 = vpop.f32.mrf.mxu0
  %v94 = vadd.f32 0.0, %v93
  %v95 = vpop.f32.mrf.mxu0
  %96 = vmatprep.mubr.f32.mxu0 0.0
  %97 = vmatmul.mubr.f32.gmra.mxu0 %v25
  %v98 = vpop.f32.mrf.mxu0
  %v99 = vadd.f32 0.0, %v98
  %v100 = vpop.f32.mrf.mxu0
  %101 = vdwg.mxu0
  %v102 = vld [vmem:[%s2] sm:$0xff]
  %v103 = vld [vmem:[%s2 + $0x8] sm:$0xff]
  %105 = vset.pattern.permute.xlu0 0
  %106 = vperm.xlu0 %105, %v102
  %v107 = vpop.permute.xlu0 %106
  %110 = vset.pattern.permute.xlu0 0
  %111 = vperm.xlu0 %110, %v103
  %v112 = vpop.permute.xlu0 %111
  %v114 = vmul.f32 %v94, %v107
  %v115 = vmul.f32 %v99, %v112
  %116 = vset.pattern.permute.xlu0 1
  %117 = vperm.xlu0 %116, %v102
  %v118 = vpop.permute.xlu0 %117
  %120 = vset.pattern.permute.xlu0 1
  %121 = vperm.xlu0 %120, %v103
  %v122 = vpop.permute.xlu0 %121
  %v124 = vadd.f32 %v114, %v118
  %v125 = vadd.f32 %v115, %v122
  %v126 = vmax.f32 %v124, 0.0
  %v127 = vmax.f32 %v125, 0.0
  %128 = vst [vmem:[%s3] sm:$0xff] %v126
  %129 = vst [vmem:[%s3 + $0x8] sm:$0xff] %v127
  // Predicated region
  $region14: #{transition_up.6} parent=0 // pred_check
    _
  $region15: #{transition_up.6} parent=0 // pred_check_branch
    %131 = sbr.rel (0) target = $region17
  $region16: #{transition_up.6} parent=0 // pred_region
    _
  $region17: #{transition_up.6} parent=0 // pred_fallthru
    _
  // Predicated region
  $region18: #{transition_up.6} parent=0 // pred_check
    _
  $region19: #{transition_up.6} parent=0 // pred_check_branch
    %133 = sbr.rel (0) target = $region21
  $region20: #{transition_up.6} parent=0 // pred_region
    _
  $region21: #{transition_up.6} parent=0 // pred_fallthru
    _

// kernel: transition_up.5
$region0: #{transition_up.5}
  #allocation0 [shape = 'u32[]', space=smem, size = 0x4, offset = 0x4, fixed_abs, tag = 'smem constant byte address 0x4 - core index']
  #allocation1 [shape = 'u32[144,128]{1,0:T(1,128)}', space=vmem, size = 0x12000, scoped, tag = 'internal scratch']
  %s0 = inlined_call_operand.vmem [shape: f32[16,512], index: 0, kind: input, shape index: {}]
  %s1 = inlined_call_operand.vmem [shape: f32[16,16], index: 1, kind: input, shape index: {}]
  %s2 = inlined_call_operand.vmem [shape: f32[16,1], index: 2, kind: output, shape index: {0}]
  %s3 = inlined_call_operand.vmem [shape: f32[16,1], index: 3, kind: output, shape index: {1}]
  %4 = xla_tuple %s2, %s3
  %s5 = sld [smem:[#allocation0]]
  $region30: #{transition_up.5} parent=0
    _
  %s7 = ssub.s32 1, %s5
  %s8 = scalar_select 0, %s7, %s5
  // Predicated region
  $region2: #{transition_up.5} parent=0 // pred_check
    _
  $region3: #{transition_up.5} parent=0 // pred_check_branch
    %10 = sbr.rel (0) target = $region5
  $region4: #{transition_up.5} parent=0 // pred_region
    _
  $region5: #{transition_up.5} parent=0 // pred_fallthru
    _
  // Predicated region
  $region6: #{transition_up.5} parent=0 // pred_check
    _
  $region7: #{transition_up.5} parent=0 // pred_check_branch
    %12 = sbr.rel (0) target = $region9
  $region8: #{transition_up.5} parent=0 // pred_region
    _
  $region9: #{transition_up.5} parent=0 // pred_fallthru
    _
  %p13 = scmp.eq.s32.totalorder 0, 0
  // Predicated region
  $region10: #{transition_up.5} parent=0 // pred_check
    %p14 = pneg %p13
  $region11: #{transition_up.5} parent=0 // pred_check_branch
    %16 = sbr.rel (%p14) target = $region13
  $region12: #{transition_up.5} parent=0 // pred_region
    %vm17 = vcmask 7168
    %18 = vst.msk [vmem:[%s2] sm:$0xff] %vm17, 0.0
    %19 = vst.msk [vmem:[%s2 + $0x8] sm:$0xff] %vm17, 0.0
    %20 = vst.msk [vmem:[%s3] sm:$0xff] %vm17, 0.0
    %21 = vst.msk [vmem:[%s3 + $0x8] sm:$0xff] %vm17, 0.0
  $region13: #{transition_up.5} parent=0 // pred_fallthru
    _
  %v22 = vld [vmem:[%s1] sm:$0xff]
  %v23 = vld [vmem:[%s1 + $0x8] sm:$0xff]
  %v24 = vld [vmem:[%s0] sm:$0xff]
  %v25 = vld [vmem:[%s0 + $0x8] sm:$0xff]
  %v26 = vld [vmem:[%s0 + $0x10] sm:$0xff]
  %v27 = vld [vmem:[%s0 + $0x18] sm:$0xff]
  %v28 = vld [vmem:[%s0 + $0x20] sm:$0xff]
  %v29 = vld [vmem:[%s0 + $0x28] sm:$0xff]
  %v30 = vld [vmem:[%s0 + $0x30] sm:$0xff]
  %v31 = vld [vmem:[%s0 + $0x38] sm:$0xff]
  %vm32 = vcmask 130048
  %v34 = vsel %vm32, %v22, 0
  %v37 = vsel %vm32, %v23, 0
  %39 = vmatprep.subr.mxu0 0.0
  %40 = vmatpush1.msra.mxu0 0.0
  %41 = vmatprep.subr.mxu0 0.0
  %42 = vmatpush1.msra.mxu0 0.0
  %43 = vmatprep.subr.mxu0 0.0
  %44 = vmatpush1.msra.mxu0 0.0
  %45 = vmatprep.subr.mxu0 0.0
  %46 = vmatpush1.msra.mxu0 0.0
  %47 = vmatprep.subr.mxu0 0.0
  %48 = vmatpush1.msra.mxu0 0.0
  %49 = vmatprep.subr.mxu0 0.0
  %50 = vmatpush1.msra.mxu0 0.0
  %51 = vmatprep.subr.mxu0 0.0
  %52 = vmatpush1.msra.mxu0 0.0
  %53 = vmatprep.subr.mxu0 0.0
  %54 = vmatpush1.msra.mxu0 0.0
  %55 = vmatprep.subr.mxu0 0.0
  %56 = vmatpush1.msra.mxu0 0.0
  %57 = vmatprep.subr.mxu0 0.0
  %58 = vmatpush1.msra.mxu0 0.0
  %59 = vmatprep.subr.mxu0 0.0
  %60 = vmatpush1.msra.mxu0 0.0
  %61 = vmatprep.subr.mxu0 0.0
  %62 = vmatpush1.msra.mxu0 0.0
  %63 = vmatprep.subr.mxu0 0.0
  %64 = vmatpush1.msra.mxu0 0.0
  %65 = vmatprep.subr.mxu0 0.0
  %66 = vmatpush1.msra.mxu0 0.0
  %67 = vmatprep.subr.mxu0 %v29
  %68 = vmatpush1.msra.mxu0 %v28
  %69 = vmatprep.subr.mxu0 %v25
  %70 = vmatpush1.msra.mxu0 %v24
  %71 = vmatprep.subr.mxu0 0.0
  %72 = vmatpush2.msra.mxu0 0.0
  %73 = vmatprep.subr.mxu0 0.0
  %74 = vmatpush2.msra.mxu0 0.0
  %75 = vmatprep.subr.mxu0 0.0
  %76 = vmatpush2.msra.mxu0 0.0
  %77 = vmatprep.subr.mxu0 0.0
  %78 = vmatpush2.msra.mxu0 0.0
  %79 = vmatprep.subr.mxu0 0.0
  %80 = vmatpush2.msra.mxu0 0.0
  %81 = vmatprep.subr.mxu0 0.0
  %82 = vmatpush2.msra.mxu0 0.0
  %83 = vmatprep.subr.mxu0 0.0
  %84 = vmatpush2.msra.mxu0 0.0
  %85 = vmatprep.subr.mxu0 0.0
  %86 = vmatpush2.msra.mxu0 0.0
  %87 = vmatprep.subr.mxu0 0.0
  %88 = vmatpush2.msra.mxu0 0.0
  %89 = vmatprep.subr.mxu0 0.0
  %90 = vmatpush2.msra.mxu0 0.0
  %91 = vmatprep.subr.mxu0 0.0
  %92 = vmatpush2.msra.mxu0 0.0
  %93 = vmatprep.subr.mxu0 0.0
  %94 = vmatpush2.msra.mxu0 0.0
  %95 = vmatprep.subr.mxu0 0.0
  %96 = vmatpush2.msra.mxu0 0.0
  %97 = vmatprep.subr.mxu0 0.0
  %98 = vmatpush2.msra.mxu0 0.0
  %99 = vmatprep.subr.mxu0 0.0
  %100 = vmatpush2.msra.mxu0 0.0
  %101 = vmatprep.subr.mxu0 0.0
  %102 = vmatpush2.msra.mxu0 0.0
  %103 = vmatprep.mubr.f32.mxu0 0.0
  %104 = vmatmul.mubr.f32.gmra.mxu0 %v34
  %v105 = vpop.f32.mrf.mxu0
  %v106 = vadd.f32 0.0, %v105
  %v107 = vpop.f32.mrf.mxu0
  %v108 = vadd.f32 0.0, %v107
  %109 = vmatprep.mubr.f32.mxu0 0.0
  %110 = vmatmul.mubr.f32.gmra.mxu0 %v37
  %v111 = vpop.f32.mrf.mxu0
  %v112 = vadd.f32 0.0, %v111
  %v113 = vpop.f32.mrf.mxu0
  %v114 = vadd.f32 0.0, %v113
  %115 = vdwg.mxu0
  %116 = vmatprep.subr.mxu0 0.0
  %117 = vmatpush1.msra.mxu0 0.0
  %118 = vmatprep.subr.mxu0 0.0
  %119 = vmatpush1.msra.mxu0 0.0
  %120 = vmatprep.subr.mxu0 0.0
  %121 = vmatpush1.msra.mxu0 0.0
  %122 = vmatprep.subr.mxu0 0.0
  %123 = vmatpush1.msra.mxu0 0.0
  %124 = vmatprep.subr.mxu0 0.0
  %125 = vmatpush1.msra.mxu0 0.0
  %126 = vmatprep.subr.mxu0 0.0
  %127 = vmatpush1.msra.mxu0 0.0
  %128 = vmatprep.subr.mxu0 0.0
  %129 = vmatpush1.msra.mxu0 0.0
  %130 = vmatprep.subr.mxu0 0.0
  %131 = vmatpush1.msra.mxu0 0.0
  %132 = vmatprep.subr.mxu0 0.0
  %133 = vmatpush1.msra.mxu0 0.0
  %134 = vmatprep.subr.mxu0 0.0
  %135 = vmatpush1.msra.mxu0 0.0
  %136 = vmatprep.subr.mxu0 0.0
  %137 = vmatpush1.msra.mxu0 0.0
  %138 = vmatprep.subr.mxu0 0.0
  %139 = vmatpush1.msra.mxu0 0.0
  %140 = vmatprep.subr.mxu0 0.0
  %141 = vmatpush1.msra.mxu0 0.0
  %142 = vmatprep.subr.mxu0 0.0
  %143 = vmatpush1.msra.mxu0 0.0
  %144 = vmatprep.subr.mxu0 %v31
  %145 = vmatpush1.msra.mxu0 %v30
  %146 = vmatprep.subr.mxu0 %v27
  %147 = vmatpush1.msra.mxu0 %v26
  %148 = vmatprep.subr.mxu0 0.0
  %149 = vmatpush2.msra.mxu0 0.0
  %150 = vmatprep.subr.mxu0 0.0
  %151 = vmatpush2.msra.mxu0 0.0
  %152 = vmatprep.subr.mxu0 0.0
  %153 = vmatpush2.msra.mxu0 0.0
  %154 = vmatprep.subr.mxu0 0.0
  %155 = vmatpush2.msra.mxu0 0.0
  %156 = vmatprep.subr.mxu0 0.0
  %157 = vmatpush2.msra.mxu0 0.0
  %158 = vmatprep.subr.mxu0 0.0
  %159 = vmatpush2.msra.mxu0 0.0
  %160 = vmatprep.subr.mxu0 0.0
  %161 = vmatpush2.msra.mxu0 0.0
  %162 = vmatprep.subr.mxu0 0.0
  %163 = vmatpush2.msra.mxu0 0.0
  %164 = vmatprep.subr.mxu0 0.0
  %165 = vmatpush2.msra.mxu0 0.0
  %166 = vmatprep.subr.mxu0 0.0
  %167 = vmatpush2.msra.mxu0 0.0
  %168 = vmatprep.subr.mxu0 0.0
  %169 = vmatpush2.msra.mxu0 0.0
  %170 = vmatprep.subr.mxu0 0.0
  %171 = vmatpush2.msra.mxu0 0.0
  %172 = vmatprep.subr.mxu0 0.0
  %173 = vmatpush2.msra.mxu0 0.0
  %174 = vmatprep.subr.mxu0 0.0
  %175 = vmatpush2.msra.mxu0 0.0
  %176 = vmatprep.subr.mxu0 0.0
  %177 = vmatpush2.msra.mxu0 0.0
  %178 = vmatprep.subr.mxu0 0.0
  %179 = vmatpush2.msra.mxu0 0.0
  %180 = vmatprep.mubr.f32.mxu0 0.0
  %181 = vmatmul.mubr.f32.gmra.mxu0 %v34
  %v182 = vpop.f32.mrf.mxu0
  %v183 = vadd.f32 0.0, %v182
  %v184 = vpop.f32.mrf.mxu0
  %v185 = vadd.f32 0.0, %v184
  %186 = vmatprep.mubr.f32.mxu0 0.0
  %187 = vmatmul.mubr.f32.gmra.mxu0 %v37
  %v188 = vpop.f32.mrf.mxu0
  %v189 = vadd.f32 0.0, %v188
  %v190 = vpop.f32.mrf.mxu0
  %v191 = vadd.f32 0.0, %v190
  %192 = vdwg.mxu0
  %v193 = vld [vmem:[%s2] sm:$0xff]
  %v194 = vld [vmem:[%s2 + $0x8] sm:$0xff]
  %v195 = vadd.f32 %v106, %v108
  %v196 = vadd.f32 %v195, %v183
  %v197 = vadd.f32 %v196, %v185
  %198 = vadd.xlane.f32.xlu0 %v197
  %v199 = vpop.xlane.xlu0 %198
  %v200 = vadd.f32 %v112, %v114
  %v201 = vadd.f32 %v200, %v189
  %v202 = vadd.f32 %v201, %v191
  %203 = vadd.xlane.f32.xlu0 %v202
  %v204 = vpop.xlane.xlu0 %203
  %v205 = vadd.f32 %v193, %v199
  %v206 = vadd.f32 %v194, %v204
  %vm207 = vcmask 7168
  %208 = vst.msk [vmem:[%s2] sm:$0xff] %vm207, %v205
  %209 = vst.msk [vmem:[%s2 + $0x8] sm:$0xff] %vm207, %v206
  %v210 = vld [vmem:[%s3] sm:$0xff]
  %v211 = vld [vmem:[%s3 + $0x8] sm:$0xff]
  %v212 = vmul.f32 %v106, %v106
  %v213 = vmul.f32 %v108, %v108
  %v214 = vmul.f32 %v183, %v183
  %v215 = vmul.f32 %v185, %v185
  %v216 = vmul.f32 %v112, %v112
  %v217 = vmul.f32 %v114, %v114
  %v218 = vmul.f32 %v189, %v189
  %v219 = vmul.f32 %v191, %v191
  %v220 = vadd.f32 %v212, %v213
  %v221 = vadd.f32 %v220, %v214
  %v222 = vadd.f32 %v221, %v215
  %223 = vadd.xlane.f32.xlu0 %v222
  %v224 = vpop.xlane.xlu0 %223
  %v225 = vadd.f32 %v216, %v217
  %v226 = vadd.f32 %v225, %v218
  %v227 = vadd.f32 %v226, %v219
  %228 = vadd.xlane.f32.xlu0 %v227
  %v229 = vpop.xlane.xlu0 %228
  %v230 = vadd.f32 %v210, %v224
  %v231 = vadd.f32 %v211, %v229
  %232 = vst.msk [vmem:[%s3] sm:$0xff] %vm207, %v230
  %233 = vst.msk [vmem:[%s3 + $0x8] sm:$0xff] %vm207, %v231
  // Predicated region
  $region14: #{transition_up.5} parent=0 // pred_check
    _
  $region15: #{transition_up.5} parent=0 // pred_check_branch
    %235 = sbr.rel (0) target = $region17
  $region16: #{transition_up.5} parent=0 // pred_region
    _
  $region17: #{transition_up.5} parent=0 // pred_fallthru
    _
  // Predicated region
  $region18: #{transition_up.5} parent=0 // pred_check
    _
  $region19: #{transition_up.5} parent=0 // pred_check_branch
    %237 = sbr.rel (0) target = $region21
  $region20: #{transition_up.5} parent=0 // pred_region
    _
  $region21: #{transition_up.5} parent=0 // pred_fallthru
    _
  // Predicated region
  $region22: #{transition_up.5} parent=0 // pred_check
    _
  $region23: #{transition_up.5} parent=0 // pred_check_branch
    %239 = sbr.rel (0) target = $region25
  $region24: #{transition_up.5} parent=0 // pred_region
    _
  $region25: #{transition_up.5} parent=0 // pred_fallthru
    _
  // Predicated region
  $region26: #{transition_up.5} parent=0 // pred_check
    _
  $region27: #{transition_up.5} parent=0 // pred_check_branch
    %241 = sbr.rel (0) target = $region29
  $region28: #{transition_up.5} parent=0 // pred_region
    _
  $region29: #{transition_up.5} parent=0 // pred_fallthru
    _

// kernel: transition_up.4
$region0: #{transition_up.4}
  #allocation0 [shape = 'u32[]', space=smem, size = 0x4, offset = 0x4, fixed_abs, tag = 'smem constant byte address 0x4 - core index']
  #allocation1 [shape = 'u32[144,128]{1,0:T(1,128)}', space=vmem, size = 0x12000, scoped, tag = 'internal scratch']
  %s0 = inlined_call_operand.vmem [shape: f32[32,128], index: 0, kind: input, shape index: {}]
  %s1 = inlined_call_operand.vmem [shape: f32[16,32], index: 1, kind: input, shape index: {}]
  %s2 = inlined_call_operand.vmem [shape: f32[16,1], index: 2, kind: output, shape index: {0}]
  %s3 = inlined_call_operand.vmem [shape: f32[16,1], index: 3, kind: output, shape index: {1}]
  %4 = xla_tuple %s2, %s3
  %s5 = sld [smem:[#allocation0]]
  $region30: #{transition_up.4} parent=0
    _
  %s7 = ssub.s32 1, %s5
  %s8 = scalar_select 0, %s7, %s5
  // Predicated region
  $region2: #{transition_up.4} parent=0 // pred_check
    _
  $region3: #{transition_up.4} parent=0 // pred_check_branch
    %10 = sbr.rel (0) target = $region5
  $region4: #{transition_up.4} parent=0 // pred_region
    _
  $region5: #{transition_up.4} parent=0 // pred_fallthru
    _
  // Predicated region
  $region6: #{transition_up.4} parent=0 // pred_check
    _
  $region7: #{transition_up.4} parent=0 // pred_check_branch
    %12 = sbr.rel (0) target = $region9
  $region8: #{transition_up.4} parent=0 // pred_region
    _
  $region9: #{transition_up.4} parent=0 // pred_fallthru
    _
  %p13 = scmp.eq.s32.totalorder 0, 0
  // Predicated region
  $region10: #{transition_up.4} parent=0 // pred_check
    %p14 = pneg %p13
  $region11: #{transition_up.4} parent=0 // pred_check_branch
    %16 = sbr.rel (%p14) target = $region13
  $region12: #{transition_up.4} parent=0 // pred_region
    %vm17 = vcmask 7168
    %18 = vst.msk [vmem:[%s2] sm:$0xff] %vm17, 0.0
    %19 = vst.msk [vmem:[%s2 + $0x8] sm:$0xff] %vm17, 0.0
    %20 = vst.msk [vmem:[%s3] sm:$0xff] %vm17, 0.0
    %21 = vst.msk [vmem:[%s3 + $0x8] sm:$0xff] %vm17, 0.0
  $region13: #{transition_up.4} parent=0 // pred_fallthru
    _
  %v22 = vld [vmem:[%s1] sm:$0xff]
  %v23 = vld [vmem:[%s1 + $0x8] sm:$0xff]
  %v24 = vld [vmem:[%s0] sm:$0xff]
  %v25 = vld [vmem:[%s0 + $0x8] sm:$0xff]
  %v26 = vld [vmem:[%s0 + $0x10] sm:$0xff]
  %v27 = vld [vmem:[%s0 + $0x18] sm:$0xff]
  %vm28 = vcmask 261120
  %v30 = vsel %vm28, %v22, 0
  %v33 = vsel %vm28, %v23, 0
  %35 = vmatprep.subr.mxu0 0.0
  %36 = vmatpush1.msra.mxu0 0.0
  %37 = vmatprep.subr.mxu0 0.0
  %38 = vmatpush1.msra.mxu0 0.0
  %39 = vmatprep.subr.mxu0 0.0
  %40 = vmatpush1.msra.mxu0 0.0
  %41 = vmatprep.subr.mxu0 0.0
  %42 = vmatpush1.msra.mxu0 0.0
  %43 = vmatprep.subr.mxu0 0.0
  %44 = vmatpush1.msra.mxu0 0.0
  %45 = vmatprep.subr.mxu0 0.0
  %46 = vmatpush1.msra.mxu0 0.0
  %47 = vmatprep.subr.mxu0 0.0
  %48 = vmatpush1.msra.mxu0 0.0
  %49 = vmatprep.subr.mxu0 0.0
  %50 = vmatpush1.msra.mxu0 0.0
  %51 = vmatprep.subr.mxu0 0.0
  %52 = vmatpush1.msra.mxu0 0.0
  %53 = vmatprep.subr.mxu0 0.0
  %54 = vmatpush1.msra.mxu0 0.0
  %55 = vmatprep.subr.mxu0 0.0
  %56 = vmatpush1.msra.mxu0 0.0
  %57 = vmatprep.subr.mxu0 0.0
  %58 = vmatpush1.msra.mxu0 0.0
  %59 = vmatprep.subr.mxu0 0.0
  %60 = vmatpush1.msra.mxu0 %v27
  %61 = vmatprep.subr.mxu0 0.0
  %62 = vmatpush1.msra.mxu0 %v26
  %63 = vmatprep.subr.mxu0 0.0
  %64 = vmatpush1.msra.mxu0 %v25
  %65 = vmatprep.subr.mxu0 0.0
  %66 = vmatpush1.msra.mxu0 %v24
  %67 = vmatprep.subr.mxu0 0.0
  %68 = vmatpush2.msra.mxu0 0.0
  %69 = vmatprep.subr.mxu0 0.0
  %70 = vmatpush2.msra.mxu0 0.0
  %71 = vmatprep.subr.mxu0 0.0
  %72 = vmatpush2.msra.mxu0 0.0
  %73 = vmatprep.subr.mxu0 0.0
  %74 = vmatpush2.msra.mxu0 0.0
  %75 = vmatprep.subr.mxu0 0.0
  %76 = vmatpush2.msra.mxu0 0.0
  %77 = vmatprep.subr.mxu0 0.0
  %78 = vmatpush2.msra.mxu0 0.0
  %79 = vmatprep.subr.mxu0 0.0
  %80 = vmatpush2.msra.mxu0 0.0
  %81 = vmatprep.subr.mxu0 0.0
  %82 = vmatpush2.msra.mxu0 0.0
  %83 = vmatprep.subr.mxu0 0.0
  %84 = vmatpush2.msra.mxu0 0.0
  %85 = vmatprep.subr.mxu0 0.0
  %86 = vmatpush2.msra.mxu0 0.0
  %87 = vmatprep.subr.mxu0 0.0
  %88 = vmatpush2.msra.mxu0 0.0
  %89 = vmatprep.subr.mxu0 0.0
  %90 = vmatpush2.msra.mxu0 0.0
  %91 = vmatprep.subr.mxu0 0.0
  %92 = vmatpush2.msra.mxu0 0.0
  %93 = vmatprep.subr.mxu0 0.0
  %94 = vmatpush2.msra.mxu0 0.0
  %95 = vmatprep.subr.mxu0 0.0
  %96 = vmatpush2.msra.mxu0 0.0
  %97 = vmatprep.subr.mxu0 0.0
  %98 = vmatpush2.msra.mxu0 0.0
  %99 = vmatprep.mubr.f32.mxu0 0.0
  %100 = vmatmul.mubr.f32.gmra.mxu0 %v30
  %v101 = vpop.f32.mrf.mxu0
  %v102 = vadd.f32 0.0, %v101
  %v103 = vpop.f32.mrf.mxu0
  %104 = vmatprep.mubr.f32.mxu0 0.0
  %105 = vmatmul.mubr.f32.gmra.mxu0 %v33
  %v106 = vpop.f32.mrf.mxu0
  %v107 = vadd.f32 0.0, %v106
  %v108 = vpop.f32.mrf.mxu0
  %109 = vdwg.mxu0
  %v110 = vld [vmem:[%s2] sm:$0xff]
  %v111 = vld [vmem:[%s2 + $0x8] sm:$0xff]
  %112 = vadd.xlane.f32.xlu0 %v102
  %v113 = vpop.xlane.xlu0 %112
  %114 = vadd.xlane.f32.xlu0 %v107
  %v115 = vpop.xlane.xlu0 %114
  %v116 = vadd.f32 %v110, %v113
  %v117 = vadd.f32 %v111, %v115
  %vm118 = vcmask 7168
  %119 = vst.msk [vmem:[%s2] sm:$0xff] %vm118, %v116
  %120 = vst.msk [vmem:[%s2 + $0x8] sm:$0xff] %vm118, %v117
  %v121 = vld [vmem:[%s3] sm:$0xff]
  %v122 = vld [vmem:[%s3 + $0x8] sm:$0xff]
  %v123 = vmul.f32 %v102, %v102
  %v124 = vmul.f32 %v107, %v107
  %125 = vadd.xlane.f32.xlu0 %v123
  %v126 = vpop.xlane.xlu0 %125
  %127 = vadd.xlane.f32.xlu0 %v124
  %v128 = vpop.xlane.xlu0 %127
  %v129 = vadd.f32 %v121, %v126
  %v130 = vadd.f32 %v122, %v128
  %131 = vst.msk [vmem:[%s3] sm:$0xff] %vm118, %v129
  %132 = vst.msk [vmem:[%s3 + $0x8] sm:$0xff] %vm118, %v130
  // Predicated region
  $region14: #{transition_up.4} parent=0 // pred_check
    _
  $region15: #{transition_up.4} parent=0 // pred_check_branch
    %134 = sbr.rel (0) target = $region17
  $region16: #{transition_up.4} parent=0 // pred_region
    _
  $region17: #{transition_up.4} parent=0 // pred_fallthru
    _
  // Predicated region
  $region18: #{transition_up.4} parent=0 // pred_check
    _
  $region19: #{transition_up.4} parent=0 // pred_check_branch
    %136 = sbr.rel (0) target = $region21
  $region20: #{transition_up.4} parent=0 // pred_region
    _
  $region21: #{transition_up.4} parent=0 // pred_fallthru
    _
  // Predicated region
  $region22: #{transition_up.4} parent=0 // pred_check
    _
  $region23: #{transition_up.4} parent=0 // pred_check_branch
    %138 = sbr.rel (0) target = $region25
  $region24: #{transition_up.4} parent=0 // pred_region
    _
  $region25: #{transition_up.4} parent=0 // pred_fallthru
    _
  // Predicated region
  $region26: #{transition_up.4} parent=0 // pred_check
    _
  $region27: #{transition_up.4} parent=0 // pred_check_branch
    %140 = sbr.rel (0) target = $region29
  $region28: #{transition_up.4} parent=0 // pred_region
    _
  $region29: #{transition_up.4} parent=0 // pred_fallthru
    _

// kernel: transition_up.7
$region0: #{transition_up.7}
  #allocation0 [shape = 'u32[]', space=smem, size = 0x4, offset = 0x4, fixed_abs, tag = 'smem constant byte address 0x4 - core index']
  #allocation1 [shape = 'u32[144,128]{1,0:T(1,128)}', space=vmem, size = 0x12000, scoped, tag = 'internal scratch']
  %s0 = inlined_call_operand.vmem [shape: f32[128,3], index: 0, kind: input, shape index: {}]
  %s1 = inlined_call_operand.vmem [shape: f32[3,512], index: 1, kind: input, shape index: {}]
  %s2 = inlined_call_operand.vmem [shape: f32[16,128], index: 2, kind: input, shape index: {}]
  %s3 = inlined_call_operand.vmem [shape: f32[16,512], index: 3, kind: input, shape index: {}]
  %s4 = inlined_call_operand.vmem [shape: f32[16,16], index: 4, kind: input, shape index: {}]
  %s5 = inlined_call_operand.vmem [shape: f32[16,2], index: 5, kind: input, shape index: {}]
  %s6 = inlined_call_operand.hbm [shape: f32[16,512], index: 6, kind: output, shape index: {}]
  %s7 = sld [smem:[#allocation0]]
  $region34: #{transition_up.7} parent=0
    _
  %s9 = ssub.s32 1, %s7
  %s10 = scalar_select 0, %s9, %s7
  $region1: #{transition_up.7} parent=0
    #allocation2 [shape = 'u8[32768]{0}', space=vmem, size = 0x8000, scoped, tag = 'output window, operand 0, single buffered']
    #allocation3 [shape = 's32[1]{0}', space=sflag, size = 0x4, scoped, tag = 'scoped memory for transition_up.7']
    %11 = vsyncpa [#allocation3], 0
    // Predicated region
    $region2: #{transition_up.7} parent=1 // pred_check
      _
    $region3: #{transition_up.7} parent=1 // pred_check_branch
      %13 = sbr.rel (0) target = $region5
    $region4: #{transition_up.7} parent=1 // pred_region
      _
    $region5: #{transition_up.7} parent=1 // pred_fallthru
      _
    // Predicated region
    $region6: #{transition_up.7} parent=1 // pred_check
      _
    $region7: #{transition_up.7} parent=1 // pred_check_branch
      %15 = sbr.rel (0) target = $region9
    $region8: #{transition_up.7} parent=1 // pred_region
      _
    $region9: #{transition_up.7} parent=1 // pred_fallthru
      _
    // Predicated region
    $region10: #{transition_up.7} parent=1 // pred_check
      _
    $region11: #{transition_up.7} parent=1 // pred_check_branch
      %17 = sbr.rel (0) target = $region13
    $region12: #{transition_up.7} parent=1 // pred_region
      _
    $region13: #{transition_up.7} parent=1 // pred_fallthru
      _
    // Predicated region
    $region14: #{transition_up.7} parent=1 // pred_check
      _
    $region15: #{transition_up.7} parent=1 // pred_check_branch
      %19 = sbr.rel (0) target = $region17
    $region16: #{transition_up.7} parent=1 // pred_region
      _
    $region17: #{transition_up.7} parent=1 // pred_fallthru
      _
    // Predicated region
    $region18: #{transition_up.7} parent=1 // pred_check
      _
    $region19: #{transition_up.7} parent=1 // pred_check_branch
      %21 = sbr.rel (0) target = $region21
    $region20: #{transition_up.7} parent=1 // pred_region
      _
    $region21: #{transition_up.7} parent=1 // pred_fallthru
      _
    // Predicated region
    $region22: #{transition_up.7} parent=1 // pred_check
      _
    $region23: #{transition_up.7} parent=1 // pred_check_branch
      %23 = sbr.rel (0) target = $region25
    $region24: #{transition_up.7} parent=1 // pred_region
      _
    $region25: #{transition_up.7} parent=1 // pred_fallthru
      _
    %v24 = vld [vmem:[%s0] sm:$0xff]
    %v25 = vld [vmem:[%s0 + $0x8] sm:$0xff]
    %v26 = vld [vmem:[%s0 + $0x10] sm:$0xff]
    %v27 = vld [vmem:[%s0 + $0x18] sm:$0xff]
    %v28 = vld [vmem:[%s0 + $0x20] sm:$0xff]
    %v29 = vld [vmem:[%s0 + $0x28] sm:$0xff]
    %v30 = vld [vmem:[%s0 + $0x30] sm:$0xff]
    %v31 = vld [vmem:[%s0 + $0x38] sm:$0xff]
    %v32 = vld [vmem:[%s0 + $0x40] sm:$0xff]
    %v33 = vld [vmem:[%s0 + $0x48] sm:$0xff]
    %v34 = vld [vmem:[%s0 + $0x50] sm:$0xff]
    %v35 = vld [vmem:[%s0 + $0x58] sm:$0xff]
    %v36 = vld [vmem:[%s0 + $0x60] sm:$0xff]
    %v37 = vld [vmem:[%s0 + $0x68] sm:$0xff]
    %v38 = vld [vmem:[%s0 + $0x70] sm:$0xff]
    %v39 = vld [vmem:[%s0 + $0x78] sm:$0xff]
    %v40 = vld [vmem:[%s1] ss:$4 sm:$0xf]
    %42 = vset.pattern.permute.xlu0 0
    %43 = vperm.xlu0 %42, %v24
    %v44 = vpop.permute.xlu0 %43
    %47 = vset.pattern.permute.xlu0 0
    %48 = vperm.xlu0 %47, %v25
    %v49 = vpop.permute.xlu0 %48
    %52 = vset.pattern.permute.xlu0 0
    %53 = vperm.xlu0 %52, %v26
    %v54 = vpop.permute.xlu0 %53
    %57 = vset.pattern.permute.xlu0 0
    %58 = vperm.xlu0 %57, %v27
    %v59 = vpop.permute.xlu0 %58
    %62 = vset.pattern.permute.xlu0 0
    %63 = vperm.xlu0 %62, %v28
    %v64 = vpop.permute.xlu0 %63
    %67 = vset.pattern.permute.xlu0 0
    %68 = vperm.xlu0 %67, %v29
    %v69 = vpop.permute.xlu0 %68
    %72 = vset.pattern.permute.xlu0 0
    %73 = vperm.xlu0 %72, %v30
    %v74 = vpop.permute.xlu0 %73
    %77 = vset.pattern.permute.xlu0 0
    %78 = vperm.xlu0 %77, %v31
    %v79 = vpop.permute.xlu0 %78
    %82 = vset.pattern.permute.xlu0 0
    %83 = vperm.xlu0 %82, %v32
    %v84 = vpop.permute.xlu0 %83
    %87 = vset.pattern.permute.xlu0 0
    %88 = vperm.xlu0 %87, %v33
    %v89 = vpop.permute.xlu0 %88
    %92 = vset.pattern.permute.xlu0 0
    %93 = vperm.xlu0 %92, %v34
    %v94 = vpop.permute.xlu0 %93
    %97 = vset.pattern.permute.xlu0 0
    %98 = vperm.xlu0 %97, %v35
    %v99 = vpop.permute.xlu0 %98
    %102 = vset.pattern.permute.xlu0 0
    %103 = vperm.xlu0 %102, %v36
    %v104 = vpop.permute.xlu0 %103
    %107 = vset.pattern.permute.xlu0 0
    %108 = vperm.xlu0 %107, %v37
    %v109 = vpop.permute.xlu0 %108
    %112 = vset.pattern.permute.xlu0 0
    %113 = vperm.xlu0 %112, %v38
    %v114 = vpop.permute.xlu0 %113
    %117 = vset.pattern.permute.xlu0 0
    %118 = vperm.xlu0 %117, %v39
    %v119 = vpop.permute.xlu0 %118
    %v122 = vlaneseq
    %v123 = vshrl.u32 %v122, 7
    %v124 = vsub.s32 0, %v123
    %v125 = vrot.slane %v40, %v124
    %v126 = vlaneseq
    %v127 = vshrl.u32 %v126, 7
    %v128 = vsub.s32 1, %v127
    %v129 = vrot.slane %v40, %v128
    %v130 = vlaneseq
    %v131 = vshrl.u32 %v130, 7
    %v132 = vsub.s32 2, %v131
    %v133 = vrot.slane %v40, %v132
    %v134 = vlaneseq
    %v135 = vshrl.u32 %v134, 7
    %v136 = vsub.s32 3, %v135
    %v137 = vrot.slane %v40, %v136
    %v142 = vsub.f32 %v44, %v125
    %v143 = vsub.f32 %v44, %v129
    %v144 = vsub.f32 %v44, %v133
    %v145 = vsub.f32 %v44, %v137
    %v146 = vsub.f32 %v49, %v125
    %v147 = vsub.f32 %v49, %v129
    %v148 = vsub.f32 %v49, %v133
    %v149 = vsub.f32 %v49, %v137
    %v150 = vsub.f32 %v54, %v125
    %v151 = vsub.f32 %v54, %v129
    %v152 = vsub.f32 %v54, %v133
    %v153 = vsub.f32 %v54, %v137
    %v154 = vsub.f32 %v59, %v125
    %v155 = vsub.f32 %v59, %v129
    %v156 = vsub.f32 %v59, %v133
    %v157 = vsub.f32 %v59, %v137
    %v158 = vsub.f32 %v64, %v125
    %v159 = vsub.f32 %v64, %v129
    %v160 = vsub.f32 %v64, %v133
    %v161 = vsub.f32 %v64, %v137
    %v162 = vsub.f32 %v69, %v125
    %v163 = vsub.f32 %v69, %v129
    %v164 = vsub.f32 %v69, %v133
    %v165 = vsub.f32 %v69, %v137
    %v166 = vsub.f32 %v74, %v125
    %v167 = vsub.f32 %v74, %v129
    %v168 = vsub.f32 %v74, %v133
    %v169 = vsub.f32 %v74, %v137
    %v170 = vsub.f32 %v79, %v125
    %v171 = vsub.f32 %v79, %v129
    %v172 = vsub.f32 %v79, %v133
    %v173 = vsub.f32 %v79, %v137
    %v174 = vsub.f32 %v84, %v125
    %v175 = vsub.f32 %v84, %v129
    %v176 = vsub.f32 %v84, %v133
    %v177 = vsub.f32 %v84, %v137
    %v178 = vsub.f32 %v89, %v125
    %v179 = vsub.f32 %v89, %v129
    %v180 = vsub.f32 %v89, %v133
    %v181 = vsub.f32 %v89, %v137
    %v182 = vsub.f32 %v94, %v125
    %v183 = vsub.f32 %v94, %v129
    %v184 = vsub.f32 %v94, %v133
    %v185 = vsub.f32 %v94, %v137
    %v186 = vsub.f32 %v99, %v125
    %v187 = vsub.f32 %v99, %v129
    %v188 = vsub.f32 %v99, %v133
    %v189 = vsub.f32 %v99, %v137
    %v190 = vsub.f32 %v104, %v125
    %v191 = vsub.f32 %v104, %v129
    %v192 = vsub.f32 %v104, %v133
    %v193 = vsub.f32 %v104, %v137
    %v194 = vsub.f32 %v109, %v125
    %v195 = vsub.f32 %v109, %v129
    %v196 = vsub.f32 %v109, %v133
    %v197 = vsub.f32 %v109, %v137
    %v198 = vsub.f32 %v114, %v125
    %v199 = vsub.f32 %v114, %v129
    %v200 = vsub.f32 %v114, %v133
    %v201 = vsub.f32 %v114, %v137
    %v202 = vsub.f32 %v119, %v125
    %v203 = vsub.f32 %v119, %v129
    %v204 = vsub.f32 %v119, %v133
    %v205 = vsub.f32 %v119, %v137
    %v206 = vmul.f32 %v142, %v142
    %v207 = vmul.f32 %v143, %v143
    %v208 = vmul.f32 %v144, %v144
    %v209 = vmul.f32 %v145, %v145
    %v210 = vmul.f32 %v146, %v146
    %v211 = vmul.f32 %v147, %v147
    %v212 = vmul.f32 %v148, %v148
    %v213 = vmul.f32 %v149, %v149
    %v214 = vmul.f32 %v150, %v150
    %v215 = vmul.f32 %v151, %v151
    %v216 = vmul.f32 %v152, %v152
    %v217 = vmul.f32 %v153, %v153
    %v218 = vmul.f32 %v154, %v154
    %v219 = vmul.f32 %v155, %v155
    %v220 = vmul.f32 %v156, %v156
    %v221 = vmul.f32 %v157, %v157
    %v222 = vmul.f32 %v158, %v158
    %v223 = vmul.f32 %v159, %v159
    %v224 = vmul.f32 %v160, %v160
    %v225 = vmul.f32 %v161, %v161
    %v226 = vmul.f32 %v162, %v162
    %v227 = vmul.f32 %v163, %v163
    %v228 = vmul.f32 %v164, %v164
    %v229 = vmul.f32 %v165, %v165
    %v230 = vmul.f32 %v166, %v166
    %v231 = vmul.f32 %v167, %v167
    %v232 = vmul.f32 %v168, %v168
    %v233 = vmul.f32 %v169, %v169
    %v234 = vmul.f32 %v170, %v170
    %v235 = vmul.f32 %v171, %v171
    %v236 = vmul.f32 %v172, %v172
    %v237 = vmul.f32 %v173, %v173
    %v238 = vmul.f32 %v174, %v174
    %v239 = vmul.f32 %v175, %v175
    %v240 = vmul.f32 %v176, %v176
    %v241 = vmul.f32 %v177, %v177
    %v242 = vmul.f32 %v178, %v178
    %v243 = vmul.f32 %v179, %v179
    %v244 = vmul.f32 %v180, %v180
    %v245 = vmul.f32 %v181, %v181
    %v246 = vmul.f32 %v182, %v182
    %v247 = vmul.f32 %v183, %v183
    %v248 = vmul.f32 %v184, %v184
    %v249 = vmul.f32 %v185, %v185
    %v250 = vmul.f32 %v186, %v186
    %v251 = vmul.f32 %v187, %v187
    %v252 = vmul.f32 %v188, %v188
    %v253 = vmul.f32 %v189, %v189
    %v254 = vmul.f32 %v190, %v190
    %v255 = vmul.f32 %v191, %v191
    %v256 = vmul.f32 %v192, %v192
    %v257 = vmul.f32 %v193, %v193
    %v258 = vmul.f32 %v194, %v194
    %v259 = vmul.f32 %v195, %v195
    %v260 = vmul.f32 %v196, %v196
    %v261 = vmul.f32 %v197, %v197
    %v262 = vmul.f32 %v198, %v198
    %v263 = vmul.f32 %v199, %v199
    %v264 = vmul.f32 %v200, %v200
    %v265 = vmul.f32 %v201, %v201
    %v266 = vmul.f32 %v202, %v202
    %v267 = vmul.f32 %v203, %v203
    %v268 = vmul.f32 %v204, %v204
    %v269 = vmul.f32 %v205, %v205
    %s270 = scalar_lea.vmem %s1, 1
    %v271 = vld [vmem:[%s270] ss:$4 sm:$0xf]
    %272 = vset.pattern.permute.xlu0 1
    %273 = vperm.xlu0 %272, %v24
    %v274 = vpop.permute.xlu0 %273
    %276 = vset.pattern.permute.xlu0 1
    %277 = vperm.xlu0 %276, %v25
    %v278 = vpop.permute.xlu0 %277
    %280 = vset.pattern.permute.xlu0 1
    %281 = vperm.xlu0 %280, %v26
    %v282 = vpop.permute.xlu0 %281
    %284 = vset.pattern.permute.xlu0 1
    %285 = vperm.xlu0 %284, %v27
    %v286 = vpop.permute.xlu0 %285
    %288 = vset.pattern.permute.xlu0 1
    %289 = vperm.xlu0 %288, %v28
    %v290 = vpop.permute.xlu0 %289
    %292 = vset.pattern.permute.xlu0 1
    %293 = vperm.xlu0 %292, %v29
    %v294 = vpop.permute.xlu0 %293
    %296 = vset.pattern.permute.xlu0 1
    %297 = vperm.xlu0 %296, %v30
    %v298 = vpop.permute.xlu0 %297
    %300 = vset.pattern.permute.xlu0 1
    %301 = vperm.xlu0 %300, %v31
    %v302 = vpop.permute.xlu0 %301
    %304 = vset.pattern.permute.xlu0 1
    %305 = vperm.xlu0 %304, %v32
    %v306 = vpop.permute.xlu0 %305
    %308 = vset.pattern.permute.xlu0 1
    %309 = vperm.xlu0 %308, %v33
    %v310 = vpop.permute.xlu0 %309
    %312 = vset.pattern.permute.xlu0 1
    %313 = vperm.xlu0 %312, %v34
    %v314 = vpop.permute.xlu0 %313
    %316 = vset.pattern.permute.xlu0 1
    %317 = vperm.xlu0 %316, %v35
    %v318 = vpop.permute.xlu0 %317
    %320 = vset.pattern.permute.xlu0 1
    %321 = vperm.xlu0 %320, %v36
    %v322 = vpop.permute.xlu0 %321
    %324 = vset.pattern.permute.xlu0 1
    %325 = vperm.xlu0 %324, %v37
    %v326 = vpop.permute.xlu0 %325
    %328 = vset.pattern.permute.xlu0 1
    %329 = vperm.xlu0 %328, %v38
    %v330 = vpop.permute.xlu0 %329
    %332 = vset.pattern.permute.xlu0 1
    %333 = vperm.xlu0 %332, %v39
    %v334 = vpop.permute.xlu0 %333
    %v337 = vlaneseq
    %v338 = vshrl.u32 %v337, 7
    %v339 = vsub.s32 0, %v338
    %v340 = vrot.slane %v271, %v339
    %v341 = vlaneseq
    %v342 = vshrl.u32 %v341, 7
    %v343 = vsub.s32 1, %v342
    %v344 = vrot.slane %v271, %v343
    %v345 = vlaneseq
    %v346 = vshrl.u32 %v345, 7
    %v347 = vsub.s32 2, %v346
    %v348 = vrot.slane %v271, %v347
    %v349 = vlaneseq
    %v350 = vshrl.u32 %v349, 7
    %v351 = vsub.s32 3, %v350
    %v352 = vrot.slane %v271, %v351
    %v357 = vsub.f32 %v274, %v340
    %v358 = vsub.f32 %v274, %v344
    %v359 = vsub.f32 %v274, %v348
    %v360 = vsub.f32 %v274, %v352
    %v361 = vsub.f32 %v278, %v340
    %v362 = vsub.f32 %v278, %v344
    %v363 = vsub.f32 %v278, %v348
    %v364 = vsub.f32 %v278, %v352
    %v365 = vsub.f32 %v282, %v340
    %v366 = vsub.f32 %v282, %v344
    %v367 = vsub.f32 %v282, %v348
    %v368 = vsub.f32 %v282, %v352
    %v369 = vsub.f32 %v286, %v340
    %v370 = vsub.f32 %v286, %v344
    %v371 = vsub.f32 %v286, %v348
    %v372 = vsub.f32 %v286, %v352
    %v373 = vsub.f32 %v290, %v340
    %v374 = vsub.f32 %v290, %v344
    %v375 = vsub.f32 %v290, %v348
    %v376 = vsub.f32 %v290, %v352
    %v377 = vsub.f32 %v294, %v340
    %v378 = vsub.f32 %v294, %v344
    %v379 = vsub.f32 %v294, %v348
    %v380 = vsub.f32 %v294, %v352
    %v381 = vsub.f32 %v298, %v340
    %v382 = vsub.f32 %v298, %v344
    %v383 = vsub.f32 %v298, %v348
    %v384 = vsub.f32 %v298, %v352
    %v385 = vsub.f32 %v302, %v340
    %v386 = vsub.f32 %v302, %v344
    %v387 = vsub.f32 %v302, %v348
    %v388 = vsub.f32 %v302, %v352
    %v389 = vsub.f32 %v306, %v340
    %v390 = vsub.f32 %v306, %v344
    %v391 = vsub.f32 %v306, %v348
    %v392 = vsub.f32 %v306, %v352
    %v393 = vsub.f32 %v310, %v340
    %v394 = vsub.f32 %v310, %v344
    %v395 = vsub.f32 %v310, %v348
    %v396 = vsub.f32 %v310, %v352
    %v397 = vsub.f32 %v314, %v340
    %v398 = vsub.f32 %v314, %v344
    %v399 = vsub.f32 %v314, %v348
    %v400 = vsub.f32 %v314, %v352
    %v401 = vsub.f32 %v318, %v340
    %v402 = vsub.f32 %v318, %v344
    %v403 = vsub.f32 %v318, %v348
    %v404 = vsub.f32 %v318, %v352
    %v405 = vsub.f32 %v322, %v340
    %v406 = vsub.f32 %v322, %v344
    %v407 = vsub.f32 %v322, %v348
    %v408 = vsub.f32 %v322, %v352
    %v409 = vsub.f32 %v326, %v340
    %v410 = vsub.f32 %v326, %v344
    %v411 = vsub.f32 %v326, %v348
    %v412 = vsub.f32 %v326, %v352
    %v413 = vsub.f32 %v330, %v340
    %v414 = vsub.f32 %v330, %v344
    %v415 = vsub.f32 %v330, %v348
    %v416 = vsub.f32 %v330, %v352
    %v417 = vsub.f32 %v334, %v340
    %v418 = vsub.f32 %v334, %v344
    %v419 = vsub.f32 %v334, %v348
    %v420 = vsub.f32 %v334, %v352
    %v421 = vmul.f32 %v357, %v357
    %v422 = vmul.f32 %v358, %v358
    %v423 = vmul.f32 %v359, %v359
    %v424 = vmul.f32 %v360, %v360
    %v425 = vmul.f32 %v361, %v361
    %v426 = vmul.f32 %v362, %v362
    %v427 = vmul.f32 %v363, %v363
    %v428 = vmul.f32 %v364, %v364
    %v429 = vmul.f32 %v365, %v365
    %v430 = vmul.f32 %v366, %v366
    %v431 = vmul.f32 %v367, %v367
    %v432 = vmul.f32 %v368, %v368
    %v433 = vmul.f32 %v369, %v369
    %v434 = vmul.f32 %v370, %v370
    %v435 = vmul.f32 %v371, %v371
    %v436 = vmul.f32 %v372, %v372
    %v437 = vmul.f32 %v373, %v373
    %v438 = vmul.f32 %v374, %v374
    %v439 = vmul.f32 %v375, %v375
    %v440 = vmul.f32 %v376, %v376
    %v441 = vmul.f32 %v377, %v377
    %v442 = vmul.f32 %v378, %v378
    %v443 = vmul.f32 %v379, %v379
    %v444 = vmul.f32 %v380, %v380
    %v445 = vmul.f32 %v381, %v381
    %v446 = vmul.f32 %v382, %v382
    %v447 = vmul.f32 %v383, %v383
    %v448 = vmul.f32 %v384, %v384
    %v449 = vmul.f32 %v385, %v385
    %v450 = vmul.f32 %v386, %v386
    %v451 = vmul.f32 %v387, %v387
    %v452 = vmul.f32 %v388, %v388
    %v453 = vmul.f32 %v389, %v389
    %v454 = vmul.f32 %v390, %v390
    %v455 = vmul.f32 %v391, %v391
    %v456 = vmul.f32 %v392, %v392
    %v457 = vmul.f32 %v393, %v393
    %v458 = vmul.f32 %v394, %v394
    %v459 = vmul.f32 %v395, %v395
    %v460 = vmul.f32 %v396, %v396
    %v461 = vmul.f32 %v397, %v397
    %v462 = vmul.f32 %v398, %v398
    %v463 = vmul.f32 %v399, %v399
    %v464 = vmul.f32 %v400, %v400
    %v465 = vmul.f32 %v401, %v401
    %v466 = vmul.f32 %v402, %v402
    %v467 = vmul.f32 %v403, %v403
    %v468 = vmul.f32 %v404, %v404
    %v469 = vmul.f32 %v405, %v405
    %v470 = vmul.f32 %v406, %v406
    %v471 = vmul.f32 %v407, %v407
    %v472 = vmul.f32 %v408, %v408
    %v473 = vmul.f32 %v409, %v409
    %v474 = vmul.f32 %v410, %v410
    %v475 = vmul.f32 %v411, %v411
    %v476 = vmul.f32 %v412, %v412
    %v477 = vmul.f32 %v413, %v413
    %v478 = vmul.f32 %v414, %v414
    %v479 = vmul.f32 %v415, %v415
    %v480 = vmul.f32 %v416, %v416
    %v481 = vmul.f32 %v417, %v417
    %v482 = vmul.f32 %v418, %v418
    %v483 = vmul.f32 %v419, %v419
    %v484 = vmul.f32 %v420, %v420
    %v485 = vadd.f32 %v206, %v421
    %v486 = vadd.f32 %v207, %v422
    %v487 = vadd.f32 %v208, %v423
    %v488 = vadd.f32 %v209, %v424
    %v489 = vadd.f32 %v210, %v425
    %v490 = vadd.f32 %v211, %v426
    %v491 = vadd.f32 %v212, %v427
    %v492 = vadd.f32 %v213, %v428
    %v493 = vadd.f32 %v214, %v429
    %v494 = vadd.f32 %v215, %v430
    %v495 = vadd.f32 %v216, %v431
    %v496 = vadd.f32 %v217, %v432
    %v497 = vadd.f32 %v218, %v433
    %v498 = vadd.f32 %v219, %v434
    %v499 = vadd.f32 %v220, %v435
    %v500 = vadd.f32 %v221, %v436
    %v501 = vadd.f32 %v222, %v437
    %v502 = vadd.f32 %v223, %v438
    %v503 = vadd.f32 %v224, %v439
    %v504 = vadd.f32 %v225, %v440
    %v505 = vadd.f32 %v226, %v441
    %v506 = vadd.f32 %v227, %v442
    %v507 = vadd.f32 %v228, %v443
    %v508 = vadd.f32 %v229, %v444
    %v509 = vadd.f32 %v230, %v445
    %v510 = vadd.f32 %v231, %v446
    %v511 = vadd.f32 %v232, %v447
    %v512 = vadd.f32 %v233, %v448
    %v513 = vadd.f32 %v234, %v449
    %v514 = vadd.f32 %v235, %v450
    %v515 = vadd.f32 %v236, %v451
    %v516 = vadd.f32 %v237, %v452
    %v517 = vadd.f32 %v238, %v453
    %v518 = vadd.f32 %v239, %v454
    %v519 = vadd.f32 %v240, %v455
    %v520 = vadd.f32 %v241, %v456
    %v521 = vadd.f32 %v242, %v457
    %v522 = vadd.f32 %v243, %v458
    %v523 = vadd.f32 %v244, %v459
    %v524 = vadd.f32 %v245, %v460
    %v525 = vadd.f32 %v246, %v461
    %v526 = vadd.f32 %v247, %v462
    %v527 = vadd.f32 %v248, %v463
    %v528 = vadd.f32 %v249, %v464
    %v529 = vadd.f32 %v250, %v465
    %v530 = vadd.f32 %v251, %v466
    %v531 = vadd.f32 %v252, %v467
    %v532 = vadd.f32 %v253, %v468
    %v533 = vadd.f32 %v254, %v469
    %v534 = vadd.f32 %v255, %v470
    %v535 = vadd.f32 %v256, %v471
    %v536 = vadd.f32 %v257, %v472
    %v537 = vadd.f32 %v258, %v473
    %v538 = vadd.f32 %v259, %v474
    %v539 = vadd.f32 %v260, %v475
    %v540 = vadd.f32 %v261, %v476
    %v541 = vadd.f32 %v262, %v477
    %v542 = vadd.f32 %v263, %v478
    %v543 = vadd.f32 %v264, %v479
    %v544 = vadd.f32 %v265, %v480
    %v545 = vadd.f32 %v266, %v481
    %v546 = vadd.f32 %v267, %v482
    %v547 = vadd.f32 %v268, %v483
    %v548 = vadd.f32 %v269, %v484
    %s549 = scalar_lea.vmem %s1, 2
    %v550 = vld [vmem:[%s549] ss:$4 sm:$0xf]
    %551 = vset.pattern.permute.xlu0 2
    %552 = vperm.xlu0 %551, %v24
    %v553 = vpop.permute.xlu0 %552
    %555 = vset.pattern.permute.xlu0 2
    %556 = vperm.xlu0 %555, %v25
    %v557 = vpop.permute.xlu0 %556
    %559 = vset.pattern.permute.xlu0 2
    %560 = vperm.xlu0 %559, %v26
    %v561 = vpop.permute.xlu0 %560
    %563 = vset.pattern.permute.xlu0 2
    %564 = vperm.xlu0 %563, %v27
    %v565 = vpop.permute.xlu0 %564
    %567 = vset.pattern.permute.xlu0 2
    %568 = vperm.xlu0 %567, %v28
    %v569 = vpop.permute.xlu0 %568
    %571 = vset.pattern.permute.xlu0 2
    %572 = vperm.xlu0 %571, %v29
    %v573 = vpop.permute.xlu0 %572
    %575 = vset.pattern.permute.xlu0 2
    %576 = vperm.xlu0 %575, %v30
    %v577 = vpop.permute.xlu0 %576
    %579 = vset.pattern.permute.xlu0 2
    %580 = vperm.xlu0 %579, %v31
    %v581 = vpop.permute.xlu0 %580
    %583 = vset.pattern.permute.xlu0 2
    %584 = vperm.xlu0 %583, %v32
    %v585 = vpop.permute.xlu0 %584
    %587 = vset.pattern.permute.xlu0 2
    %588 = vperm.xlu0 %587, %v33
    %v589 = vpop.permute.xlu0 %588
    %591 = vset.pattern.permute.xlu0 2
    %592 = vperm.xlu0 %591, %v34
    %v593 = vpop.permute.xlu0 %592
    %595 = vset.pattern.permute.xlu0 2
    %596 = vperm.xlu0 %595, %v35
    %v597 = vpop.permute.xlu0 %596
    %599 = vset.pattern.permute.xlu0 2
    %600 = vperm.xlu0 %599, %v36
    %v601 = vpop.permute.xlu0 %600
    %603 = vset.pattern.permute.xlu0 2
    %604 = vperm.xlu0 %603, %v37
    %v605 = vpop.permute.xlu0 %604
    %607 = vset.pattern.permute.xlu0 2
    %608 = vperm.xlu0 %607, %v38
    %v609 = vpop.permute.xlu0 %608
    %611 = vset.pattern.permute.xlu0 2
    %612 = vperm.xlu0 %611, %v39
    %v613 = vpop.permute.xlu0 %612
    %v616 = vlaneseq
    %v617 = vshrl.u32 %v616, 7
    %v618 = vsub.s32 0, %v617
    %v619 = vrot.slane %v550, %v618
    %v620 = vlaneseq
    %v621 = vshrl.u32 %v620, 7
    %v622 = vsub.s32 1, %v621
    %v623 = vrot.slane %v550, %v622
    %v624 = vlaneseq
    %v625 = vshrl.u32 %v624, 7
    %v626 = vsub.s32 2, %v625
    %v627 = vrot.slane %v550, %v626
    %v628 = vlaneseq
    %v629 = vshrl.u32 %v628, 7
    %v630 = vsub.s32 3, %v629
    %v631 = vrot.slane %v550, %v630
    %v636 = vsub.f32 %v553, %v619
    %v637 = vsub.f32 %v553, %v623
    %v638 = vsub.f32 %v553, %v627
    %v639 = vsub.f32 %v553, %v631
    %v640 = vsub.f32 %v557, %v619
    %v641 = vsub.f32 %v557, %v623
    %v642 = vsub.f32 %v557, %v627
    %v643 = vsub.f32 %v557, %v631
    %v644 = vsub.f32 %v561, %v619
    %v645 = vsub.f32 %v561, %v623
    %v646 = vsub.f32 %v561, %v627
    %v647 = vsub.f32 %v561, %v631
    %v648 = vsub.f32 %v565, %v619
    %v649 = vsub.f32 %v565, %v623
    %v650 = vsub.f32 %v565, %v627
    %v651 = vsub.f32 %v565, %v631
    %v652 = vsub.f32 %v569, %v619
    %v653 = vsub.f32 %v569, %v623
    %v654 = vsub.f32 %v569, %v627
    %v655 = vsub.f32 %v569, %v631
    %v656 = vsub.f32 %v573, %v619
    %v657 = vsub.f32 %v573, %v623
    %v658 = vsub.f32 %v573, %v627
    %v659 = vsub.f32 %v573, %v631
    %v660 = vsub.f32 %v577, %v619
    %v661 = vsub.f32 %v577, %v623
    %v662 = vsub.f32 %v577, %v627
    %v663 = vsub.f32 %v577, %v631
    %v664 = vsub.f32 %v581, %v619
    %v665 = vsub.f32 %v581, %v623
    %v666 = vsub.f32 %v581, %v627
    %v667 = vsub.f32 %v581, %v631
    %v668 = vsub.f32 %v585, %v619
    %v669 = vsub.f32 %v585, %v623
    %v670 = vsub.f32 %v585, %v627
    %v671 = vsub.f32 %v585, %v631
    %v672 = vsub.f32 %v589, %v619
    %v673 = vsub.f32 %v589, %v623
    %v674 = vsub.f32 %v589, %v627
    %v675 = vsub.f32 %v589, %v631
    %v676 = vsub.f32 %v593, %v619
    %v677 = vsub.f32 %v593, %v623
    %v678 = vsub.f32 %v593, %v627
    %v679 = vsub.f32 %v593, %v631
    %v680 = vsub.f32 %v597, %v619
    %v681 = vsub.f32 %v597, %v623
    %v682 = vsub.f32 %v597, %v627
    %v683 = vsub.f32 %v597, %v631
    %v684 = vsub.f32 %v601, %v619
    %v685 = vsub.f32 %v601, %v623
    %v686 = vsub.f32 %v601, %v627
    %v687 = vsub.f32 %v601, %v631
    %v688 = vsub.f32 %v605, %v619
    %v689 = vsub.f32 %v605, %v623
    %v690 = vsub.f32 %v605, %v627
    %v691 = vsub.f32 %v605, %v631
    %v692 = vsub.f32 %v609, %v619
    %v693 = vsub.f32 %v609, %v623
    %v694 = vsub.f32 %v609, %v627
    %v695 = vsub.f32 %v609, %v631
    %v696 = vsub.f32 %v613, %v619
    %v697 = vsub.f32 %v613, %v623
    %v698 = vsub.f32 %v613, %v627
    %v699 = vsub.f32 %v613, %v631
    %v700 = vmul.f32 %v636, %v636
    %v701 = vmul.f32 %v637, %v637
    %v702 = vmul.f32 %v638, %v638
    %v703 = vmul.f32 %v639, %v639
    %v704 = vmul.f32 %v640, %v640
    %v705 = vmul.f32 %v641, %v641
    %v706 = vmul.f32 %v642, %v642
    %v707 = vmul.f32 %v643, %v643
    %v708 = vmul.f32 %v644, %v644
    %v709 = vmul.f32 %v645, %v645
    %v710 = vmul.f32 %v646, %v646
    %v711 = vmul.f32 %v647, %v647
    %v712 = vmul.f32 %v648, %v648
    %v713 = vmul.f32 %v649, %v649
    %v714 = vmul.f32 %v650, %v650
    %v715 = vmul.f32 %v651, %v651
    %v716 = vmul.f32 %v652, %v652
    %v717 = vmul.f32 %v653, %v653
    %v718 = vmul.f32 %v654, %v654
    %v719 = vmul.f32 %v655, %v655
    %v720 = vmul.f32 %v656, %v656
    %v721 = vmul.f32 %v657, %v657
    %v722 = vmul.f32 %v658, %v658
    %v723 = vmul.f32 %v659, %v659
    %v724 = vmul.f32 %v660, %v660
    %v725 = vmul.f32 %v661, %v661
    %v726 = vmul.f32 %v662, %v662
    %v727 = vmul.f32 %v663, %v663
    %v728 = vmul.f32 %v664, %v664
    %v729 = vmul.f32 %v665, %v665
    %v730 = vmul.f32 %v666, %v666
    %v731 = vmul.f32 %v667, %v667
    %v732 = vmul.f32 %v668, %v668
    %v733 = vmul.f32 %v669, %v669
    %v734 = vmul.f32 %v670, %v670
    %v735 = vmul.f32 %v671, %v671
    %v736 = vmul.f32 %v672, %v672
    %v737 = vmul.f32 %v673, %v673
    %v738 = vmul.f32 %v674, %v674
    %v739 = vmul.f32 %v675, %v675
    %v740 = vmul.f32 %v676, %v676
    %v741 = vmul.f32 %v677, %v677
    %v742 = vmul.f32 %v678, %v678
    %v743 = vmul.f32 %v679, %v679
    %v744 = vmul.f32 %v680, %v680
    %v745 = vmul.f32 %v681, %v681
    %v746 = vmul.f32 %v682, %v682
    %v747 = vmul.f32 %v683, %v683
    %v748 = vmul.f32 %v684, %v684
    %v749 = vmul.f32 %v685, %v685
    %v750 = vmul.f32 %v686, %v686
    %v751 = vmul.f32 %v687, %v687
    %v752 = vmul.f32 %v688, %v688
    %v753 = vmul.f32 %v689, %v689
    %v754 = vmul.f32 %v690, %v690
    %v755 = vmul.f32 %v691, %v691
    %v756 = vmul.f32 %v692, %v692
    %v757 = vmul.f32 %v693, %v693
    %v758 = vmul.f32 %v694, %v694
    %v759 = vmul.f32 %v695, %v695
    %v760 = vmul.f32 %v696, %v696
    %v761 = vmul.f32 %v697, %v697
    %v762 = vmul.f32 %v698, %v698
    %v763 = vmul.f32 %v699, %v699
    %v764 = vadd.f32 %v485, %v700
    %v765 = vadd.f32 %v486, %v701
    %v766 = vadd.f32 %v487, %v702
    %v767 = vadd.f32 %v488, %v703
    %v768 = vadd.f32 %v489, %v704
    %v769 = vadd.f32 %v490, %v705
    %v770 = vadd.f32 %v491, %v706
    %v771 = vadd.f32 %v492, %v707
    %v772 = vadd.f32 %v493, %v708
    %v773 = vadd.f32 %v494, %v709
    %v774 = vadd.f32 %v495, %v710
    %v775 = vadd.f32 %v496, %v711
    %v776 = vadd.f32 %v497, %v712
    %v777 = vadd.f32 %v498, %v713
    %v778 = vadd.f32 %v499, %v714
    %v779 = vadd.f32 %v500, %v715
    %v780 = vadd.f32 %v501, %v716
    %v781 = vadd.f32 %v502, %v717
    %v782 = vadd.f32 %v503, %v718
    %v783 = vadd.f32 %v504, %v719
    %v784 = vadd.f32 %v505, %v720
    %v785 = vadd.f32 %v506, %v721
    %v786 = vadd.f32 %v507, %v722
    %v787 = vadd.f32 %v508, %v723
    %v788 = vadd.f32 %v509, %v724
    %v789 = vadd.f32 %v510, %v725
    %v790 = vadd.f32 %v511, %v726
    %v791 = vadd.f32 %v512, %v727
    %v792 = vadd.f32 %v513, %v728
    %v793 = vadd.f32 %v514, %v729
    %v794 = vadd.f32 %v515, %v730
    %v795 = vadd.f32 %v516, %v731
    %v796 = vadd.f32 %v517, %v732
    %v797 = vadd.f32 %v518, %v733
    %v798 = vadd.f32 %v519, %v734
    %v799 = vadd.f32 %v520, %v735
    %v800 = vadd.f32 %v521, %v736
    %v801 = vadd.f32 %v522, %v737
    %v802 = vadd.f32 %v523, %v738
    %v803 = vadd.f32 %v524, %v739
    %v804 = vadd.f32 %v525, %v740
    %v805 = vadd.f32 %v526, %v741
    %v806 = vadd.f32 %v527, %v742
    %v807 = vadd.f32 %v528, %v743
    %v808 = vadd.f32 %v529, %v744
    %v809 = vadd.f32 %v530, %v745
    %v810 = vadd.f32 %v531, %v746
    %v811 = vadd.f32 %v532, %v747
    %v812 = vadd.f32 %v533, %v748
    %v813 = vadd.f32 %v534, %v749
    %v814 = vadd.f32 %v535, %v750
    %v815 = vadd.f32 %v536, %v751
    %v816 = vadd.f32 %v537, %v752
    %v817 = vadd.f32 %v538, %v753
    %v818 = vadd.f32 %v539, %v754
    %v819 = vadd.f32 %v540, %v755
    %v820 = vadd.f32 %v541, %v756
    %v821 = vadd.f32 %v542, %v757
    %v822 = vadd.f32 %v543, %v758
    %v823 = vadd.f32 %v544, %v759
    %v824 = vadd.f32 %v545, %v760
    %v825 = vadd.f32 %v546, %v761
    %v826 = vadd.f32 %v547, %v762
    %v827 = vadd.f32 %v548, %v763
    %v828 = vlaneseq
    %v829 = vshrl.u32 %v828, 7
    %v830 = vadd.s32 %v829, 8
    %v831 = vadd.s32 %v829, 16
    %v832 = vadd.s32 %v829, 24
    %v833 = vadd.s32 %v829, 32
    %v834 = vadd.s32 %v829, 40
    %v835 = vadd.s32 %v829, 48
    %v836 = vadd.s32 %v829, 56
    %v837 = vadd.s32 %v829, 64
    %v838 = vadd.s32 %v829, 72
    %v839 = vadd.s32 %v829, 80
    %v840 = vadd.s32 %v829, 88
    %v841 = vadd.s32 %v829, 96
    %v842 = vadd.s32 %v829, 104
    %v843 = vadd.s32 %v829, 112
    %v844 = vadd.s32 %v829, 120
    %v845 = vmin.f32 %v764, %v768
    %v846 = vmin.f32 %v845, %v772
    %v847 = vmin.f32 %v846, %v776
    %v848 = vmin.f32 %v847, %v780
    %v849 = vmin.f32 %v848, %v784
    %v850 = vmin.f32 %v849, %v788
    %v851 = vmin.f32 %v850, %v792
    %v852 = vmin.f32 %v851, %v796
    %v853 = vmin.f32 %v852, %v800
    %v854 = vmin.f32 %v853, %v804
    %v855 = vmin.f32 %v854, %v808
    %v856 = vmin.f32 %v855, %v812
    %v857 = vmin.f32 %v856, %v816
    %v858 = vmin.f32 %v857, %v820
    %v859 = vmin.f32 %v858, %v824
    %v860 = vrot.slane %v859, 4
    %v861 = vmin.f32 %v859, %v860
    %v862 = vrot.slane %v861, 2
    %v863 = vmin.f32 %v861, %v862
    %v864 = vrot.slane %v863, 1
    %v865 = vmin.f32 %v863, %v864
    %v866 = vmin.f32 %v765, %v769
    %v867 = vmin.f32 %v866, %v773
    %v868 = vmin.f32 %v867, %v777
    %v869 = vmin.f32 %v868, %v781
    %v870 = vmin.f32 %v869, %v785
    %v871 = vmin.f32 %v870, %v789
    %v872 = vmin.f32 %v871, %v793
    %v873 = vmin.f32 %v872, %v797
    %v874 = vmin.f32 %v873, %v801
    %v875 = vmin.f32 %v874, %v805
    %v876 = vmin.f32 %v875, %v809
    %v877 = vmin.f32 %v876, %v813
    %v878 = vmin.f32 %v877, %v817
    %v879 = vmin.f32 %v878, %v821
    %v880 = vmin.f32 %v879, %v825
    %v881 = vrot.slane %v880, 4
    %v882 = vmin.f32 %v880, %v881
    %v883 = vrot.slane %v882, 2
    %v884 = vmin.f32 %v882, %v883
    %v885 = vrot.slane %v884, 1
    %v886 = vmin.f32 %v884, %v885
    %v887 = vmin.f32 %v766, %v770
    %v888 = vmin.f32 %v887, %v774
    %v889 = vmin.f32 %v888, %v778
    %v890 = vmin.f32 %v889, %v782
    %v891 = vmin.f32 %v890, %v786
    %v892 = vmin.f32 %v891, %v790
    %v893 = vmin.f32 %v892, %v794
    %v894 = vmin.f32 %v893, %v798
    %v895 = vmin.f32 %v894, %v802
    %v896 = vmin.f32 %v895, %v806
    %v897 = vmin.f32 %v896, %v810
    %v898 = vmin.f32 %v897, %v814
    %v899 = vmin.f32 %v898, %v818
    %v900 = vmin.f32 %v899, %v822
    %v901 = vmin.f32 %v900, %v826
    %v902 = vrot.slane %v901, 4
    %v903 = vmin.f32 %v901, %v902
    %v904 = vrot.slane %v903, 2
    %v905 = vmin.f32 %v903, %v904
    %v906 = vrot.slane %v905, 1
    %v907 = vmin.f32 %v905, %v906
    %v908 = vmin.f32 %v767, %v771
    %v909 = vmin.f32 %v908, %v775
    %v910 = vmin.f32 %v909, %v779
    %v911 = vmin.f32 %v910, %v783
    %v912 = vmin.f32 %v911, %v787
    %v913 = vmin.f32 %v912, %v791
    %v914 = vmin.f32 %v913, %v795
    %v915 = vmin.f32 %v914, %v799
    %v916 = vmin.f32 %v915, %v803
    %v917 = vmin.f32 %v916, %v807
    %v918 = vmin.f32 %v917, %v811
    %v919 = vmin.f32 %v918, %v815
    %v920 = vmin.f32 %v919, %v819
    %v921 = vmin.f32 %v920, %v823
    %v922 = vmin.f32 %v921, %v827
    %v923 = vrot.slane %v922, 4
    %v924 = vmin.f32 %v922, %v923
    %v925 = vrot.slane %v924, 2
    %v926 = vmin.f32 %v924, %v925
    %v927 = vrot.slane %v926, 1
    %v928 = vmin.f32 %v926, %v927
    %vm929 = vcmp.le.f32.partialorder %v764, %v865
    %vm930 = vcmp.le.f32.partialorder %v765, %v886
    %vm931 = vcmp.le.f32.partialorder %v766, %v907
    %vm932 = vcmp.le.f32.partialorder %v767, %v928
    %vm933 = vcmp.le.f32.partialorder %v768, %v865
    %vm934 = vcmp.le.f32.partialorder %v769, %v886
    %vm935 = vcmp.le.f32.partialorder %v770, %v907
    %vm936 = vcmp.le.f32.partialorder %v771, %v928
    %vm937 = vcmp.le.f32.partialorder %v772, %v865
    %vm938 = vcmp.le.f32.partialorder %v773, %v886
    %vm939 = vcmp.le.f32.partialorder %v774, %v907
    %vm940 = vcmp.le.f32.partialorder %v775, %v928
    %vm941 = vcmp.le.f32.partialorder %v776, %v865
    %vm942 = vcmp.le.f32.partialorder %v777, %v886
    %vm943 = vcmp.le.f32.partialorder %v778, %v907
    %vm944 = vcmp.le.f32.partialorder %v779, %v928
    %vm945 = vcmp.le.f32.partialorder %v780, %v865
    %vm946 = vcmp.le.f32.partialorder %v781, %v886
    %vm947 = vcmp.le.f32.partialorder %v782, %v907
    %vm948 = vcmp.le.f32.partialorder %v783, %v928
    %vm949 = vcmp.le.f32.partialorder %v784, %v865
    %vm950 = vcmp.le.f32.partialorder %v785, %v886
    %vm951 = vcmp.le.f32.partialorder %v786, %v907
    %vm952 = vcmp.le.f32.partialorder %v787, %v928
    %vm953 = vcmp.le.f32.partialorder %v788, %v865
    %vm954 = vcmp.le.f32.partialorder %v789, %v886
    %vm955 = vcmp.le.f32.partialorder %v790, %v907
    %vm956 = vcmp.le.f32.partialorder %v791, %v928
    %vm957 = vcmp.le.f32.partialorder %v792, %v865
    %vm958 = vcmp.le.f32.partialorder %v793, %v886
    %vm959 = vcmp.le.f32.partialorder %v794, %v907
    %vm960 = vcmp.le.f32.partialorder %v795, %v928
    %vm961 = vcmp.le.f32.partialorder %v796, %v865
    %vm962 = vcmp.le.f32.partialorder %v797, %v886
    %vm963 = vcmp.le.f32.partialorder %v798, %v907
    %vm964 = vcmp.le.f32.partialorder %v799, %v928
    %vm965 = vcmp.le.f32.partialorder %v800, %v865
    %vm966 = vcmp.le.f32.partialorder %v801, %v886
    %vm967 = vcmp.le.f32.partialorder %v802, %v907
    %vm968 = vcmp.le.f32.partialorder %v803, %v928
    %vm969 = vcmp.le.f32.partialorder %v804, %v865
    %vm970 = vcmp.le.f32.partialorder %v805, %v886
    %vm971 = vcmp.le.f32.partialorder %v806, %v907
    %vm972 = vcmp.le.f32.partialorder %v807, %v928
    %vm973 = vcmp.le.f32.partialorder %v808, %v865
    %vm974 = vcmp.le.f32.partialorder %v809, %v886
    %vm975 = vcmp.le.f32.partialorder %v810, %v907
    %vm976 = vcmp.le.f32.partialorder %v811, %v928
    %vm977 = vcmp.le.f32.partialorder %v812, %v865
    %vm978 = vcmp.le.f32.partialorder %v813, %v886
    %vm979 = vcmp.le.f32.partialorder %v814, %v907
    %vm980 = vcmp.le.f32.partialorder %v815, %v928
    %vm981 = vcmp.le.f32.partialorder %v816, %v865
    %vm982 = vcmp.le.f32.partialorder %v817, %v886
    %vm983 = vcmp.le.f32.partialorder %v818, %v907
    %vm984 = vcmp.le.f32.partialorder %v819, %v928
    %vm985 = vcmp.le.f32.partialorder %v820, %v865
    %vm986 = vcmp.le.f32.partialorder %v821, %v886
    %vm987 = vcmp.le.f32.partialorder %v822, %v907
    %vm988 = vcmp.le.f32.partialorder %v823, %v928
    %vm989 = vcmp.le.f32.partialorder %v824, %v865
    %vm990 = vcmp.le.f32.partialorder %v825, %v886
    %vm991 = vcmp.le.f32.partialorder %v826, %v907
    %vm992 = vcmp.le.f32.partialorder %v827, %v928
    %v993 = vsel %vm929, %v829, 128
    %v994 = vsel %vm930, %v829, 128
    %v995 = vsel %vm931, %v829, 128
    %v996 = vsel %vm932, %v829, 128
    %v997 = vsel %vm933, %v830, 128
    %v998 = vsel %vm934, %v830, 128
    %v999 = vsel %vm935, %v830, 128
    %v1000 = vsel %vm936, %v830, 128
    %v1001 = vsel %vm937, %v831, 128
    %v1002 = vsel %vm938, %v831, 128
    %v1003 = vsel %vm939, %v831, 128
    %v1004 = vsel %vm940, %v831, 128
    %v1005 = vsel %vm941, %v832, 128
    %v1006 = vsel %vm942, %v832, 128
    %v1007 = vsel %vm943, %v832, 128
    %v1008 = vsel %vm944, %v832, 128
    %v1009 = vsel %vm945, %v833, 128
    %v1010 = vsel %vm946, %v833, 128
    %v1011 = vsel %vm947, %v833, 128
    %v1012 = vsel %vm948, %v833, 128
    %v1013 = vsel %vm949, %v834, 128
    %v1014 = vsel %vm950, %v834, 128
    %v1015 = vsel %vm951, %v834, 128
    %v1016 = vsel %vm952, %v834, 128
    %v1017 = vsel %vm953, %v835, 128
    %v1018 = vsel %vm954, %v835, 128
    %v1019 = vsel %vm955, %v835, 128
    %v1020 = vsel %vm956, %v835, 128
    %v1021 = vsel %vm957, %v836, 128
    %v1022 = vsel %vm958, %v836, 128
    %v1023 = vsel %vm959, %v836, 128
    %v1024 = vsel %vm960, %v836, 128
    %v1025 = vsel %vm961, %v837, 128
    %v1026 = vsel %vm962, %v837, 128
    %v1027 = vsel %vm963, %v837, 128
    %v1028 = vsel %vm964, %v837, 128
    %v1029 = vsel %vm965, %v838, 128
    %v1030 = vsel %vm966, %v838, 128
    %v1031 = vsel %vm967, %v838, 128
    %v1032 = vsel %vm968, %v838, 128
    %v1033 = vsel %vm969, %v839, 128
    %v1034 = vsel %vm970, %v839, 128
    %v1035 = vsel %vm971, %v839, 128
    %v1036 = vsel %vm972, %v839, 128
    %v1037 = vsel %vm973, %v840, 128
    %v1038 = vsel %vm974, %v840, 128
    %v1039 = vsel %vm975, %v840, 128
    %v1040 = vsel %vm976, %v840, 128
    %v1041 = vsel %vm977, %v841, 128
    %v1042 = vsel %vm978, %v841, 128
    %v1043 = vsel %vm979, %v841, 128
    %v1044 = vsel %vm980, %v841, 128
    %v1045 = vsel %vm981, %v842, 128
    %v1046 = vsel %vm982, %v842, 128
    %v1047 = vsel %vm983, %v842, 128
    %v1048 = vsel %vm984, %v842, 128
    %v1049 = vsel %vm985, %v843, 128
    %v1050 = vsel %vm986, %v843, 128
    %v1051 = vsel %vm987, %v843, 128
    %v1052 = vsel %vm988, %v843, 128
    %v1053 = vsel %vm989, %v844, 128
    %v1054 = vsel %vm990, %v844, 128
    %v1055 = vsel %vm991, %v844, 128
    %v1056 = vsel %vm992, %v844, 128
    %vm1057 = vcmp.lt.s32.totalorder %v993, %v997
    %v1058 = vsel %vm1057, %v993, %v997
    %vm1059 = vcmp.lt.s32.totalorder %v1058, %v1001
    %v1060 = vsel %vm1059, %v1058, %v1001
    %vm1061 = vcmp.lt.s32.totalorder %v1060, %v1005
    %v1062 = vsel %vm1061, %v1060, %v1005
    %vm1063 = vcmp.lt.s32.totalorder %v1062, %v1009
    %v1064 = vsel %vm1063, %v1062, %v1009
    %vm1065 = vcmp.lt.s32.totalorder %v1064, %v1013
    %v1066 = vsel %vm1065, %v1064, %v1013
    %vm1067 = vcmp.lt.s32.totalorder %v1066, %v1017
    %v1068 = vsel %vm1067, %v1066, %v1017
    %vm1069 = vcmp.lt.s32.totalorder %v1068, %v1021
    %v1070 = vsel %vm1069, %v1068, %v1021
    %vm1071 = vcmp.lt.s32.totalorder %v1070, %v1025
    %v1072 = vsel %vm1071, %v1070, %v1025
    %vm1073 = vcmp.lt.s32.totalorder %v1072, %v1029
    %v1074 = vsel %vm1073, %v1072, %v1029
    %vm1075 = vcmp.lt.s32.totalorder %v1074, %v1033
    %v1076 = vsel %vm1075, %v1074, %v1033
    %vm1077 = vcmp.lt.s32.totalorder %v1076, %v1037
    %v1078 = vsel %vm1077, %v1076, %v1037
    %vm1079 = vcmp.lt.s32.totalorder %v1078, %v1041
    %v1080 = vsel %vm1079, %v1078, %v1041
    %vm1081 = vcmp.lt.s32.totalorder %v1080, %v1045
    %v1082 = vsel %vm1081, %v1080, %v1045
    %vm1083 = vcmp.lt.s32.totalorder %v1082, %v1049
    %v1084 = vsel %vm1083, %v1082, %v1049
    %vm1085 = vcmp.lt.s32.totalorder %v1084, %v1053
    %v1086 = vsel %vm1085, %v1084, %v1053
    %v1087 = vrot.slane %v1086, 4
    %vm1088 = vcmp.lt.s32.totalorder %v1086, %v1087
    %v1089 = vsel %vm1088, %v1086, %v1087
    %v1090 = vrot.slane %v1089, 2
    %vm1091 = vcmp.lt.s32.totalorder %v1089, %v1090
    %v1092 = vsel %vm1091, %v1089, %v1090
    %v1093 = vrot.slane %v1092, 1
    %vm1094 = vcmp.lt.s32.totalorder %v1092, %v1093
    %v1095 = vsel %vm1094, %v1092, %v1093
    %vm1096 = vcmp.lt.s32.totalorder %v994, %v998
    %v1097 = vsel %vm1096, %v994, %v998
    %vm1098 = vcmp.lt.s32.totalorder %v1097, %v1002
    %v1099 = vsel %vm1098, %v1097, %v1002
    %vm1100 = vcmp.lt.s32.totalorder %v1099, %v1006
    %v1101 = vsel %vm1100, %v1099, %v1006
    %vm1102 = vcmp.lt.s32.totalorder %v1101, %v1010
    %v1103 = vsel %vm1102, %v1101, %v1010
    %vm1104 = vcmp.lt.s32.totalorder %v1103, %v1014
    %v1105 = vsel %vm1104, %v1103, %v1014
    %vm1106 = vcmp.lt.s32.totalorder %v1105, %v1018
    %v1107 = vsel %vm1106, %v1105, %v1018
    %vm1108 = vcmp.lt.s32.totalorder %v1107, %v1022
    %v1109 = vsel %vm1108, %v1107, %v1022
    %vm1110 = vcmp.lt.s32.totalorder %v1109, %v1026
    %v1111 = vsel %vm1110, %v1109, %v1026
    %vm1112 = vcmp.lt.s32.totalorder %v1111, %v1030
    %v1113 = vsel %vm1112, %v1111, %v1030
    %vm1114 = vcmp.lt.s32.totalorder %v1113, %v1034
    %v1115 = vsel %vm1114, %v1113, %v1034
    %vm1116 = vcmp.lt.s32.totalorder %v1115, %v1038
    %v1117 = vsel %vm1116, %v1115, %v1038
    %vm1118 = vcmp.lt.s32.totalorder %v1117, %v1042
    %v1119 = vsel %vm1118, %v1117, %v1042
    %vm1120 = vcmp.lt.s32.totalorder %v1119, %v1046
    %v1121 = vsel %vm1120, %v1119, %v1046
    %vm1122 = vcmp.lt.s32.totalorder %v1121, %v1050
    %v1123 = vsel %vm1122, %v1121, %v1050
    %vm1124 = vcmp.lt.s32.totalorder %v1123, %v1054
    %v1125 = vsel %vm1124, %v1123, %v1054
    %v1126 = vrot.slane %v1125, 4
    %vm1127 = vcmp.lt.s32.totalorder %v1125, %v1126
    %v1128 = vsel %vm1127, %v1125, %v1126
    %v1129 = vrot.slane %v1128, 2
    %vm1130 = vcmp.lt.s32.totalorder %v1128, %v1129
    %v1131 = vsel %vm1130, %v1128, %v1129
    %v1132 = vrot.slane %v1131, 1
    %vm1133 = vcmp.lt.s32.totalorder %v1131, %v1132
    %v1134 = vsel %vm1133, %v1131, %v1132
    %vm1135 = vcmp.lt.s32.totalorder %v995, %v999
    %v1136 = vsel %vm1135, %v995, %v999
    %vm1137 = vcmp.lt.s32.totalorder %v1136, %v1003
    %v1138 = vsel %vm1137, %v1136, %v1003
    %vm1139 = vcmp.lt.s32.totalorder %v1138, %v1007
    %v1140 = vsel %vm1139, %v1138, %v1007
    %vm1141 = vcmp.lt.s32.totalorder %v1140, %v1011
    %v1142 = vsel %vm1141, %v1140, %v1011
    %vm1143 = vcmp.lt.s32.totalorder %v1142, %v1015
    %v1144 = vsel %vm1143, %v1142, %v1015
    %vm1145 = vcmp.lt.s32.totalorder %v1144, %v1019
    %v1146 = vsel %vm1145, %v1144, %v1019
    %vm1147 = vcmp.lt.s32.totalorder %v1146, %v1023
    %v1148 = vsel %vm1147, %v1146, %v1023
    %vm1149 = vcmp.lt.s32.totalorder %v1148, %v1027
    %v1150 = vsel %vm1149, %v1148, %v1027
    %vm1151 = vcmp.lt.s32.totalorder %v1150, %v1031
    %v1152 = vsel %vm1151, %v1150, %v1031
    %vm1153 = vcmp.lt.s32.totalorder %v1152, %v1035
    %v1154 = vsel %vm1153, %v1152, %v1035
    %vm1155 = vcmp.lt.s32.totalorder %v1154, %v1039
    %v1156 = vsel %vm1155, %v1154, %v1039
    %vm1157 = vcmp.lt.s32.totalorder %v1156, %v1043
    %v1158 = vsel %vm1157, %v1156, %v1043
    %vm1159 = vcmp.lt.s32.totalorder %v1158, %v1047
    %v1160 = vsel %vm1159, %v1158, %v1047
    %vm1161 = vcmp.lt.s32.totalorder %v1160, %v1051
    %v1162 = vsel %vm1161, %v1160, %v1051
    %vm1163 = vcmp.lt.s32.totalorder %v1162, %v1055
    %v1164 = vsel %vm1163, %v1162, %v1055
    %v1165 = vrot.slane %v1164, 4
    %vm1166 = vcmp.lt.s32.totalorder %v1164, %v1165
    %v1167 = vsel %vm1166, %v1164, %v1165
    %v1168 = vrot.slane %v1167, 2
    %vm1169 = vcmp.lt.s32.totalorder %v1167, %v1168
    %v1170 = vsel %vm1169, %v1167, %v1168
    %v1171 = vrot.slane %v1170, 1
    %vm1172 = vcmp.lt.s32.totalorder %v1170, %v1171
    %v1173 = vsel %vm1172, %v1170, %v1171
    %vm1174 = vcmp.lt.s32.totalorder %v996, %v1000
    %v1175 = vsel %vm1174, %v996, %v1000
    %vm1176 = vcmp.lt.s32.totalorder %v1175, %v1004
    %v1177 = vsel %vm1176, %v1175, %v1004
    %vm1178 = vcmp.lt.s32.totalorder %v1177, %v1008
    %v1179 = vsel %vm1178, %v1177, %v1008
    %vm1180 = vcmp.lt.s32.totalorder %v1179, %v1012
    %v1181 = vsel %vm1180, %v1179, %v1012
    %vm1182 = vcmp.lt.s32.totalorder %v1181, %v1016
    %v1183 = vsel %vm1182, %v1181, %v1016
    %vm1184 = vcmp.lt.s32.totalorder %v1183, %v1020
    %v1185 = vsel %vm1184, %v1183, %v1020
    %vm1186 = vcmp.lt.s32.totalorder %v1185, %v1024
    %v1187 = vsel %vm1186, %v1185, %v1024
    %vm1188 = vcmp.lt.s32.totalorder %v1187, %v1028
    %v1189 = vsel %vm1188, %v1187, %v1028
    %vm1190 = vcmp.lt.s32.totalorder %v1189, %v1032
    %v1191 = vsel %vm1190, %v1189, %v1032
    %vm1192 = vcmp.lt.s32.totalorder %v1191, %v1036
    %v1193 = vsel %vm1192, %v1191, %v1036
    %vm1194 = vcmp.lt.s32.totalorder %v1193, %v1040
    %v1195 = vsel %vm1194, %v1193, %v1040
    %vm1196 = vcmp.lt.s32.totalorder %v1195, %v1044
    %v1197 = vsel %vm1196, %v1195, %v1044
    %vm1198 = vcmp.lt.s32.totalorder %v1197, %v1048
    %v1199 = vsel %vm1198, %v1197, %v1048
    %vm1200 = vcmp.lt.s32.totalorder %v1199, %v1052
    %v1201 = vsel %vm1200, %v1199, %v1052
    %vm1202 = vcmp.lt.s32.totalorder %v1201, %v1056
    %v1203 = vsel %vm1202, %v1201, %v1056
    %v1204 = vrot.slane %v1203, 4
    %vm1205 = vcmp.lt.s32.totalorder %v1203, %v1204
    %v1206 = vsel %vm1205, %v1203, %v1204
    %v1207 = vrot.slane %v1206, 2
    %vm1208 = vcmp.lt.s32.totalorder %v1206, %v1207
    %v1209 = vsel %vm1208, %v1206, %v1207
    %v1210 = vrot.slane %v1209, 1
    %vm1211 = vcmp.lt.s32.totalorder %v1209, %v1210
    %v1212 = vsel %vm1211, %v1209, %v1210
    %vm1213 = vcmp.eq.s32.totalorder %v829, %v1095
    %vm1214 = vcmp.eq.s32.totalorder %v829, %v1134
    %vm1215 = vcmp.eq.s32.totalorder %v829, %v1173
    %vm1216 = vcmp.eq.s32.totalorder %v829, %v1212
    %vm1217 = vcmp.eq.s32.totalorder %v830, %v1095
    %vm1218 = vcmp.eq.s32.totalorder %v830, %v1134
    %vm1219 = vcmp.eq.s32.totalorder %v830, %v1173
    %vm1220 = vcmp.eq.s32.totalorder %v830, %v1212
    %vm1221 = vcmp.eq.s32.totalorder %v831, %v1095
    %vm1222 = vcmp.eq.s32.totalorder %v831, %v1134
    %vm1223 = vcmp.eq.s32.totalorder %v831, %v1173
    %vm1224 = vcmp.eq.s32.totalorder %v831, %v1212
    %vm1225 = vcmp.eq.s32.totalorder %v832, %v1095
    %vm1226 = vcmp.eq.s32.totalorder %v832, %v1134
    %vm1227 = vcmp.eq.s32.totalorder %v832, %v1173
    %vm1228 = vcmp.eq.s32.totalorder %v832, %v1212
    %vm1229 = vcmp.eq.s32.totalorder %v833, %v1095
    %vm1230 = vcmp.eq.s32.totalorder %v833, %v1134
    %vm1231 = vcmp.eq.s32.totalorder %v833, %v1173
    %vm1232 = vcmp.eq.s32.totalorder %v833, %v1212
    %vm1233 = vcmp.eq.s32.totalorder %v834, %v1095
    %vm1234 = vcmp.eq.s32.totalorder %v834, %v1134
    %vm1235 = vcmp.eq.s32.totalorder %v834, %v1173
    %vm1236 = vcmp.eq.s32.totalorder %v834, %v1212
    %vm1237 = vcmp.eq.s32.totalorder %v835, %v1095
    %vm1238 = vcmp.eq.s32.totalorder %v835, %v1134
    %vm1239 = vcmp.eq.s32.totalorder %v835, %v1173
    %vm1240 = vcmp.eq.s32.totalorder %v835, %v1212
    %vm1241 = vcmp.eq.s32.totalorder %v836, %v1095
    %vm1242 = vcmp.eq.s32.totalorder %v836, %v1134
    %vm1243 = vcmp.eq.s32.totalorder %v836, %v1173
    %vm1244 = vcmp.eq.s32.totalorder %v836, %v1212
    %vm1245 = vcmp.eq.s32.totalorder %v837, %v1095
    %vm1246 = vcmp.eq.s32.totalorder %v837, %v1134
    %vm1247 = vcmp.eq.s32.totalorder %v837, %v1173
    %vm1248 = vcmp.eq.s32.totalorder %v837, %v1212
    %vm1249 = vcmp.eq.s32.totalorder %v838, %v1095
    %vm1250 = vcmp.eq.s32.totalorder %v838, %v1134
    %vm1251 = vcmp.eq.s32.totalorder %v838, %v1173
    %vm1252 = vcmp.eq.s32.totalorder %v838, %v1212
    %vm1253 = vcmp.eq.s32.totalorder %v839, %v1095
    %vm1254 = vcmp.eq.s32.totalorder %v839, %v1134
    %vm1255 = vcmp.eq.s32.totalorder %v839, %v1173
    %vm1256 = vcmp.eq.s32.totalorder %v839, %v1212
    %vm1257 = vcmp.eq.s32.totalorder %v840, %v1095
    %vm1258 = vcmp.eq.s32.totalorder %v840, %v1134
    %vm1259 = vcmp.eq.s32.totalorder %v840, %v1173
    %vm1260 = vcmp.eq.s32.totalorder %v840, %v1212
    %vm1261 = vcmp.eq.s32.totalorder %v841, %v1095
    %vm1262 = vcmp.eq.s32.totalorder %v841, %v1134
    %vm1263 = vcmp.eq.s32.totalorder %v841, %v1173
    %vm1264 = vcmp.eq.s32.totalorder %v841, %v1212
    %vm1265 = vcmp.eq.s32.totalorder %v842, %v1095
    %vm1266 = vcmp.eq.s32.totalorder %v842, %v1134
    %vm1267 = vcmp.eq.s32.totalorder %v842, %v1173
    %vm1268 = vcmp.eq.s32.totalorder %v842, %v1212
    %vm1269 = vcmp.eq.s32.totalorder %v843, %v1095
    %vm1270 = vcmp.eq.s32.totalorder %v843, %v1134
    %vm1271 = vcmp.eq.s32.totalorder %v843, %v1173
    %vm1272 = vcmp.eq.s32.totalorder %v843, %v1212
    %vm1273 = vcmp.eq.s32.totalorder %v844, %v1095
    %vm1274 = vcmp.eq.s32.totalorder %v844, %v1134
    %vm1275 = vcmp.eq.s32.totalorder %v844, %v1173
    %vm1276 = vcmp.eq.s32.totalorder %v844, %v1212
    %v1277 = vmax.f32 %v865, 1e-16
    %v1278 = vmax.f32 %v886, 1e-16
    %v1279 = vmax.f32 %v907, 1e-16
    %v1280 = vmax.f32 %v928, 1e-16
    %v1281 = vrcp.pop %v1277
    %v1282 = vrcp.pop %v1278
    %v1283 = vrcp.pop %v1279
    %v1284 = vrcp.pop %v1280
    %v1285 = vsel %vm1213, %v1281, 0.0
    %v1286 = vsel %vm1214, %v1282, 0.0
    %v1287 = vsel %vm1215, %v1283, 0.0
    %v1288 = vsel %vm1216, %v1284, 0.0
    %v1289 = vsel %vm1217, %v1281, 0.0
    %v1290 = vsel %vm1218, %v1282, 0.0
    %v1291 = vsel %vm1219, %v1283, 0.0
    %v1292 = vsel %vm1220, %v1284, 0.0
    %v1293 = vsel %vm1221, %v1281, 0.0
    %v1294 = vsel %vm1222, %v1282, 0.0
    %v1295 = vsel %vm1223, %v1283, 0.0
    %v1296 = vsel %vm1224, %v1284, 0.0
    %v1297 = vsel %vm1225, %v1281, 0.0
    %v1298 = vsel %vm1226, %v1282, 0.0
    %v1299 = vsel %vm1227, %v1283, 0.0
    %v1300 = vsel %vm1228, %v1284, 0.0
    %v1301 = vsel %vm1229, %v1281, 0.0
    %v1302 = vsel %vm1230, %v1282, 0.0
    %v1303 = vsel %vm1231, %v1283, 0.0
    %v1304 = vsel %vm1232, %v1284, 0.0
    %v1305 = vsel %vm1233, %v1281, 0.0
    %v1306 = vsel %vm1234, %v1282, 0.0
    %v1307 = vsel %vm1235, %v1283, 0.0
    %v1308 = vsel %vm1236, %v1284, 0.0
    %v1309 = vsel %vm1237, %v1281, 0.0
    %v1310 = vsel %vm1238, %v1282, 0.0
    %v1311 = vsel %vm1239, %v1283, 0.0
    %v1312 = vsel %vm1240, %v1284, 0.0
    %v1313 = vsel %vm1241, %v1281, 0.0
    %v1314 = vsel %vm1242, %v1282, 0.0
    %v1315 = vsel %vm1243, %v1283, 0.0
    %v1316 = vsel %vm1244, %v1284, 0.0
    %v1317 = vsel %vm1245, %v1281, 0.0
    %v1318 = vsel %vm1246, %v1282, 0.0
    %v1319 = vsel %vm1247, %v1283, 0.0
    %v1320 = vsel %vm1248, %v1284, 0.0
    %v1321 = vsel %vm1249, %v1281, 0.0
    %v1322 = vsel %vm1250, %v1282, 0.0
    %v1323 = vsel %vm1251, %v1283, 0.0
    %v1324 = vsel %vm1252, %v1284, 0.0
    %v1325 = vsel %vm1253, %v1281, 0.0
    %v1326 = vsel %vm1254, %v1282, 0.0
    %v1327 = vsel %vm1255, %v1283, 0.0
    %v1328 = vsel %vm1256, %v1284, 0.0
    %v1329 = vsel %vm1257, %v1281, 0.0
    %v1330 = vsel %vm1258, %v1282, 0.0
    %v1331 = vsel %vm1259, %v1283, 0.0
    %v1332 = vsel %vm1260, %v1284, 0.0
    %v1333 = vsel %vm1261, %v1281, 0.0
    %v1334 = vsel %vm1262, %v1282, 0.0
    %v1335 = vsel %vm1263, %v1283, 0.0
    %v1336 = vsel %vm1264, %v1284, 0.0
    %v1337 = vsel %vm1265, %v1281, 0.0
    %v1338 = vsel %vm1266, %v1282, 0.0
    %v1339 = vsel %vm1267, %v1283, 0.0
    %v1340 = vsel %vm1268, %v1284, 0.0
    %v1341 = vsel %vm1269, %v1281, 0.0
    %v1342 = vsel %vm1270, %v1282, 0.0
    %v1343 = vsel %vm1271, %v1283, 0.0
    %v1344 = vsel %vm1272, %v1284, 0.0
    %v1345 = vsel %vm1273, %v1281, 0.0
    %v1346 = vsel %vm1274, %v1282, 0.0
    %v1347 = vsel %vm1275, %v1283, 0.0
    %v1348 = vsel %vm1276, %v1284, 0.0
    %v1349 = vadd.f32 %v1285, 0.0
    %v1350 = vadd.f32 %v1286, 0.0
    %v1351 = vadd.f32 %v1287, 0.0
    %v1352 = vadd.f32 %v1288, 0.0
    %v1353 = vadd.f32 %v1289, 0.0
    %v1354 = vadd.f32 %v1290, 0.0
    %v1355 = vadd.f32 %v1291, 0.0
    %v1356 = vadd.f32 %v1292, 0.0
    %v1357 = vadd.f32 %v1293, 0.0
    %v1358 = vadd.f32 %v1294, 0.0
    %v1359 = vadd.f32 %v1295, 0.0
    %v1360 = vadd.f32 %v1296, 0.0
    %v1361 = vadd.f32 %v1297, 0.0
    %v1362 = vadd.f32 %v1298, 0.0
    %v1363 = vadd.f32 %v1299, 0.0
    %v1364 = vadd.f32 %v1300, 0.0
    %v1365 = vadd.f32 %v1301, 0.0
    %v1366 = vadd.f32 %v1302, 0.0
    %v1367 = vadd.f32 %v1303, 0.0
    %v1368 = vadd.f32 %v1304, 0.0
    %v1369 = vadd.f32 %v1305, 0.0
    %v1370 = vadd.f32 %v1306, 0.0
    %v1371 = vadd.f32 %v1307, 0.0
    %v1372 = vadd.f32 %v1308, 0.0
    %v1373 = vadd.f32 %v1309, 0.0
    %v1374 = vadd.f32 %v1310, 0.0
    %v1375 = vadd.f32 %v1311, 0.0
    %v1376 = vadd.f32 %v1312, 0.0
    %v1377 = vadd.f32 %v1313, 0.0
    %v1378 = vadd.f32 %v1314, 0.0
    %v1379 = vadd.f32 %v1315, 0.0
    %v1380 = vadd.f32 %v1316, 0.0
    %v1381 = vadd.f32 %v1317, 0.0
    %v1382 = vadd.f32 %v1318, 0.0
    %v1383 = vadd.f32 %v1319, 0.0
    %v1384 = vadd.f32 %v1320, 0.0
    %v1385 = vadd.f32 %v1321, 0.0
    %v1386 = vadd.f32 %v1322, 0.0
    %v1387 = vadd.f32 %v1323, 0.0
    %v1388 = vadd.f32 %v1324, 0.0
    %v1389 = vadd.f32 %v1325, 0.0
    %v1390 = vadd.f32 %v1326, 0.0
    %v1391 = vadd.f32 %v1327, 0.0
    %v1392 = vadd.f32 %v1328, 0.0
    %v1393 = vadd.f32 %v1329, 0.0
    %v1394 = vadd.f32 %v1330, 0.0
    %v1395 = vadd.f32 %v1331, 0.0
    %v1396 = vadd.f32 %v1332, 0.0
    %v1397 = vadd.f32 %v1333, 0.0
    %v1398 = vadd.f32 %v1334, 0.0
    %v1399 = vadd.f32 %v1335, 0.0
    %v1400 = vadd.f32 %v1336, 0.0
    %v1401 = vadd.f32 %v1337, 0.0
    %v1402 = vadd.f32 %v1338, 0.0
    %v1403 = vadd.f32 %v1339, 0.0
    %v1404 = vadd.f32 %v1340, 0.0
    %v1405 = vadd.f32 %v1341, 0.0
    %v1406 = vadd.f32 %v1342, 0.0
    %v1407 = vadd.f32 %v1343, 0.0
    %v1408 = vadd.f32 %v1344, 0.0
    %v1409 = vadd.f32 %v1345, 0.0
    %v1410 = vadd.f32 %v1346, 0.0
    %v1411 = vadd.f32 %v1347, 0.0
    %v1412 = vadd.f32 %v1348, 0.0
    %v1413 = vsel %vm1213, 1e+30, %v764
    %v1414 = vsel %vm1214, 1e+30, %v765
    %v1415 = vsel %vm1215, 1e+30, %v766
    %v1416 = vsel %vm1216, 1e+30, %v767
    %v1417 = vsel %vm1217, 1e+30, %v768
    %v1418 = vsel %vm1218, 1e+30, %v769
    %v1419 = vsel %vm1219, 1e+30, %v770
    %v1420 = vsel %vm1220, 1e+30, %v771
    %v1421 = vsel %vm1221, 1e+30, %v772
    %v1422 = vsel %vm1222, 1e+30, %v773
    %v1423 = vsel %vm1223, 1e+30, %v774
    %v1424 = vsel %vm1224, 1e+30, %v775
    %v1425 = vsel %vm1225, 1e+30, %v776
    %v1426 = vsel %vm1226, 1e+30, %v777
    %v1427 = vsel %vm1227, 1e+30, %v778
    %v1428 = vsel %vm1228, 1e+30, %v779
    %v1429 = vsel %vm1229, 1e+30, %v780
    %v1430 = vsel %vm1230, 1e+30, %v781
    %v1431 = vsel %vm1231, 1e+30, %v782
    %v1432 = vsel %vm1232, 1e+30, %v783
    %v1433 = vsel %vm1233, 1e+30, %v784
    %v1434 = vsel %vm1234, 1e+30, %v785
    %v1435 = vsel %vm1235, 1e+30, %v786
    %v1436 = vsel %vm1236, 1e+30, %v787
    %v1437 = vsel %vm1237, 1e+30, %v788
    %v1438 = vsel %vm1238, 1e+30, %v789
    %v1439 = vsel %vm1239, 1e+30, %v790
    %v1440 = vsel %vm1240, 1e+30, %v791
    %v1441 = vsel %vm1241, 1e+30, %v792
    %v1442 = vsel %vm1242, 1e+30, %v793
    %v1443 = vsel %vm1243, 1e+30, %v794
    %v1444 = vsel %vm1244, 1e+30, %v795
    %v1445 = vsel %vm1245, 1e+30, %v796
    %v1446 = vsel %vm1246, 1e+30, %v797
    %v1447 = vsel %vm1247, 1e+30, %v798
    %v1448 = vsel %vm1248, 1e+30, %v799
    %v1449 = vsel %vm1249, 1e+30, %v800
    %v1450 = vsel %vm1250, 1e+30, %v801
    %v1451 = vsel %vm1251, 1e+30, %v802
    %v1452 = vsel %vm1252, 1e+30, %v803
    %v1453 = vsel %vm1253, 1e+30, %v804
    %v1454 = vsel %vm1254, 1e+30, %v805
    %v1455 = vsel %vm1255, 1e+30, %v806
    %v1456 = vsel %vm1256, 1e+30, %v807
    %v1457 = vsel %vm1257, 1e+30, %v808
    %v1458 = vsel %vm1258, 1e+30, %v809
    %v1459 = vsel %vm1259, 1e+30, %v810
    %v1460 = vsel %vm1260, 1e+30, %v811
    %v1461 = vsel %vm1261, 1e+30, %v812
    %v1462 = vsel %vm1262, 1e+30, %v813
    %v1463 = vsel %vm1263, 1e+30, %v814
    %v1464 = vsel %vm1264, 1e+30, %v815
    %v1465 = vsel %vm1265, 1e+30, %v816
    %v1466 = vsel %vm1266, 1e+30, %v817
    %v1467 = vsel %vm1267, 1e+30, %v818
    %v1468 = vsel %vm1268, 1e+30, %v819
    %v1469 = vsel %vm1269, 1e+30, %v820
    %v1470 = vsel %vm1270, 1e+30, %v821
    %v1471 = vsel %vm1271, 1e+30, %v822
    %v1472 = vsel %vm1272, 1e+30, %v823
    %v1473 = vsel %vm1273, 1e+30, %v824
    %v1474 = vsel %vm1274, 1e+30, %v825
    %v1475 = vsel %vm1275, 1e+30, %v826
    %v1476 = vsel %vm1276, 1e+30, %v827
    %v1477 = vmin.f32 %v1413, %v1417
    %v1478 = vmin.f32 %v1477, %v1421
    %v1479 = vmin.f32 %v1478, %v1425
    %v1480 = vmin.f32 %v1479, %v1429
    %v1481 = vmin.f32 %v1480, %v1433
    %v1482 = vmin.f32 %v1481, %v1437
    %v1483 = vmin.f32 %v1482, %v1441
    %v1484 = vmin.f32 %v1483, %v1445
    %v1485 = vmin.f32 %v1484, %v1449
    %v1486 = vmin.f32 %v1485, %v1453
    %v1487 = vmin.f32 %v1486, %v1457
    %v1488 = vmin.f32 %v1487, %v1461
    %v1489 = vmin.f32 %v1488, %v1465
    %v1490 = vmin.f32 %v1489, %v1469
    %v1491 = vmin.f32 %v1490, %v1473
    %v1492 = vrot.slane %v1491, 4
    %v1493 = vmin.f32 %v1491, %v1492
    %v1494 = vrot.slane %v1493, 2
    %v1495 = vmin.f32 %v1493, %v1494
    %v1496 = vrot.slane %v1495, 1
    %v1497 = vmin.f32 %v1495, %v1496
    %v1498 = vmin.f32 %v1414, %v1418
    %v1499 = vmin.f32 %v1498, %v1422
    %v1500 = vmin.f32 %v1499, %v1426
    %v1501 = vmin.f32 %v1500, %v1430
    %v1502 = vmin.f32 %v1501, %v1434
    %v1503 = vmin.f32 %v1502, %v1438
    %v1504 = vmin.f32 %v1503, %v1442
    %v1505 = vmin.f32 %v1504, %v1446
    %v1506 = vmin.f32 %v1505, %v1450
    %v1507 = vmin.f32 %v1506, %v1454
    %v1508 = vmin.f32 %v1507, %v1458
    %v1509 = vmin.f32 %v1508, %v1462
    %v1510 = vmin.f32 %v1509, %v1466
    %v1511 = vmin.f32 %v1510, %v1470
    %v1512 = vmin.f32 %v1511, %v1474
    %v1513 = vrot.slane %v1512, 4
    %v1514 = vmin.f32 %v1512, %v1513
    %v1515 = vrot.slane %v1514, 2
    %v1516 = vmin.f32 %v1514, %v1515
    %v1517 = vrot.slane %v1516, 1
    %v1518 = vmin.f32 %v1516, %v1517
    %v1519 = vmin.f32 %v1415, %v1419
    %v1520 = vmin.f32 %v1519, %v1423
    %v1521 = vmin.f32 %v1520, %v1427
    %v1522 = vmin.f32 %v1521, %v1431
    %v1523 = vmin.f32 %v1522, %v1435
    %v1524 = vmin.f32 %v1523, %v1439
    %v1525 = vmin.f32 %v1524, %v1443
    %v1526 = vmin.f32 %v1525, %v1447
    %v1527 = vmin.f32 %v1526, %v1451
    %v1528 = vmin.f32 %v1527, %v1455
    %v1529 = vmin.f32 %v1528, %v1459
    %v1530 = vmin.f32 %v1529, %v1463
    %v1531 = vmin.f32 %v1530, %v1467
    %v1532 = vmin.f32 %v1531, %v1471
    %v1533 = vmin.f32 %v1532, %v1475
    %v1534 = vrot.slane %v1533, 4
    %v1535 = vmin.f32 %v1533, %v1534
    %v1536 = vrot.slane %v1535, 2
    %v1537 = vmin.f32 %v1535, %v1536
    %v1538 = vrot.slane %v1537, 1
    %v1539 = vmin.f32 %v1537, %v1538
    %v1540 = vmin.f32 %v1416, %v1420
    %v1541 = vmin.f32 %v1540, %v1424
    %v1542 = vmin.f32 %v1541, %v1428
    %v1543 = vmin.f32 %v1542, %v1432
    %v1544 = vmin.f32 %v1543, %v1436
    %v1545 = vmin.f32 %v1544, %v1440
    %v1546 = vmin.f32 %v1545, %v1444
    %v1547 = vmin.f32 %v1546, %v1448
    %v1548 = vmin.f32 %v1547, %v1452
    %v1549 = vmin.f32 %v1548, %v1456
    %v1550 = vmin.f32 %v1549, %v1460
    %v1551 = vmin.f32 %v1550, %v1464
    %v1552 = vmin.f32 %v1551, %v1468
    %v1553 = vmin.f32 %v1552, %v1472
    %v1554 = vmin.f32 %v1553, %v1476
    %v1555 = vrot.slane %v1554, 4
    %v1556 = vmin.f32 %v1554, %v1555
    %v1557 = vrot.slane %v1556, 2
    %v1558 = vmin.f32 %v1556, %v1557
    %v1559 = vrot.slane %v1558, 1
    %v1560 = vmin.f32 %v1558, %v1559
    %vm1561 = vcmp.le.f32.partialorder %v1413, %v1497
    %vm1562 = vcmp.le.f32.partialorder %v1414, %v1518
    %vm1563 = vcmp.le.f32.partialorder %v1415, %v1539
    %vm1564 = vcmp.le.f32.partialorder %v1416, %v1560
    %vm1565 = vcmp.le.f32.partialorder %v1417, %v1497
    %vm1566 = vcmp.le.f32.partialorder %v1418, %v1518
    %vm1567 = vcmp.le.f32.partialorder %v1419, %v1539
    %vm1568 = vcmp.le.f32.partialorder %v1420, %v1560
    %vm1569 = vcmp.le.f32.partialorder %v1421, %v1497
    %vm1570 = vcmp.le.f32.partialorder %v1422, %v1518
    %vm1571 = vcmp.le.f32.partialorder %v1423, %v1539
    %vm1572 = vcmp.le.f32.partialorder %v1424, %v1560
    %vm1573 = vcmp.le.f32.partialorder %v1425, %v1497
    %vm1574 = vcmp.le.f32.partialorder %v1426, %v1518
    %vm1575 = vcmp.le.f32.partialorder %v1427, %v1539
    %vm1576 = vcmp.le.f32.partialorder %v1428, %v1560
    %vm1577 = vcmp.le.f32.partialorder %v1429, %v1497
    %vm1578 = vcmp.le.f32.partialorder %v1430, %v1518
    %vm1579 = vcmp.le.f32.partialorder %v1431, %v1539
    %vm1580 = vcmp.le.f32.partialorder %v1432, %v1560
    %vm1581 = vcmp.le.f32.partialorder %v1433, %v1497
    %vm1582 = vcmp.le.f32.partialorder %v1434, %v1518
    %vm1583 = vcmp.le.f32.partialorder %v1435, %v1539
    %vm1584 = vcmp.le.f32.partialorder %v1436, %v1560
    %vm1585 = vcmp.le.f32.partialorder %v1437, %v1497
    %vm1586 = vcmp.le.f32.partialorder %v1438, %v1518
    %vm1587 = vcmp.le.f32.partialorder %v1439, %v1539
    %vm1588 = vcmp.le.f32.partialorder %v1440, %v1560
    %vm1589 = vcmp.le.f32.partialorder %v1441, %v1497
    %vm1590 = vcmp.le.f32.partialorder %v1442, %v1518
    %vm1591 = vcmp.le.f32.partialorder %v1443, %v1539
    %vm1592 = vcmp.le.f32.partialorder %v1444, %v1560
    %vm1593 = vcmp.le.f32.partialorder %v1445, %v1497
    %vm1594 = vcmp.le.f32.partialorder %v1446, %v1518
    %vm1595 = vcmp.le.f32.partialorder %v1447, %v1539
    %vm1596 = vcmp.le.f32.partialorder %v1448, %v1560
    %vm1597 = vcmp.le.f32.partialorder %v1449, %v1497
    %vm1598 = vcmp.le.f32.partialorder %v1450, %v1518
    %vm1599 = vcmp.le.f32.partialorder %v1451, %v1539
    %vm1600 = vcmp.le.f32.partialorder %v1452, %v1560
    %vm1601 = vcmp.le.f32.partialorder %v1453, %v1497
    %vm1602 = vcmp.le.f32.partialorder %v1454, %v1518
    %vm1603 = vcmp.le.f32.partialorder %v1455, %v1539
    %vm1604 = vcmp.le.f32.partialorder %v1456, %v1560
    %vm1605 = vcmp.le.f32.partialorder %v1457, %v1497
    %vm1606 = vcmp.le.f32.partialorder %v1458, %v1518
    %vm1607 = vcmp.le.f32.partialorder %v1459, %v1539
    %vm1608 = vcmp.le.f32.partialorder %v1460, %v1560
    %vm1609 = vcmp.le.f32.partialorder %v1461, %v1497
    %vm1610 = vcmp.le.f32.partialorder %v1462, %v1518
    %vm1611 = vcmp.le.f32.partialorder %v1463, %v1539
    %vm1612 = vcmp.le.f32.partialorder %v1464, %v1560
    %vm1613 = vcmp.le.f32.partialorder %v1465, %v1497
    %vm1614 = vcmp.le.f32.partialorder %v1466, %v1518
    %vm1615 = vcmp.le.f32.partialorder %v1467, %v1539
    %vm1616 = vcmp.le.f32.partialorder %v1468, %v1560
    %vm1617 = vcmp.le.f32.partialorder %v1469, %v1497
    %vm1618 = vcmp.le.f32.partialorder %v1470, %v1518
    %vm1619 = vcmp.le.f32.partialorder %v1471, %v1539
    %vm1620 = vcmp.le.f32.partialorder %v1472, %v1560
    %vm1621 = vcmp.le.f32.partialorder %v1473, %v1497
    %vm1622 = vcmp.le.f32.partialorder %v1474, %v1518
    %vm1623 = vcmp.le.f32.partialorder %v1475, %v1539
    %vm1624 = vcmp.le.f32.partialorder %v1476, %v1560
    %v1625 = vsel %vm1561, %v829, 128
    %v1626 = vsel %vm1562, %v829, 128
    %v1627 = vsel %vm1563, %v829, 128
    %v1628 = vsel %vm1564, %v829, 128
    %v1629 = vsel %vm1565, %v830, 128
    %v1630 = vsel %vm1566, %v830, 128
    %v1631 = vsel %vm1567, %v830, 128
    %v1632 = vsel %vm1568, %v830, 128
    %v1633 = vsel %vm1569, %v831, 128
    %v1634 = vsel %vm1570, %v831, 128
    %v1635 = vsel %vm1571, %v831, 128
    %v1636 = vsel %vm1572, %v831, 128
    %v1637 = vsel %vm1573, %v832, 128
    %v1638 = vsel %vm1574, %v832, 128
    %v1639 = vsel %vm1575, %v832, 128
    %v1640 = vsel %vm1576, %v832, 128
    %v1641 = vsel %vm1577, %v833, 128
    %v1642 = vsel %vm1578, %v833, 128
    %v1643 = vsel %vm1579, %v833, 128
    %v1644 = vsel %vm1580, %v833, 128
    %v1645 = vsel %vm1581, %v834, 128
    %v1646 = vsel %vm1582, %v834, 128
    %v1647 = vsel %vm1583, %v834, 128
    %v1648 = vsel %vm1584, %v834, 128
    %v1649 = vsel %vm1585, %v835, 128
    %v1650 = vsel %vm1586, %v835, 128
    %v1651 = vsel %vm1587, %v835, 128
    %v1652 = vsel %vm1588, %v835, 128
    %v1653 = vsel %vm1589, %v836, 128
    %v1654 = vsel %vm1590, %v836, 128
    %v1655 = vsel %vm1591, %v836, 128
    %v1656 = vsel %vm1592, %v836, 128
    %v1657 = vsel %vm1593, %v837, 128
    %v1658 = vsel %vm1594, %v837, 128
    %v1659 = vsel %vm1595, %v837, 128
    %v1660 = vsel %vm1596, %v837, 128
    %v1661 = vsel %vm1597, %v838, 128
    %v1662 = vsel %vm1598, %v838, 128
    %v1663 = vsel %vm1599, %v838, 128
    %v1664 = vsel %vm1600, %v838, 128
    %v1665 = vsel %vm1601, %v839, 128
    %v1666 = vsel %vm1602, %v839, 128
    %v1667 = vsel %vm1603, %v839, 128
    %v1668 = vsel %vm1604, %v839, 128
    %v1669 = vsel %vm1605, %v840, 128
    %v1670 = vsel %vm1606, %v840, 128
    %v1671 = vsel %vm1607, %v840, 128
    %v1672 = vsel %vm1608, %v840, 128
    %v1673 = vsel %vm1609, %v841, 128
    %v1674 = vsel %vm1610, %v841, 128
    %v1675 = vsel %vm1611, %v841, 128
    %v1676 = vsel %vm1612, %v841, 128
    %v1677 = vsel %vm1613, %v842, 128
    %v1678 = vsel %vm1614, %v842, 128
    %v1679 = vsel %vm1615, %v842, 128
    %v1680 = vsel %vm1616, %v842, 128
    %v1681 = vsel %vm1617, %v843, 128
    %v1682 = vsel %vm1618, %v843, 128
    %v1683 = vsel %vm1619, %v843, 128
    %v1684 = vsel %vm1620, %v843, 128
    %v1685 = vsel %vm1621, %v844, 128
    %v1686 = vsel %vm1622, %v844, 128
    %v1687 = vsel %vm1623, %v844, 128
    %v1688 = vsel %vm1624, %v844, 128
    %vm1689 = vcmp.lt.s32.totalorder %v1625, %v1629
    %v1690 = vsel %vm1689, %v1625, %v1629
    %vm1691 = vcmp.lt.s32.totalorder %v1690, %v1633
    %v1692 = vsel %vm1691, %v1690, %v1633
    %vm1693 = vcmp.lt.s32.totalorder %v1692, %v1637
    %v1694 = vsel %vm1693, %v1692, %v1637
    %vm1695 = vcmp.lt.s32.totalorder %v1694, %v1641
    %v1696 = vsel %vm1695, %v1694, %v1641
    %vm1697 = vcmp.lt.s32.totalorder %v1696, %v1645
    %v1698 = vsel %vm1697, %v1696, %v1645
    %vm1699 = vcmp.lt.s32.totalorder %v1698, %v1649
    %v1700 = vsel %vm1699, %v1698, %v1649
    %vm1701 = vcmp.lt.s32.totalorder %v1700, %v1653
    %v1702 = vsel %vm1701, %v1700, %v1653
    %vm1703 = vcmp.lt.s32.totalorder %v1702, %v1657
    %v1704 = vsel %vm1703, %v1702, %v1657
    %vm1705 = vcmp.lt.s32.totalorder %v1704, %v1661
    %v1706 = vsel %vm1705, %v1704, %v1661
    %vm1707 = vcmp.lt.s32.totalorder %v1706, %v1665
    %v1708 = vsel %vm1707, %v1706, %v1665
    %vm1709 = vcmp.lt.s32.totalorder %v1708, %v1669
    %v1710 = vsel %vm1709, %v1708, %v1669
    %vm1711 = vcmp.lt.s32.totalorder %v1710, %v1673
    %v1712 = vsel %vm1711, %v1710, %v1673
    %vm1713 = vcmp.lt.s32.totalorder %v1712, %v1677
    %v1714 = vsel %vm1713, %v1712, %v1677
    %vm1715 = vcmp.lt.s32.totalorder %v1714, %v1681
    %v1716 = vsel %vm1715, %v1714, %v1681
    %vm1717 = vcmp.lt.s32.totalorder %v1716, %v1685
    %v1718 = vsel %vm1717, %v1716, %v1685
    %v1719 = vrot.slane %v1718, 4
    %vm1720 = vcmp.lt.s32.totalorder %v1718, %v1719
    %v1721 = vsel %vm1720, %v1718, %v1719
    %v1722 = vrot.slane %v1721, 2
    %vm1723 = vcmp.lt.s32.totalorder %v1721, %v1722
    %v1724 = vsel %vm1723, %v1721, %v1722
    %v1725 = vrot.slane %v1724, 1
    %vm1726 = vcmp.lt.s32.totalorder %v1724, %v1725
    %v1727 = vsel %vm1726, %v1724, %v1725
    %vm1728 = vcmp.lt.s32.totalorder %v1626, %v1630
    %v1729 = vsel %vm1728, %v1626, %v1630
    %vm1730 = vcmp.lt.s32.totalorder %v1729, %v1634
    %v1731 = vsel %vm1730, %v1729, %v1634
    %vm1732 = vcmp.lt.s32.totalorder %v1731, %v1638
    %v1733 = vsel %vm1732, %v1731, %v1638
    %vm1734 = vcmp.lt.s32.totalorder %v1733, %v1642
    %v1735 = vsel %vm1734, %v1733, %v1642
    %vm1736 = vcmp.lt.s32.totalorder %v1735, %v1646
    %v1737 = vsel %vm1736, %v1735, %v1646
    %vm1738 = vcmp.lt.s32.totalorder %v1737, %v1650
    %v1739 = vsel %vm1738, %v1737, %v1650
    %vm1740 = vcmp.lt.s32.totalorder %v1739, %v1654
    %v1741 = vsel %vm1740, %v1739, %v1654
    %vm1742 = vcmp.lt.s32.totalorder %v1741, %v1658
    %v1743 = vsel %vm1742, %v1741, %v1658
    %vm1744 = vcmp.lt.s32.totalorder %v1743, %v1662
    %v1745 = vsel %vm1744, %v1743, %v1662
    %vm1746 = vcmp.lt.s32.totalorder %v1745, %v1666
    %v1747 = vsel %vm1746, %v1745, %v1666
    %vm1748 = vcmp.lt.s32.totalorder %v1747, %v1670
    %v1749 = vsel %vm1748, %v1747, %v1670
    %vm1750 = vcmp.lt.s32.totalorder %v1749, %v1674
    %v1751 = vsel %vm1750, %v1749, %v1674
    %vm1752 = vcmp.lt.s32.totalorder %v1751, %v1678
    %v1753 = vsel %vm1752, %v1751, %v1678
    %vm1754 = vcmp.lt.s32.totalorder %v1753, %v1682
    %v1755 = vsel %vm1754, %v1753, %v1682
    %vm1756 = vcmp.lt.s32.totalorder %v1755, %v1686
    %v1757 = vsel %vm1756, %v1755, %v1686
    %v1758 = vrot.slane %v1757, 4
    %vm1759 = vcmp.lt.s32.totalorder %v1757, %v1758
    %v1760 = vsel %vm1759, %v1757, %v1758
    %v1761 = vrot.slane %v1760, 2
    %vm1762 = vcmp.lt.s32.totalorder %v1760, %v1761
    %v1763 = vsel %vm1762, %v1760, %v1761
    %v1764 = vrot.slane %v1763, 1
    %vm1765 = vcmp.lt.s32.totalorder %v1763, %v1764
    %v1766 = vsel %vm1765, %v1763, %v1764
    %vm1767 = vcmp.lt.s32.totalorder %v1627, %v1631
    %v1768 = vsel %vm1767, %v1627, %v1631
    %vm1769 = vcmp.lt.s32.totalorder %v1768, %v1635
    %v1770 = vsel %vm1769, %v1768, %v1635
    %vm1771 = vcmp.lt.s32.totalorder %v1770, %v1639
    %v1772 = vsel %vm1771, %v1770, %v1639
    %vm1773 = vcmp.lt.s32.totalorder %v1772, %v1643
    %v1774 = vsel %vm1773, %v1772, %v1643
    %vm1775 = vcmp.lt.s32.totalorder %v1774, %v1647
    %v1776 = vsel %vm1775, %v1774, %v1647
    %vm1777 = vcmp.lt.s32.totalorder %v1776, %v1651
    %v1778 = vsel %vm1777, %v1776, %v1651
    %vm1779 = vcmp.lt.s32.totalorder %v1778, %v1655
    %v1780 = vsel %vm1779, %v1778, %v1655
    %vm1781 = vcmp.lt.s32.totalorder %v1780, %v1659
    %v1782 = vsel %vm1781, %v1780, %v1659
    %vm1783 = vcmp.lt.s32.totalorder %v1782, %v1663
    %v1784 = vsel %vm1783, %v1782, %v1663
    %vm1785 = vcmp.lt.s32.totalorder %v1784, %v1667
    %v1786 = vsel %vm1785, %v1784, %v1667
    %vm1787 = vcmp.lt.s32.totalorder %v1786, %v1671
    %v1788 = vsel %vm1787, %v1786, %v1671
    %vm1789 = vcmp.lt.s32.totalorder %v1788, %v1675
    %v1790 = vsel %vm1789, %v1788, %v1675
    %vm1791 = vcmp.lt.s32.totalorder %v1790, %v1679
    %v1792 = vsel %vm1791, %v1790, %v1679
    %vm1793 = vcmp.lt.s32.totalorder %v1792, %v1683
    %v1794 = vsel %vm1793, %v1792, %v1683
    %vm1795 = vcmp.lt.s32.totalorder %v1794, %v1687
    %v1796 = vsel %vm1795, %v1794, %v1687
    %v1797 = vrot.slane %v1796, 4
    %vm1798 = vcmp.lt.s32.totalorder %v1796, %v1797
    %v1799 = vsel %vm1798, %v1796, %v1797
    %v1800 = vrot.slane %v1799, 2
    %vm1801 = vcmp.lt.s32.totalorder %v1799, %v1800
    %v1802 = vsel %vm1801, %v1799, %v1800
    %v1803 = vrot.slane %v1802, 1
    %vm1804 = vcmp.lt.s32.totalorder %v1802, %v1803
    %v1805 = vsel %vm1804, %v1802, %v1803
    %vm1806 = vcmp.lt.s32.totalorder %v1628, %v1632
    %v1807 = vsel %vm1806, %v1628, %v1632
    %vm1808 = vcmp.lt.s32.totalorder %v1807, %v1636
    %v1809 = vsel %vm1808, %v1807, %v1636
    %vm1810 = vcmp.lt.s32.totalorder %v1809, %v1640
    %v1811 = vsel %vm1810, %v1809, %v1640
    %vm1812 = vcmp.lt.s32.totalorder %v1811, %v1644
    %v1813 = vsel %vm1812, %v1811, %v1644
    %vm1814 = vcmp.lt.s32.totalorder %v1813, %v1648
    %v1815 = vsel %vm1814, %v1813, %v1648
    %vm1816 = vcmp.lt.s32.totalorder %v1815, %v1652
    %v1817 = vsel %vm1816, %v1815, %v1652
    %vm1818 = vcmp.lt.s32.totalorder %v1817, %v1656
    %v1819 = vsel %vm1818, %v1817, %v1656
    %vm1820 = vcmp.lt.s32.totalorder %v1819, %v1660
    %v1821 = vsel %vm1820, %v1819, %v1660
    %vm1822 = vcmp.lt.s32.totalorder %v1821, %v1664
    %v1823 = vsel %vm1822, %v1821, %v1664
    %vm1824 = vcmp.lt.s32.totalorder %v1823, %v1668
    %v1825 = vsel %vm1824, %v1823, %v1668
    %vm1826 = vcmp.lt.s32.totalorder %v1825, %v1672
    %v1827 = vsel %vm1826, %v1825, %v1672
    %vm1828 = vcmp.lt.s32.totalorder %v1827, %v1676
    %v1829 = vsel %vm1828, %v1827, %v1676
    %vm1830 = vcmp.lt.s32.totalorder %v1829, %v1680
    %v1831 = vsel %vm1830, %v1829, %v1680
    %vm1832 = vcmp.lt.s32.totalorder %v1831, %v1684
    %v1833 = vsel %vm1832, %v1831, %v1684
    %vm1834 = vcmp.lt.s32.totalorder %v1833, %v1688
    %v1835 = vsel %vm1834, %v1833, %v1688
    %v1836 = vrot.slane %v1835, 4
    %vm1837 = vcmp.lt.s32.totalorder %v1835, %v1836
    %v1838 = vsel %vm1837, %v1835, %v1836
    %v1839 = vrot.slane %v1838, 2
    %vm1840 = vcmp.lt.s32.totalorder %v1838, %v1839
    %v1841 = vsel %vm1840, %v1838, %v1839
    %v1842 = vrot.slane %v1841, 1
    %vm1843 = vcmp.lt.s32.totalorder %v1841, %v1842
    %v1844 = vsel %vm1843, %v1841, %v1842
    %vm1845 = vcmp.eq.s32.totalorder %v829, %v1727
    %vm1846 = vcmp.eq.s32.totalorder %v829, %v1766
    %vm1847 = vcmp.eq.s32.totalorder %v829, %v1805
    %vm1848 = vcmp.eq.s32.totalorder %v829, %v1844
    %vm1849 = vcmp.eq.s32.totalorder %v830, %v1727
    %vm1850 = vcmp.eq.s32.totalorder %v830, %v1766
    %vm1851 = vcmp.eq.s32.totalorder %v830, %v1805
    %vm1852 = vcmp.eq.s32.totalorder %v830, %v1844
    %vm1853 = vcmp.eq.s32.totalorder %v831, %v1727
    %vm1854 = vcmp.eq.s32.totalorder %v831, %v1766
    %vm1855 = vcmp.eq.s32.totalorder %v831, %v1805
    %vm1856 = vcmp.eq.s32.totalorder %v831, %v1844
    %vm1857 = vcmp.eq.s32.totalorder %v832, %v1727
    %vm1858 = vcmp.eq.s32.totalorder %v832, %v1766
    %vm1859 = vcmp.eq.s32.totalorder %v832, %v1805
    %vm1860 = vcmp.eq.s32.totalorder %v832, %v1844
    %vm1861 = vcmp.eq.s32.totalorder %v833, %v1727
    %vm1862 = vcmp.eq.s32.totalorder %v833, %v1766
    %vm1863 = vcmp.eq.s32.totalorder %v833, %v1805
    %vm1864 = vcmp.eq.s32.totalorder %v833, %v1844
    %vm1865 = vcmp.eq.s32.totalorder %v834, %v1727
    %vm1866 = vcmp.eq.s32.totalorder %v834, %v1766
    %vm1867 = vcmp.eq.s32.totalorder %v834, %v1805
    %vm1868 = vcmp.eq.s32.totalorder %v834, %v1844
    %vm1869 = vcmp.eq.s32.totalorder %v835, %v1727
    %vm1870 = vcmp.eq.s32.totalorder %v835, %v1766
    %vm1871 = vcmp.eq.s32.totalorder %v835, %v1805
    %vm1872 = vcmp.eq.s32.totalorder %v835, %v1844
    %vm1873 = vcmp.eq.s32.totalorder %v836, %v1727
    %vm1874 = vcmp.eq.s32.totalorder %v836, %v1766
    %vm1875 = vcmp.eq.s32.totalorder %v836, %v1805
    %vm1876 = vcmp.eq.s32.totalorder %v836, %v1844
    %vm1877 = vcmp.eq.s32.totalorder %v837, %v1727
    %vm1878 = vcmp.eq.s32.totalorder %v837, %v1766
    %vm1879 = vcmp.eq.s32.totalorder %v837, %v1805
    %vm1880 = vcmp.eq.s32.totalorder %v837, %v1844
    %vm1881 = vcmp.eq.s32.totalorder %v838, %v1727
    %vm1882 = vcmp.eq.s32.totalorder %v838, %v1766
    %vm1883 = vcmp.eq.s32.totalorder %v838, %v1805
    %vm1884 = vcmp.eq.s32.totalorder %v838, %v1844
    %vm1885 = vcmp.eq.s32.totalorder %v839, %v1727
    %vm1886 = vcmp.eq.s32.totalorder %v839, %v1766
    %vm1887 = vcmp.eq.s32.totalorder %v839, %v1805
    %vm1888 = vcmp.eq.s32.totalorder %v839, %v1844
    %vm1889 = vcmp.eq.s32.totalorder %v840, %v1727
    %vm1890 = vcmp.eq.s32.totalorder %v840, %v1766
    %vm1891 = vcmp.eq.s32.totalorder %v840, %v1805
    %vm1892 = vcmp.eq.s32.totalorder %v840, %v1844
    %vm1893 = vcmp.eq.s32.totalorder %v841, %v1727
    %vm1894 = vcmp.eq.s32.totalorder %v841, %v1766
    %vm1895 = vcmp.eq.s32.totalorder %v841, %v1805
    %vm1896 = vcmp.eq.s32.totalorder %v841, %v1844
    %vm1897 = vcmp.eq.s32.totalorder %v842, %v1727
    %vm1898 = vcmp.eq.s32.totalorder %v842, %v1766
    %vm1899 = vcmp.eq.s32.totalorder %v842, %v1805
    %vm1900 = vcmp.eq.s32.totalorder %v842, %v1844
    %vm1901 = vcmp.eq.s32.totalorder %v843, %v1727
    %vm1902 = vcmp.eq.s32.totalorder %v843, %v1766
    %vm1903 = vcmp.eq.s32.totalorder %v843, %v1805
    %vm1904 = vcmp.eq.s32.totalorder %v843, %v1844
    %vm1905 = vcmp.eq.s32.totalorder %v844, %v1727
    %vm1906 = vcmp.eq.s32.totalorder %v844, %v1766
    %vm1907 = vcmp.eq.s32.totalorder %v844, %v1805
    %vm1908 = vcmp.eq.s32.totalorder %v844, %v1844
    %v1909 = vmax.f32 %v1497, 1e-16
    %v1910 = vmax.f32 %v1518, 1e-16
    %v1911 = vmax.f32 %v1539, 1e-16
    %v1912 = vmax.f32 %v1560, 1e-16
    %v1913 = vrcp.pop %v1909
    %v1914 = vrcp.pop %v1910
    %v1915 = vrcp.pop %v1911
    %v1916 = vrcp.pop %v1912
    %v1917 = vsel %vm1845, %v1913, 0.0
    %v1918 = vsel %vm1846, %v1914, 0.0
    %v1919 = vsel %vm1847, %v1915, 0.0
    %v1920 = vsel %vm1848, %v1916, 0.0
    %v1921 = vsel %vm1849, %v1913, 0.0
    %v1922 = vsel %vm1850, %v1914, 0.0
    %v1923 = vsel %vm1851, %v1915, 0.0
    %v1924 = vsel %vm1852, %v1916, 0.0
    %v1925 = vsel %vm1853, %v1913, 0.0
    %v1926 = vsel %vm1854, %v1914, 0.0
    %v1927 = vsel %vm1855, %v1915, 0.0
    %v1928 = vsel %vm1856, %v1916, 0.0
    %v1929 = vsel %vm1857, %v1913, 0.0
    %v1930 = vsel %vm1858, %v1914, 0.0
    %v1931 = vsel %vm1859, %v1915, 0.0
    %v1932 = vsel %vm1860, %v1916, 0.0
    %v1933 = vsel %vm1861, %v1913, 0.0
    %v1934 = vsel %vm1862, %v1914, 0.0
    %v1935 = vsel %vm1863, %v1915, 0.0
    %v1936 = vsel %vm1864, %v1916, 0.0
    %v1937 = vsel %vm1865, %v1913, 0.0
    %v1938 = vsel %vm1866, %v1914, 0.0
    %v1939 = vsel %vm1867, %v1915, 0.0
    %v1940 = vsel %vm1868, %v1916, 0.0
    %v1941 = vsel %vm1869, %v1913, 0.0
    %v1942 = vsel %vm1870, %v1914, 0.0
    %v1943 = vsel %vm1871, %v1915, 0.0
    %v1944 = vsel %vm1872, %v1916, 0.0
    %v1945 = vsel %vm1873, %v1913, 0.0
    %v1946 = vsel %vm1874, %v1914, 0.0
    %v1947 = vsel %vm1875, %v1915, 0.0
    %v1948 = vsel %vm1876, %v1916, 0.0
    %v1949 = vsel %vm1877, %v1913, 0.0
    %v1950 = vsel %vm1878, %v1914, 0.0
    %v1951 = vsel %vm1879, %v1915, 0.0
    %v1952 = vsel %vm1880, %v1916, 0.0
    %v1953 = vsel %vm1881, %v1913, 0.0
    %v1954 = vsel %vm1882, %v1914, 0.0
    %v1955 = vsel %vm1883, %v1915, 0.0
    %v1956 = vsel %vm1884, %v1916, 0.0
    %v1957 = vsel %vm1885, %v1913, 0.0
    %v1958 = vsel %vm1886, %v1914, 0.0
    %v1959 = vsel %vm1887, %v1915, 0.0
    %v1960 = vsel %vm1888, %v1916, 0.0
    %v1961 = vsel %vm1889, %v1913, 0.0
    %v1962 = vsel %vm1890, %v1914, 0.0
    %v1963 = vsel %vm1891, %v1915, 0.0
    %v1964 = vsel %vm1892, %v1916, 0.0
    %v1965 = vsel %vm1893, %v1913, 0.0
    %v1966 = vsel %vm1894, %v1914, 0.0
    %v1967 = vsel %vm1895, %v1915, 0.0
    %v1968 = vsel %vm1896, %v1916, 0.0
    %v1969 = vsel %vm1897, %v1913, 0.0
    %v1970 = vsel %vm1898, %v1914, 0.0
    %v1971 = vsel %vm1899, %v1915, 0.0
    %v1972 = vsel %vm1900, %v1916, 0.0
    %v1973 = vsel %vm1901, %v1913, 0.0
    %v1974 = vsel %vm1902, %v1914, 0.0
    %v1975 = vsel %vm1903, %v1915, 0.0
    %v1976 = vsel %vm1904, %v1916, 0.0
    %v1977 = vsel %vm1905, %v1913, 0.0
    %v1978 = vsel %vm1906, %v1914, 0.0
    %v1979 = vsel %vm1907, %v1915, 0.0
    %v1980 = vsel %vm1908, %v1916, 0.0
    %v1981 = vadd.f32 %v1349, %v1917
    %v1982 = vadd.f32 %v1350, %v1918
    %v1983 = vadd.f32 %v1351, %v1919
    %v1984 = vadd.f32 %v1352, %v1920
    %v1985 = vadd.f32 %v1353, %v1921
    %v1986 = vadd.f32 %v1354, %v1922
    %v1987 = vadd.f32 %v1355, %v1923
    %v1988 = vadd.f32 %v1356, %v1924
    %v1989 = vadd.f32 %v1357, %v1925
    %v1990 = vadd.f32 %v1358, %v1926
    %v1991 = vadd.f32 %v1359, %v1927
    %v1992 = vadd.f32 %v1360, %v1928
    %v1993 = vadd.f32 %v1361, %v1929
    %v1994 = vadd.f32 %v1362, %v1930
    %v1995 = vadd.f32 %v1363, %v1931
    %v1996 = vadd.f32 %v1364, %v1932
    %v1997 = vadd.f32 %v1365, %v1933
    %v1998 = vadd.f32 %v1366, %v1934
    %v1999 = vadd.f32 %v1367, %v1935
    %v2000 = vadd.f32 %v1368, %v1936
    %v2001 = vadd.f32 %v1369, %v1937
    %v2002 = vadd.f32 %v1370, %v1938
    %v2003 = vadd.f32 %v1371, %v1939
    %v2004 = vadd.f32 %v1372, %v1940
    %v2005 = vadd.f32 %v1373, %v1941
    %v2006 = vadd.f32 %v1374, %v1942
    %v2007 = vadd.f32 %v1375, %v1943
    %v2008 = vadd.f32 %v1376, %v1944
    %v2009 = vadd.f32 %v1377, %v1945
    %v2010 = vadd.f32 %v1378, %v1946
    %v2011 = vadd.f32 %v1379, %v1947
    %v2012 = vadd.f32 %v1380, %v1948
    %v2013 = vadd.f32 %v1381, %v1949
    %v2014 = vadd.f32 %v1382, %v1950
    %v2015 = vadd.f32 %v1383, %v1951
    %v2016 = vadd.f32 %v1384, %v1952
    %v2017 = vadd.f32 %v1385, %v1953
    %v2018 = vadd.f32 %v1386, %v1954
    %v2019 = vadd.f32 %v1387, %v1955
    %v2020 = vadd.f32 %v1388, %v1956
    %v2021 = vadd.f32 %v1389, %v1957
    %v2022 = vadd.f32 %v1390, %v1958
    %v2023 = vadd.f32 %v1391, %v1959
    %v2024 = vadd.f32 %v1392, %v1960
    %v2025 = vadd.f32 %v1393, %v1961
    %v2026 = vadd.f32 %v1394, %v1962
    %v2027 = vadd.f32 %v1395, %v1963
    %v2028 = vadd.f32 %v1396, %v1964
    %v2029 = vadd.f32 %v1397, %v1965
    %v2030 = vadd.f32 %v1398, %v1966
    %v2031 = vadd.f32 %v1399, %v1967
    %v2032 = vadd.f32 %v1400, %v1968
    %v2033 = vadd.f32 %v1401, %v1969
    %v2034 = vadd.f32 %v1402, %v1970
    %v2035 = vadd.f32 %v1403, %v1971
    %v2036 = vadd.f32 %v1404, %v1972
    %v2037 = vadd.f32 %v1405, %v1973
    %v2038 = vadd.f32 %v1406, %v1974
    %v2039 = vadd.f32 %v1407, %v1975
    %v2040 = vadd.f32 %v1408, %v1976
    %v2041 = vadd.f32 %v1409, %v1977
    %v2042 = vadd.f32 %v1410, %v1978
    %v2043 = vadd.f32 %v1411, %v1979
    %v2044 = vadd.f32 %v1412, %v1980
    %v2045 = vsel %vm1845, 1e+30, %v1413
    %v2046 = vsel %vm1846, 1e+30, %v1414
    %v2047 = vsel %vm1847, 1e+30, %v1415
    %v2048 = vsel %vm1848, 1e+30, %v1416
    %v2049 = vsel %vm1849, 1e+30, %v1417
    %v2050 = vsel %vm1850, 1e+30, %v1418
    %v2051 = vsel %vm1851, 1e+30, %v1419
    %v2052 = vsel %vm1852, 1e+30, %v1420
    %v2053 = vsel %vm1853, 1e+30, %v1421
    %v2054 = vsel %vm1854, 1e+30, %v1422
    %v2055 = vsel %vm1855, 1e+30, %v1423
    %v2056 = vsel %vm1856, 1e+30, %v1424
    %v2057 = vsel %vm1857, 1e+30, %v1425
    %v2058 = vsel %vm1858, 1e+30, %v1426
    %v2059 = vsel %vm1859, 1e+30, %v1427
    %v2060 = vsel %vm1860, 1e+30, %v1428
    %v2061 = vsel %vm1861, 1e+30, %v1429
    %v2062 = vsel %vm1862, 1e+30, %v1430
    %v2063 = vsel %vm1863, 1e+30, %v1431
    %v2064 = vsel %vm1864, 1e+30, %v1432
    %v2065 = vsel %vm1865, 1e+30, %v1433
    %v2066 = vsel %vm1866, 1e+30, %v1434
    %v2067 = vsel %vm1867, 1e+30, %v1435
    %v2068 = vsel %vm1868, 1e+30, %v1436
    %v2069 = vsel %vm1869, 1e+30, %v1437
    %v2070 = vsel %vm1870, 1e+30, %v1438
    %v2071 = vsel %vm1871, 1e+30, %v1439
    %v2072 = vsel %vm1872, 1e+30, %v1440
    %v2073 = vsel %vm1873, 1e+30, %v1441
    %v2074 = vsel %vm1874, 1e+30, %v1442
    %v2075 = vsel %vm1875, 1e+30, %v1443
    %v2076 = vsel %vm1876, 1e+30, %v1444
    %v2077 = vsel %vm1877, 1e+30, %v1445
    %v2078 = vsel %vm1878, 1e+30, %v1446
    %v2079 = vsel %vm1879, 1e+30, %v1447
    %v2080 = vsel %vm1880, 1e+30, %v1448
    %v2081 = vsel %vm1881, 1e+30, %v1449
    %v2082 = vsel %vm1882, 1e+30, %v1450
    %v2083 = vsel %vm1883, 1e+30, %v1451
    %v2084 = vsel %vm1884, 1e+30, %v1452
    %v2085 = vsel %vm1885, 1e+30, %v1453
    %v2086 = vsel %vm1886, 1e+30, %v1454
    %v2087 = vsel %vm1887, 1e+30, %v1455
    %v2088 = vsel %vm1888, 1e+30, %v1456
    %v2089 = vsel %vm1889, 1e+30, %v1457
    %v2090 = vsel %vm1890, 1e+30, %v1458
    %v2091 = vsel %vm1891, 1e+30, %v1459
    %v2092 = vsel %vm1892, 1e+30, %v1460
    %v2093 = vsel %vm1893, 1e+30, %v1461
    %v2094 = vsel %vm1894, 1e+30, %v1462
    %v2095 = vsel %vm1895, 1e+30, %v1463
    %v2096 = vsel %vm1896, 1e+30, %v1464
    %v2097 = vsel %vm1897, 1e+30, %v1465
    %v2098 = vsel %vm1898, 1e+30, %v1466
    %v2099 = vsel %vm1899, 1e+30, %v1467
    %v2100 = vsel %vm1900, 1e+30, %v1468
    %v2101 = vsel %vm1901, 1e+30, %v1469
    %v2102 = vsel %vm1902, 1e+30, %v1470
    %v2103 = vsel %vm1903, 1e+30, %v1471
    %v2104 = vsel %vm1904, 1e+30, %v1472
    %v2105 = vsel %vm1905, 1e+30, %v1473
    %v2106 = vsel %vm1906, 1e+30, %v1474
    %v2107 = vsel %vm1907, 1e+30, %v1475
    %v2108 = vsel %vm1908, 1e+30, %v1476
    %v2109 = vmin.f32 %v2045, %v2049
    %v2110 = vmin.f32 %v2109, %v2053
    %v2111 = vmin.f32 %v2110, %v2057
    %v2112 = vmin.f32 %v2111, %v2061
    %v2113 = vmin.f32 %v2112, %v2065
    %v2114 = vmin.f32 %v2113, %v2069
    %v2115 = vmin.f32 %v2114, %v2073
    %v2116 = vmin.f32 %v2115, %v2077
    %v2117 = vmin.f32 %v2116, %v2081
    %v2118 = vmin.f32 %v2117, %v2085
    %v2119 = vmin.f32 %v2118, %v2089
    %v2120 = vmin.f32 %v2119, %v2093
    %v2121 = vmin.f32 %v2120, %v2097
    %v2122 = vmin.f32 %v2121, %v2101
    %v2123 = vmin.f32 %v2122, %v2105
    %v2124 = vrot.slane %v2123, 4
    %v2125 = vmin.f32 %v2123, %v2124
    %v2126 = vrot.slane %v2125, 2
    %v2127 = vmin.f32 %v2125, %v2126
    %v2128 = vrot.slane %v2127, 1
    %v2129 = vmin.f32 %v2127, %v2128
    %v2130 = vmin.f32 %v2046, %v2050
    %v2131 = vmin.f32 %v2130, %v2054
    %v2132 = vmin.f32 %v2131, %v2058
    %v2133 = vmin.f32 %v2132, %v2062
    %v2134 = vmin.f32 %v2133, %v2066
    %v2135 = vmin.f32 %v2134, %v2070
    %v2136 = vmin.f32 %v2135, %v2074
    %v2137 = vmin.f32 %v2136, %v2078
    %v2138 = vmin.f32 %v2137, %v2082
    %v2139 = vmin.f32 %v2138, %v2086
    %v2140 = vmin.f32 %v2139, %v2090
    %v2141 = vmin.f32 %v2140, %v2094
    %v2142 = vmin.f32 %v2141, %v2098
    %v2143 = vmin.f32 %v2142, %v2102
    %v2144 = vmin.f32 %v2143, %v2106
    %v2145 = vrot.slane %v2144, 4
    %v2146 = vmin.f32 %v2144, %v2145
    %v2147 = vrot.slane %v2146, 2
    %v2148 = vmin.f32 %v2146, %v2147
    %v2149 = vrot.slane %v2148, 1
    %v2150 = vmin.f32 %v2148, %v2149
    %v2151 = vmin.f32 %v2047, %v2051
    %v2152 = vmin.f32 %v2151, %v2055
    %v2153 = vmin.f32 %v2152, %v2059
    %v2154 = vmin.f32 %v2153, %v2063
    %v2155 = vmin.f32 %v2154, %v2067
    %v2156 = vmin.f32 %v2155, %v2071
    %v2157 = vmin.f32 %v2156, %v2075
    %v2158 = vmin.f32 %v2157, %v2079
    %v2159 = vmin.f32 %v2158, %v2083
    %v2160 = vmin.f32 %v2159, %v2087
    %v2161 = vmin.f32 %v2160, %v2091
    %v2162 = vmin.f32 %v2161, %v2095
    %v2163 = vmin.f32 %v2162, %v2099
    %v2164 = vmin.f32 %v2163, %v2103
    %v2165 = vmin.f32 %v2164, %v2107
    %v2166 = vrot.slane %v2165, 4
    %v2167 = vmin.f32 %v2165, %v2166
    %v2168 = vrot.slane %v2167, 2
    %v2169 = vmin.f32 %v2167, %v2168
    %v2170 = vrot.slane %v2169, 1
    %v2171 = vmin.f32 %v2169, %v2170
    %v2172 = vmin.f32 %v2048, %v2052
    %v2173 = vmin.f32 %v2172, %v2056
    %v2174 = vmin.f32 %v2173, %v2060
    %v2175 = vmin.f32 %v2174, %v2064
    %v2176 = vmin.f32 %v2175, %v2068
    %v2177 = vmin.f32 %v2176, %v2072
    %v2178 = vmin.f32 %v2177, %v2076
    %v2179 = vmin.f32 %v2178, %v2080
    %v2180 = vmin.f32 %v2179, %v2084
    %v2181 = vmin.f32 %v2180, %v2088
    %v2182 = vmin.f32 %v2181, %v2092
    %v2183 = vmin.f32 %v2182, %v2096
    %v2184 = vmin.f32 %v2183, %v2100
    %v2185 = vmin.f32 %v2184, %v2104
    %v2186 = vmin.f32 %v2185, %v2108
    %v2187 = vrot.slane %v2186, 4
    %v2188 = vmin.f32 %v2186, %v2187
    %v2189 = vrot.slane %v2188, 2
    %v2190 = vmin.f32 %v2188, %v2189
    %v2191 = vrot.slane %v2190, 1
    %v2192 = vmin.f32 %v2190, %v2191
    %vm2193 = vcmp.le.f32.partialorder %v2045, %v2129
    %vm2194 = vcmp.le.f32.partialorder %v2046, %v2150
    %vm2195 = vcmp.le.f32.partialorder %v2047, %v2171
    %vm2196 = vcmp.le.f32.partialorder %v2048, %v2192
    %vm2197 = vcmp.le.f32.partialorder %v2049, %v2129
    %vm2198 = vcmp.le.f32.partialorder %v2050, %v2150
    %vm2199 = vcmp.le.f32.partialorder %v2051, %v2171
    %vm2200 = vcmp.le.f32.partialorder %v2052, %v2192
    %vm2201 = vcmp.le.f32.partialorder %v2053, %v2129
    %vm2202 = vcmp.le.f32.partialorder %v2054, %v2150
    %vm2203 = vcmp.le.f32.partialorder %v2055, %v2171
    %vm2204 = vcmp.le.f32.partialorder %v2056, %v2192
    %vm2205 = vcmp.le.f32.partialorder %v2057, %v2129
    %vm2206 = vcmp.le.f32.partialorder %v2058, %v2150
    %vm2207 = vcmp.le.f32.partialorder %v2059, %v2171
    %vm2208 = vcmp.le.f32.partialorder %v2060, %v2192
    %vm2209 = vcmp.le.f32.partialorder %v2061, %v2129
    %vm2210 = vcmp.le.f32.partialorder %v2062, %v2150
    %vm2211 = vcmp.le.f32.partialorder %v2063, %v2171
    %vm2212 = vcmp.le.f32.partialorder %v2064, %v2192
    %vm2213 = vcmp.le.f32.partialorder %v2065, %v2129
    %vm2214 = vcmp.le.f32.partialorder %v2066, %v2150
    %vm2215 = vcmp.le.f32.partialorder %v2067, %v2171
    %vm2216 = vcmp.le.f32.partialorder %v2068, %v2192
    %vm2217 = vcmp.le.f32.partialorder %v2069, %v2129
    %vm2218 = vcmp.le.f32.partialorder %v2070, %v2150
    %vm2219 = vcmp.le.f32.partialorder %v2071, %v2171
    %vm2220 = vcmp.le.f32.partialorder %v2072, %v2192
    %vm2221 = vcmp.le.f32.partialorder %v2073, %v2129
    %vm2222 = vcmp.le.f32.partialorder %v2074, %v2150
    %vm2223 = vcmp.le.f32.partialorder %v2075, %v2171
    %vm2224 = vcmp.le.f32.partialorder %v2076, %v2192
    %vm2225 = vcmp.le.f32.partialorder %v2077, %v2129
    %vm2226 = vcmp.le.f32.partialorder %v2078, %v2150
    %vm2227 = vcmp.le.f32.partialorder %v2079, %v2171
    %vm2228 = vcmp.le.f32.partialorder %v2080, %v2192
    %vm2229 = vcmp.le.f32.partialorder %v2081, %v2129
    %vm2230 = vcmp.le.f32.partialorder %v2082, %v2150
    %vm2231 = vcmp.le.f32.partialorder %v2083, %v2171
    %vm2232 = vcmp.le.f32.partialorder %v2084, %v2192
    %vm2233 = vcmp.le.f32.partialorder %v2085, %v2129
    %vm2234 = vcmp.le.f32.partialorder %v2086, %v2150
    %vm2235 = vcmp.le.f32.partialorder %v2087, %v2171
    %vm2236 = vcmp.le.f32.partialorder %v2088, %v2192
    %vm2237 = vcmp.le.f32.partialorder %v2089, %v2129
    %vm2238 = vcmp.le.f32.partialorder %v2090, %v2150
    %vm2239 = vcmp.le.f32.partialorder %v2091, %v2171
    %vm2240 = vcmp.le.f32.partialorder %v2092, %v2192
    %vm2241 = vcmp.le.f32.partialorder %v2093, %v2129
    %vm2242 = vcmp.le.f32.partialorder %v2094, %v2150
    %vm2243 = vcmp.le.f32.partialorder %v2095, %v2171
    %vm2244 = vcmp.le.f32.partialorder %v2096, %v2192
    %vm2245 = vcmp.le.f32.partialorder %v2097, %v2129
    %vm2246 = vcmp.le.f32.partialorder %v2098, %v2150
    %vm2247 = vcmp.le.f32.partialorder %v2099, %v2171
    %vm2248 = vcmp.le.f32.partialorder %v2100, %v2192
    %vm2249 = vcmp.le.f32.partialorder %v2101, %v2129
    %vm2250 = vcmp.le.f32.partialorder %v2102, %v2150
    %vm2251 = vcmp.le.f32.partialorder %v2103, %v2171
    %vm2252 = vcmp.le.f32.partialorder %v2104, %v2192
    %vm2253 = vcmp.le.f32.partialorder %v2105, %v2129
    %vm2254 = vcmp.le.f32.partialorder %v2106, %v2150
    %vm2255 = vcmp.le.f32.partialorder %v2107, %v2171
    %vm2256 = vcmp.le.f32.partialorder %v2108, %v2192
    %v2257 = vsel %vm2193, %v829, 128
    %v2258 = vsel %vm2194, %v829, 128
    %v2259 = vsel %vm2195, %v829, 128
    %v2260 = vsel %vm2196, %v829, 128
    %v2261 = vsel %vm2197, %v830, 128
    %v2262 = vsel %vm2198, %v830, 128
    %v2263 = vsel %vm2199, %v830, 128
    %v2264 = vsel %vm2200, %v830, 128
    %v2265 = vsel %vm2201, %v831, 128
    %v2266 = vsel %vm2202, %v831, 128
    %v2267 = vsel %vm2203, %v831, 128
    %v2268 = vsel %vm2204, %v831, 128
    %v2269 = vsel %vm2205, %v832, 128
    %v2270 = vsel %vm2206, %v832, 128
    %v2271 = vsel %vm2207, %v832, 128
    %v2272 = vsel %vm2208, %v832, 128
    %v2273 = vsel %vm2209, %v833, 128
    %v2274 = vsel %vm2210, %v833, 128
    %v2275 = vsel %vm2211, %v833, 128
    %v2276 = vsel %vm2212, %v833, 128
    %v2277 = vsel %vm2213, %v834, 128
    %v2278 = vsel %vm2214, %v834, 128
    %v2279 = vsel %vm2215, %v834, 128
    %v2280 = vsel %vm2216, %v834, 128
    %v2281 = vsel %vm2217, %v835, 128
    %v2282 = vsel %vm2218, %v835, 128
    %v2283 = vsel %vm2219, %v835, 128
    %v2284 = vsel %vm2220, %v835, 128
    %v2285 = vsel %vm2221, %v836, 128
    %v2286 = vsel %vm2222, %v836, 128
    %v2287 = vsel %vm2223, %v836, 128
    %v2288 = vsel %vm2224, %v836, 128
    %v2289 = vsel %vm2225, %v837, 128
    %v2290 = vsel %vm2226, %v837, 128
    %v2291 = vsel %vm2227, %v837, 128
    %v2292 = vsel %vm2228, %v837, 128
    %v2293 = vsel %vm2229, %v838, 128
    %v2294 = vsel %vm2230, %v838, 128
    %v2295 = vsel %vm2231, %v838, 128
    %v2296 = vsel %vm2232, %v838, 128
    %v2297 = vsel %vm2233, %v839, 128
    %v2298 = vsel %vm2234, %v839, 128
    %v2299 = vsel %vm2235, %v839, 128
    %v2300 = vsel %vm2236, %v839, 128
    %v2301 = vsel %vm2237, %v840, 128
    %v2302 = vsel %vm2238, %v840, 128
    %v2303 = vsel %vm2239, %v840, 128
    %v2304 = vsel %vm2240, %v840, 128
    %v2305 = vsel %vm2241, %v841, 128
    %v2306 = vsel %vm2242, %v841, 128
    %v2307 = vsel %vm2243, %v841, 128
    %v2308 = vsel %vm2244, %v841, 128
    %v2309 = vsel %vm2245, %v842, 128
    %v2310 = vsel %vm2246, %v842, 128
    %v2311 = vsel %vm2247, %v842, 128
    %v2312 = vsel %vm2248, %v842, 128
    %v2313 = vsel %vm2249, %v843, 128
    %v2314 = vsel %vm2250, %v843, 128
    %v2315 = vsel %vm2251, %v843, 128
    %v2316 = vsel %vm2252, %v843, 128
    %v2317 = vsel %vm2253, %v844, 128
    %v2318 = vsel %vm2254, %v844, 128
    %v2319 = vsel %vm2255, %v844, 128
    %v2320 = vsel %vm2256, %v844, 128
    %vm2321 = vcmp.lt.s32.totalorder %v2257, %v2261
    %v2322 = vsel %vm2321, %v2257, %v2261
    %vm2323 = vcmp.lt.s32.totalorder %v2322, %v2265
    %v2324 = vsel %vm2323, %v2322, %v2265
    %vm2325 = vcmp.lt.s32.totalorder %v2324, %v2269
    %v2326 = vsel %vm2325, %v2324, %v2269
    %vm2327 = vcmp.lt.s32.totalorder %v2326, %v2273
    %v2328 = vsel %vm2327, %v2326, %v2273
    %vm2329 = vcmp.lt.s32.totalorder %v2328, %v2277
    %v2330 = vsel %vm2329, %v2328, %v2277
    %vm2331 = vcmp.lt.s32.totalorder %v2330, %v2281
    %v2332 = vsel %vm2331, %v2330, %v2281
    %vm2333 = vcmp.lt.s32.totalorder %v2332, %v2285
    %v2334 = vsel %vm2333, %v2332, %v2285
    %vm2335 = vcmp.lt.s32.totalorder %v2334, %v2289
    %v2336 = vsel %vm2335, %v2334, %v2289
    %vm2337 = vcmp.lt.s32.totalorder %v2336, %v2293
    %v2338 = vsel %vm2337, %v2336, %v2293
    %vm2339 = vcmp.lt.s32.totalorder %v2338, %v2297
    %v2340 = vsel %vm2339, %v2338, %v2297
    %vm2341 = vcmp.lt.s32.totalorder %v2340, %v2301
    %v2342 = vsel %vm2341, %v2340, %v2301
    %vm2343 = vcmp.lt.s32.totalorder %v2342, %v2305
    %v2344 = vsel %vm2343, %v2342, %v2305
    %vm2345 = vcmp.lt.s32.totalorder %v2344, %v2309
    %v2346 = vsel %vm2345, %v2344, %v2309
    %vm2347 = vcmp.lt.s32.totalorder %v2346, %v2313
    %v2348 = vsel %vm2347, %v2346, %v2313
    %vm2349 = vcmp.lt.s32.totalorder %v2348, %v2317
    %v2350 = vsel %vm2349, %v2348, %v2317
    %v2351 = vrot.slane %v2350, 4
    %vm2352 = vcmp.lt.s32.totalorder %v2350, %v2351
    %v2353 = vsel %vm2352, %v2350, %v2351
    %v2354 = vrot.slane %v2353, 2
    %vm2355 = vcmp.lt.s32.totalorder %v2353, %v2354
    %v2356 = vsel %vm2355, %v2353, %v2354
    %v2357 = vrot.slane %v2356, 1
    %vm2358 = vcmp.lt.s32.totalorder %v2356, %v2357
    %v2359 = vsel %vm2358, %v2356, %v2357
    %vm2360 = vcmp.lt.s32.totalorder %v2258, %v2262
    %v2361 = vsel %vm2360, %v2258, %v2262
    %vm2362 = vcmp.lt.s32.totalorder %v2361, %v2266
    %v2363 = vsel %vm2362, %v2361, %v2266
    %vm2364 = vcmp.lt.s32.totalorder %v2363, %v2270
    %v2365 = vsel %vm2364, %v2363, %v2270
    %vm2366 = vcmp.lt.s32.totalorder %v2365, %v2274
    %v2367 = vsel %vm2366, %v2365, %v2274
    %vm2368 = vcmp.lt.s32.totalorder %v2367, %v2278
    %v2369 = vsel %vm2368, %v2367, %v2278
    %vm2370 = vcmp.lt.s32.totalorder %v2369, %v2282
    %v2371 = vsel %vm2370, %v2369, %v2282
    %vm2372 = vcmp.lt.s32.totalorder %v2371, %v2286
    %v2373 = vsel %vm2372, %v2371, %v2286
    %vm2374 = vcmp.lt.s32.totalorder %v2373, %v2290
    %v2375 = vsel %vm2374, %v2373, %v2290
    %vm2376 = vcmp.lt.s32.totalorder %v2375, %v2294
    %v2377 = vsel %vm2376, %v2375, %v2294
    %vm2378 = vcmp.lt.s32.totalorder %v2377, %v2298
    %v2379 = vsel %vm2378, %v2377, %v2298
    %vm2380 = vcmp.lt.s32.totalorder %v2379, %v2302
    %v2381 = vsel %vm2380, %v2379, %v2302
    %vm2382 = vcmp.lt.s32.totalorder %v2381, %v2306
    %v2383 = vsel %vm2382, %v2381, %v2306
    %vm2384 = vcmp.lt.s32.totalorder %v2383, %v2310
    %v2385 = vsel %vm2384, %v2383, %v2310
    %vm2386 = vcmp.lt.s32.totalorder %v2385, %v2314
    %v2387 = vsel %vm2386, %v2385, %v2314
    %vm2388 = vcmp.lt.s32.totalorder %v2387, %v2318
    %v2389 = vsel %vm2388, %v2387, %v2318
    %v2390 = vrot.slane %v2389, 4
    %vm2391 = vcmp.lt.s32.totalorder %v2389, %v2390
    %v2392 = vsel %vm2391, %v2389, %v2390
    %v2393 = vrot.slane %v2392, 2
    %vm2394 = vcmp.lt.s32.totalorder %v2392, %v2393
    %v2395 = vsel %vm2394, %v2392, %v2393
    %v2396 = vrot.slane %v2395, 1
    %vm2397 = vcmp.lt.s32.totalorder %v2395, %v2396
    %v2398 = vsel %vm2397, %v2395, %v2396
    %vm2399 = vcmp.lt.s32.totalorder %v2259, %v2263
    %v2400 = vsel %vm2399, %v2259, %v2263
    %vm2401 = vcmp.lt.s32.totalorder %v2400, %v2267
    %v2402 = vsel %vm2401, %v2400, %v2267
    %vm2403 = vcmp.lt.s32.totalorder %v2402, %v2271
    %v2404 = vsel %vm2403, %v2402, %v2271
    %vm2405 = vcmp.lt.s32.totalorder %v2404, %v2275
    %v2406 = vsel %vm2405, %v2404, %v2275
    %vm2407 = vcmp.lt.s32.totalorder %v2406, %v2279
    %v2408 = vsel %vm2407, %v2406, %v2279
    %vm2409 = vcmp.lt.s32.totalorder %v2408, %v2283
    %v2410 = vsel %vm2409, %v2408, %v2283
    %vm2411 = vcmp.lt.s32.totalorder %v2410, %v2287
    %v2412 = vsel %vm2411, %v2410, %v2287
    %vm2413 = vcmp.lt.s32.totalorder %v2412, %v2291
    %v2414 = vsel %vm2413, %v2412, %v2291
    %vm2415 = vcmp.lt.s32.totalorder %v2414, %v2295
    %v2416 = vsel %vm2415, %v2414, %v2295
    %vm2417 = vcmp.lt.s32.totalorder %v2416, %v2299
    %v2418 = vsel %vm2417, %v2416, %v2299
    %vm2419 = vcmp.lt.s32.totalorder %v2418, %v2303
    %v2420 = vsel %vm2419, %v2418, %v2303
    %vm2421 = vcmp.lt.s32.totalorder %v2420, %v2307
    %v2422 = vsel %vm2421, %v2420, %v2307
    %vm2423 = vcmp.lt.s32.totalorder %v2422, %v2311
    %v2424 = vsel %vm2423, %v2422, %v2311
    %vm2425 = vcmp.lt.s32.totalorder %v2424, %v2315
    %v2426 = vsel %vm2425, %v2424, %v2315
    %vm2427 = vcmp.lt.s32.totalorder %v2426, %v2319
    %v2428 = vsel %vm2427, %v2426, %v2319
    %v2429 = vrot.slane %v2428, 4
    %vm2430 = vcmp.lt.s32.totalorder %v2428, %v2429
    %v2431 = vsel %vm2430, %v2428, %v2429
    %v2432 = vrot.slane %v2431, 2
    %vm2433 = vcmp.lt.s32.totalorder %v2431, %v2432
    %v2434 = vsel %vm2433, %v2431, %v2432
    %v2435 = vrot.slane %v2434, 1
    %vm2436 = vcmp.lt.s32.totalorder %v2434, %v2435
    %v2437 = vsel %vm2436, %v2434, %v2435
    %vm2438 = vcmp.lt.s32.totalorder %v2260, %v2264
    %v2439 = vsel %vm2438, %v2260, %v2264
    %vm2440 = vcmp.lt.s32.totalorder %v2439, %v2268
    %v2441 = vsel %vm2440, %v2439, %v2268
    %vm2442 = vcmp.lt.s32.totalorder %v2441, %v2272
    %v2443 = vsel %vm2442, %v2441, %v2272
    %vm2444 = vcmp.lt.s32.totalorder %v2443, %v2276
    %v2445 = vsel %vm2444, %v2443, %v2276
    %vm2446 = vcmp.lt.s32.totalorder %v2445, %v2280
    %v2447 = vsel %vm2446, %v2445, %v2280
    %vm2448 = vcmp.lt.s32.totalorder %v2447, %v2284
    %v2449 = vsel %vm2448, %v2447, %v2284
    %vm2450 = vcmp.lt.s32.totalorder %v2449, %v2288
    %v2451 = vsel %vm2450, %v2449, %v2288
    %vm2452 = vcmp.lt.s32.totalorder %v2451, %v2292
    %v2453 = vsel %vm2452, %v2451, %v2292
    %vm2454 = vcmp.lt.s32.totalorder %v2453, %v2296
    %v2455 = vsel %vm2454, %v2453, %v2296
    %vm2456 = vcmp.lt.s32.totalorder %v2455, %v2300
    %v2457 = vsel %vm2456, %v2455, %v2300
    %vm2458 = vcmp.lt.s32.totalorder %v2457, %v2304
    %v2459 = vsel %vm2458, %v2457, %v2304
    %vm2460 = vcmp.lt.s32.totalorder %v2459, %v2308
    %v2461 = vsel %vm2460, %v2459, %v2308
    %vm2462 = vcmp.lt.s32.totalorder %v2461, %v2312
    %v2463 = vsel %vm2462, %v2461, %v2312
    %vm2464 = vcmp.lt.s32.totalorder %v2463, %v2316
    %v2465 = vsel %vm2464, %v2463, %v2316
    %vm2466 = vcmp.lt.s32.totalorder %v2465, %v2320
    %v2467 = vsel %vm2466, %v2465, %v2320
    %v2468 = vrot.slane %v2467, 4
    %vm2469 = vcmp.lt.s32.totalorder %v2467, %v2468
    %v2470 = vsel %vm2469, %v2467, %v2468
    %v2471 = vrot.slane %v2470, 2
    %vm2472 = vcmp.lt.s32.totalorder %v2470, %v2471
    %v2473 = vsel %vm2472, %v2470, %v2471
    %v2474 = vrot.slane %v2473, 1
    %vm2475 = vcmp.lt.s32.totalorder %v2473, %v2474
    %v2476 = vsel %vm2475, %v2473, %v2474
    %vm2477 = vcmp.eq.s32.totalorder %v829, %v2359
    %vm2478 = vcmp.eq.s32.totalorder %v829, %v2398
    %vm2479 = vcmp.eq.s32.totalorder %v829, %v2437
    %vm2480 = vcmp.eq.s32.totalorder %v829, %v2476
    %vm2481 = vcmp.eq.s32.totalorder %v830, %v2359
    %vm2482 = vcmp.eq.s32.totalorder %v830, %v2398
    %vm2483 = vcmp.eq.s32.totalorder %v830, %v2437
    %vm2484 = vcmp.eq.s32.totalorder %v830, %v2476
    %vm2485 = vcmp.eq.s32.totalorder %v831, %v2359
    %vm2486 = vcmp.eq.s32.totalorder %v831, %v2398
    %vm2487 = vcmp.eq.s32.totalorder %v831, %v2437
    %vm2488 = vcmp.eq.s32.totalorder %v831, %v2476
    %vm2489 = vcmp.eq.s32.totalorder %v832, %v2359
    %vm2490 = vcmp.eq.s32.totalorder %v832, %v2398
    %vm2491 = vcmp.eq.s32.totalorder %v832, %v2437
    %vm2492 = vcmp.eq.s32.totalorder %v832, %v2476
    %vm2493 = vcmp.eq.s32.totalorder %v833, %v2359
    %vm2494 = vcmp.eq.s32.totalorder %v833, %v2398
    %vm2495 = vcmp.eq.s32.totalorder %v833, %v2437
    %vm2496 = vcmp.eq.s32.totalorder %v833, %v2476
    %vm2497 = vcmp.eq.s32.totalorder %v834, %v2359
    %vm2498 = vcmp.eq.s32.totalorder %v834, %v2398
    %vm2499 = vcmp.eq.s32.totalorder %v834, %v2437
    %vm2500 = vcmp.eq.s32.totalorder %v834, %v2476
    %vm2501 = vcmp.eq.s32.totalorder %v835, %v2359
    %vm2502 = vcmp.eq.s32.totalorder %v835, %v2398
    %vm2503 = vcmp.eq.s32.totalorder %v835, %v2437
    %vm2504 = vcmp.eq.s32.totalorder %v835, %v2476
    %vm2505 = vcmp.eq.s32.totalorder %v836, %v2359
    %vm2506 = vcmp.eq.s32.totalorder %v836, %v2398
    %vm2507 = vcmp.eq.s32.totalorder %v836, %v2437
    %vm2508 = vcmp.eq.s32.totalorder %v836, %v2476
    %vm2509 = vcmp.eq.s32.totalorder %v837, %v2359
    %vm2510 = vcmp.eq.s32.totalorder %v837, %v2398
    %vm2511 = vcmp.eq.s32.totalorder %v837, %v2437
    %vm2512 = vcmp.eq.s32.totalorder %v837, %v2476
    %vm2513 = vcmp.eq.s32.totalorder %v838, %v2359
    %vm2514 = vcmp.eq.s32.totalorder %v838, %v2398
    %vm2515 = vcmp.eq.s32.totalorder %v838, %v2437
    %vm2516 = vcmp.eq.s32.totalorder %v838, %v2476
    %vm2517 = vcmp.eq.s32.totalorder %v839, %v2359
    %vm2518 = vcmp.eq.s32.totalorder %v839, %v2398
    %vm2519 = vcmp.eq.s32.totalorder %v839, %v2437
    %vm2520 = vcmp.eq.s32.totalorder %v839, %v2476
    %vm2521 = vcmp.eq.s32.totalorder %v840, %v2359
    %vm2522 = vcmp.eq.s32.totalorder %v840, %v2398
    %vm2523 = vcmp.eq.s32.totalorder %v840, %v2437
    %vm2524 = vcmp.eq.s32.totalorder %v840, %v2476
    %vm2525 = vcmp.eq.s32.totalorder %v841, %v2359
    %vm2526 = vcmp.eq.s32.totalorder %v841, %v2398
    %vm2527 = vcmp.eq.s32.totalorder %v841, %v2437
    %vm2528 = vcmp.eq.s32.totalorder %v841, %v2476
    %vm2529 = vcmp.eq.s32.totalorder %v842, %v2359
    %vm2530 = vcmp.eq.s32.totalorder %v842, %v2398
    %vm2531 = vcmp.eq.s32.totalorder %v842, %v2437
    %vm2532 = vcmp.eq.s32.totalorder %v842, %v2476
    %vm2533 = vcmp.eq.s32.totalorder %v843, %v2359
    %vm2534 = vcmp.eq.s32.totalorder %v843, %v2398
    %vm2535 = vcmp.eq.s32.totalorder %v843, %v2437
    %vm2536 = vcmp.eq.s32.totalorder %v843, %v2476
    %vm2537 = vcmp.eq.s32.totalorder %v844, %v2359
    %vm2538 = vcmp.eq.s32.totalorder %v844, %v2398
    %vm2539 = vcmp.eq.s32.totalorder %v844, %v2437
    %vm2540 = vcmp.eq.s32.totalorder %v844, %v2476
    %v2541 = vmax.f32 %v2129, 1e-16
    %v2542 = vmax.f32 %v2150, 1e-16
    %v2543 = vmax.f32 %v2171, 1e-16
    %v2544 = vmax.f32 %v2192, 1e-16
    %v2545 = vrcp.pop %v2541
    %v2546 = vrcp.pop %v2542
    %v2547 = vrcp.pop %v2543
    %v2548 = vrcp.pop %v2544
    %v2549 = vsel %vm2477, %v2545, 0.0
    %v2550 = vsel %vm2478, %v2546, 0.0
    %v2551 = vsel %vm2479, %v2547, 0.0
    %v2552 = vsel %vm2480, %v2548, 0.0
    %v2553 = vsel %vm2481, %v2545, 0.0
    %v2554 = vsel %vm2482, %v2546, 0.0
    %v2555 = vsel %vm2483, %v2547, 0.0
    %v2556 = vsel %vm2484, %v2548, 0.0
    %v2557 = vsel %vm2485, %v2545, 0.0
    %v2558 = vsel %vm2486, %v2546, 0.0
    %v2559 = vsel %vm2487, %v2547, 0.0
    %v2560 = vsel %vm2488, %v2548, 0.0
    %v2561 = vsel %vm2489, %v2545, 0.0
    %v2562 = vsel %vm2490, %v2546, 0.0
    %v2563 = vsel %vm2491, %v2547, 0.0
    %v2564 = vsel %vm2492, %v2548, 0.0
    %v2565 = vsel %vm2493, %v2545, 0.0
    %v2566 = vsel %vm2494, %v2546, 0.0
    %v2567 = vsel %vm2495, %v2547, 0.0
    %v2568 = vsel %vm2496, %v2548, 0.0
    %v2569 = vsel %vm2497, %v2545, 0.0
    %v2570 = vsel %vm2498, %v2546, 0.0
    %v2571 = vsel %vm2499, %v2547, 0.0
    %v2572 = vsel %vm2500, %v2548, 0.0
    %v2573 = vsel %vm2501, %v2545, 0.0
    %v2574 = vsel %vm2502, %v2546, 0.0
    %v2575 = vsel %vm2503, %v2547, 0.0
    %v2576 = vsel %vm2504, %v2548, 0.0
    %v2577 = vsel %vm2505, %v2545, 0.0
    %v2578 = vsel %vm2506, %v2546, 0.0
    %v2579 = vsel %vm2507, %v2547, 0.0
    %v2580 = vsel %vm2508, %v2548, 0.0
    %v2581 = vsel %vm2509, %v2545, 0.0
    %v2582 = vsel %vm2510, %v2546, 0.0
    %v2583 = vsel %vm2511, %v2547, 0.0
    %v2584 = vsel %vm2512, %v2548, 0.0
    %v2585 = vsel %vm2513, %v2545, 0.0
    %v2586 = vsel %vm2514, %v2546, 0.0
    %v2587 = vsel %vm2515, %v2547, 0.0
    %v2588 = vsel %vm2516, %v2548, 0.0
    %v2589 = vsel %vm2517, %v2545, 0.0
    %v2590 = vsel %vm2518, %v2546, 0.0
    %v2591 = vsel %vm2519, %v2547, 0.0
    %v2592 = vsel %vm2520, %v2548, 0.0
    %v2593 = vsel %vm2521, %v2545, 0.0
    %v2594 = vsel %vm2522, %v2546, 0.0
    %v2595 = vsel %vm2523, %v2547, 0.0
    %v2596 = vsel %vm2524, %v2548, 0.0
    %v2597 = vsel %vm2525, %v2545, 0.0
    %v2598 = vsel %vm2526, %v2546, 0.0
    %v2599 = vsel %vm2527, %v2547, 0.0
    %v2600 = vsel %vm2528, %v2548, 0.0
    %v2601 = vsel %vm2529, %v2545, 0.0
    %v2602 = vsel %vm2530, %v2546, 0.0
    %v2603 = vsel %vm2531, %v2547, 0.0
    %v2604 = vsel %vm2532, %v2548, 0.0
    %v2605 = vsel %vm2533, %v2545, 0.0
    %v2606 = vsel %vm2534, %v2546, 0.0
    %v2607 = vsel %vm2535, %v2547, 0.0
    %v2608 = vsel %vm2536, %v2548, 0.0
    %v2609 = vsel %vm2537, %v2545, 0.0
    %v2610 = vsel %vm2538, %v2546, 0.0
    %v2611 = vsel %vm2539, %v2547, 0.0
    %v2612 = vsel %vm2540, %v2548, 0.0
    %v2613 = vadd.f32 %v1981, %v2549
    %v2614 = vadd.f32 %v1982, %v2550
    %v2615 = vadd.f32 %v1983, %v2551
    %v2616 = vadd.f32 %v1984, %v2552
    %v2617 = vadd.f32 %v1985, %v2553
    %v2618 = vadd.f32 %v1986, %v2554
    %v2619 = vadd.f32 %v1987, %v2555
    %v2620 = vadd.f32 %v1988, %v2556
    %v2621 = vadd.f32 %v1989, %v2557
    %v2622 = vadd.f32 %v1990, %v2558
    %v2623 = vadd.f32 %v1991, %v2559
    %v2624 = vadd.f32 %v1992, %v2560
    %v2625 = vadd.f32 %v1993, %v2561
    %v2626 = vadd.f32 %v1994, %v2562
    %v2627 = vadd.f32 %v1995, %v2563
    %v2628 = vadd.f32 %v1996, %v2564
    %v2629 = vadd.f32 %v1997, %v2565
    %v2630 = vadd.f32 %v1998, %v2566
    %v2631 = vadd.f32 %v1999, %v2567
    %v2632 = vadd.f32 %v2000, %v2568
    %v2633 = vadd.f32 %v2001, %v2569
    %v2634 = vadd.f32 %v2002, %v2570
    %v2635 = vadd.f32 %v2003, %v2571
    %v2636 = vadd.f32 %v2004, %v2572
    %v2637 = vadd.f32 %v2005, %v2573
    %v2638 = vadd.f32 %v2006, %v2574
    %v2639 = vadd.f32 %v2007, %v2575
    %v2640 = vadd.f32 %v2008, %v2576
    %v2641 = vadd.f32 %v2009, %v2577
    %v2642 = vadd.f32 %v2010, %v2578
    %v2643 = vadd.f32 %v2011, %v2579
    %v2644 = vadd.f32 %v2012, %v2580
    %v2645 = vadd.f32 %v2013, %v2581
    %v2646 = vadd.f32 %v2014, %v2582
    %v2647 = vadd.f32 %v2015, %v2583
    %v2648 = vadd.f32 %v2016, %v2584
    %v2649 = vadd.f32 %v2017, %v2585
    %v2650 = vadd.f32 %v2018, %v2586
    %v2651 = vadd.f32 %v2019, %v2587
    %v2652 = vadd.f32 %v2020, %v2588
    %v2653 = vadd.f32 %v2021, %v2589
    %v2654 = vadd.f32 %v2022, %v2590
    %v2655 = vadd.f32 %v2023, %v2591
    %v2656 = vadd.f32 %v2024, %v2592
    %v2657 = vadd.f32 %v2025, %v2593
    %v2658 = vadd.f32 %v2026, %v2594
    %v2659 = vadd.f32 %v2027, %v2595
    %v2660 = vadd.f32 %v2028, %v2596
    %v2661 = vadd.f32 %v2029, %v2597
    %v2662 = vadd.f32 %v2030, %v2598
    %v2663 = vadd.f32 %v2031, %v2599
    %v2664 = vadd.f32 %v2032, %v2600
    %v2665 = vadd.f32 %v2033, %v2601
    %v2666 = vadd.f32 %v2034, %v2602
    %v2667 = vadd.f32 %v2035, %v2603
    %v2668 = vadd.f32 %v2036, %v2604
    %v2669 = vadd.f32 %v2037, %v2605
    %v2670 = vadd.f32 %v2038, %v2606
    %v2671 = vadd.f32 %v2039, %v2607
    %v2672 = vadd.f32 %v2040, %v2608
    %v2673 = vadd.f32 %v2041, %v2609
    %v2674 = vadd.f32 %v2042, %v2610
    %v2675 = vadd.f32 %v2043, %v2611
    %v2676 = vadd.f32 %v2044, %v2612
    %v2677 = vld [vmem:[%s2] sm:$0xff]
    %v2678 = vld [vmem:[%s2 + $0x8] sm:$0xff]
    %2679 = vmatprep.subr.mxu0 %v2674
    %2680 = vmatpush1.msra.mxu0 %v2673
    %2681 = vmatprep.subr.mxu0 %v2670
    %2682 = vmatpush1.msra.mxu0 %v2669
    %2683 = vmatprep.subr.mxu0 %v2666
    %2684 = vmatpush1.msra.mxu0 %v2665
    %2685 = vmatprep.subr.mxu0 %v2662
    %2686 = vmatpush1.msra.mxu0 %v2661
    %2687 = vmatprep.subr.mxu0 %v2658
    %2688 = vmatpush1.msra.mxu0 %v2657
    %2689 = vmatprep.subr.mxu0 %v2654
    %2690 = vmatpush1.msra.mxu0 %v2653
    %2691 = vmatprep.subr.mxu0 %v2650
    %2692 = vmatpush1.msra.mxu0 %v2649
    %2693 = vmatprep.subr.mxu0 %v2646
    %2694 = vmatpush1.msra.mxu0 %v2645
    %2695 = vmatprep.subr.mxu0 %v2642
    %2696 = vmatpush1.msra.mxu0 %v2641
    %2697 = vmatprep.subr.mxu0 %v2638
    %2698 = vmatpush1.msra.mxu0 %v2637
    %2699 = vmatprep.subr.mxu0 %v2634
    %2700 = vmatpush1.msra.mxu0 %v2633
    %2701 = vmatprep.subr.mxu0 %v2630
    %2702 = vmatpush1.msra.mxu0 %v2629
    %2703 = vmatprep.subr.mxu0 %v2626
    %2704 = vmatpush1.msra.mxu0 %v2625
    %2705 = vmatprep.subr.mxu0 %v2622
    %2706 = vmatpush1.msra.mxu0 %v2621
    %2707 = vmatprep.subr.mxu0 %v2618
    %2708 = vmatpush1.msra.mxu0 %v2617
    %2709 = vmatprep.subr.mxu0 %v2614
    %2710 = vmatpush1.msra.mxu0 %v2613
    %2711 = vmatprep.subr.mxu0 0.0
    %2712 = vmatpush2.msra.mxu0 0.0
    %2713 = vmatprep.subr.mxu0 0.0
    %2714 = vmatpush2.msra.mxu0 0.0
    %2715 = vmatprep.subr.mxu0 0.0
    %2716 = vmatpush2.msra.mxu0 0.0
    %2717 = vmatprep.subr.mxu0 0.0
    %2718 = vmatpush2.msra.mxu0 0.0
    %2719 = vmatprep.subr.mxu0 0.0
    %2720 = vmatpush2.msra.mxu0 0.0
    %2721 = vmatprep.subr.mxu0 0.0
    %2722 = vmatpush2.msra.mxu0 0.0
    %2723 = vmatprep.subr.mxu0 0.0
    %2724 = vmatpush2.msra.mxu0 0.0
    %2725 = vmatprep.subr.mxu0 0.0
    %2726 = vmatpush2.msra.mxu0 0.0
    %2727 = vmatprep.subr.mxu0 0.0
    %2728 = vmatpush2.msra.mxu0 0.0
    %2729 = vmatprep.subr.mxu0 0.0
    %2730 = vmatpush2.msra.mxu0 0.0
    %2731 = vmatprep.subr.mxu0 0.0
    %2732 = vmatpush2.msra.mxu0 0.0
    %2733 = vmatprep.subr.mxu0 0.0
    %2734 = vmatpush2.msra.mxu0 0.0
    %2735 = vmatprep.subr.mxu0 0.0
    %2736 = vmatpush2.msra.mxu0 0.0
    %2737 = vmatprep.subr.mxu0 0.0
    %2738 = vmatpush2.msra.mxu0 0.0
    %2739 = vmatprep.subr.mxu0 0.0
    %2740 = vmatpush2.msra.mxu0 0.0
    %2741 = vmatprep.subr.mxu0 0.0
    %2742 = vmatpush2.msra.mxu0 0.0
    %2743 = vmatprep.mubr.f32.mxu0 0.0
    %2744 = vmatmul.mubr.f32.gmra.mxu0 %v2677
    %v2745 = vpop.f32.mrf.mxu0
    %v2746 = vadd.f32 0.0, %v2745
    %v2747 = vpop.f32.mrf.mxu0
    %v2748 = vadd.f32 0.0, %v2747
    %2749 = vmatprep.mubr.f32.mxu0 0.0
    %2750 = vmatmul.mubr.f32.gmra.mxu0 %v2678
    %v2751 = vpop.f32.mrf.mxu0
    %v2752 = vadd.f32 0.0, %v2751
    %v2753 = vpop.f32.mrf.mxu0
    %v2754 = vadd.f32 0.0, %v2753
    %2755 = vdwg.mxu0
    %2756 = vmatprep.subr.mxu0 %v2676
    %2757 = vmatpush1.msra.mxu0 %v2675
    %2758 = vmatprep.subr.mxu0 %v2672
    %2759 = vmatpush1.msra.mxu0 %v2671
    %2760 = vmatprep.subr.mxu0 %v2668
    %2761 = vmatpush1.msra.mxu0 %v2667
    %2762 = vmatprep.subr.mxu0 %v2664
    %2763 = vmatpush1.msra.mxu0 %v2663
    %2764 = vmatprep.subr.mxu0 %v2660
    %2765 = vmatpush1.msra.mxu0 %v2659
    %2766 = vmatprep.subr.mxu0 %v2656
    %2767 = vmatpush1.msra.mxu0 %v2655
    %2768 = vmatprep.subr.mxu0 %v2652
    %2769 = vmatpush1.msra.mxu0 %v2651
    %2770 = vmatprep.subr.mxu0 %v2648
    %2771 = vmatpush1.msra.mxu0 %v2647
    %2772 = vmatprep.subr.mxu0 %v2644
    %2773 = vmatpush1.msra.mxu0 %v2643
    %2774 = vmatprep.subr.mxu0 %v2640
    %2775 = vmatpush1.msra.mxu0 %v2639
    %2776 = vmatprep.subr.mxu0 %v2636
    %2777 = vmatpush1.msra.mxu0 %v2635
    %2778 = vmatprep.subr.mxu0 %v2632
    %2779 = vmatpush1.msra.mxu0 %v2631
    %2780 = vmatprep.subr.mxu0 %v2628
    %2781 = vmatpush1.msra.mxu0 %v2627
    %2782 = vmatprep.subr.mxu0 %v2624
    %2783 = vmatpush1.msra.mxu0 %v2623
    %2784 = vmatprep.subr.mxu0 %v2620
    %2785 = vmatpush1.msra.mxu0 %v2619
    %2786 = vmatprep.subr.mxu0 %v2616
    %2787 = vmatpush1.msra.mxu0 %v2615
    %2788 = vmatprep.subr.mxu0 0.0
    %2789 = vmatpush2.msra.mxu0 0.0
    %2790 = vmatprep.subr.mxu0 0.0
    %2791 = vmatpush2.msra.mxu0 0.0
    %2792 = vmatprep.subr.mxu0 0.0
    %2793 = vmatpush2.msra.mxu0 0.0
    %2794 = vmatprep.subr.mxu0 0.0
    %2795 = vmatpush2.msra.mxu0 0.0
    %2796 = vmatprep.subr.mxu0 0.0
    %2797 = vmatpush2.msra.mxu0 0.0
    %2798 = vmatprep.subr.mxu0 0.0
    %2799 = vmatpush2.msra.mxu0 0.0
    %2800 = vmatprep.subr.mxu0 0.0
    %2801 = vmatpush2.msra.mxu0 0.0
    %2802 = vmatprep.subr.mxu0 0.0
    %2803 = vmatpush2.msra.mxu0 0.0
    %2804 = vmatprep.subr.mxu0 0.0
    %2805 = vmatpush2.msra.mxu0 0.0
    %2806 = vmatprep.subr.mxu0 0.0
    %2807 = vmatpush2.msra.mxu0 0.0
    %2808 = vmatprep.subr.mxu0 0.0
    %2809 = vmatpush2.msra.mxu0 0.0
    %2810 = vmatprep.subr.mxu0 0.0
    %2811 = vmatpush2.msra.mxu0 0.0
    %2812 = vmatprep.subr.mxu0 0.0
    %2813 = vmatpush2.msra.mxu0 0.0
    %2814 = vmatprep.subr.mxu0 0.0
    %2815 = vmatpush2.msra.mxu0 0.0
    %2816 = vmatprep.subr.mxu0 0.0
    %2817 = vmatpush2.msra.mxu0 0.0
    %2818 = vmatprep.subr.mxu0 0.0
    %2819 = vmatpush2.msra.mxu0 0.0
    %2820 = vmatprep.mubr.f32.mxu0 0.0
    %2821 = vmatmul.mubr.f32.gmra.mxu0 %v2677
    %v2822 = vpop.f32.mrf.mxu0
    %v2823 = vadd.f32 0.0, %v2822
    %v2824 = vpop.f32.mrf.mxu0
    %v2825 = vadd.f32 0.0, %v2824
    %2826 = vmatprep.mubr.f32.mxu0 0.0
    %2827 = vmatmul.mubr.f32.gmra.mxu0 %v2678
    %v2828 = vpop.f32.mrf.mxu0
    %v2829 = vadd.f32 0.0, %v2828
    %v2830 = vpop.f32.mrf.mxu0
    %v2831 = vadd.f32 0.0, %v2830
    %2832 = vdwg.mxu0
    %v2833 = vadd.f32 %v2613, %v2617
    %v2834 = vadd.f32 %v2833, %v2621
    %v2835 = vadd.f32 %v2834, %v2625
    %v2836 = vadd.f32 %v2835, %v2629
    %v2837 = vadd.f32 %v2836, %v2633
    %v2838 = vadd.f32 %v2837, %v2637
    %v2839 = vadd.f32 %v2838, %v2641
    %v2840 = vadd.f32 %v2839, %v2645
    %v2841 = vadd.f32 %v2840, %v2649
    %v2842 = vadd.f32 %v2841, %v2653
    %v2843 = vadd.f32 %v2842, %v2657
    %v2844 = vadd.f32 %v2843, %v2661
    %v2845 = vadd.f32 %v2844, %v2665
    %v2846 = vadd.f32 %v2845, %v2669
    %v2847 = vadd.f32 %v2846, %v2673
    %v2848 = vrot.slane %v2847, 4
    %v2849 = vadd.f32 %v2847, %v2848
    %v2850 = vrot.slane %v2849, 2
    %v2851 = vadd.f32 %v2849, %v2850
    %v2852 = vrot.slane %v2851, 1
    %v2853 = vadd.f32 %v2851, %v2852
    %v2854 = vadd.f32 %v2614, %v2618
    %v2855 = vadd.f32 %v2854, %v2622
    %v2856 = vadd.f32 %v2855, %v2626
    %v2857 = vadd.f32 %v2856, %v2630
    %v2858 = vadd.f32 %v2857, %v2634
    %v2859 = vadd.f32 %v2858, %v2638
    %v2860 = vadd.f32 %v2859, %v2642
    %v2861 = vadd.f32 %v2860, %v2646
    %v2862 = vadd.f32 %v2861, %v2650
    %v2863 = vadd.f32 %v2862, %v2654
    %v2864 = vadd.f32 %v2863, %v2658
    %v2865 = vadd.f32 %v2864, %v2662
    %v2866 = vadd.f32 %v2865, %v2666
    %v2867 = vadd.f32 %v2866, %v2670
    %v2868 = vadd.f32 %v2867, %v2674
    %v2869 = vrot.slane %v2868, 4
    %v2870 = vadd.f32 %v2868, %v2869
    %v2871 = vrot.slane %v2870, 2
    %v2872 = vadd.f32 %v2870, %v2871
    %v2873 = vrot.slane %v2872, 1
    %v2874 = vadd.f32 %v2872, %v2873
    %v2875 = vadd.f32 %v2615, %v2619
    %v2876 = vadd.f32 %v2875, %v2623
    %v2877 = vadd.f32 %v2876, %v2627
    %v2878 = vadd.f32 %v2877, %v2631
    %v2879 = vadd.f32 %v2878, %v2635
    %v2880 = vadd.f32 %v2879, %v2639
    %v2881 = vadd.f32 %v2880, %v2643
    %v2882 = vadd.f32 %v2881, %v2647
    %v2883 = vadd.f32 %v2882, %v2651
    %v2884 = vadd.f32 %v2883, %v2655
    %v2885 = vadd.f32 %v2884, %v2659
    %v2886 = vadd.f32 %v2885, %v2663
    %v2887 = vadd.f32 %v2886, %v2667
    %v2888 = vadd.f32 %v2887, %v2671
    %v2889 = vadd.f32 %v2888, %v2675
    %v2890 = vrot.slane %v2889, 4
    %v2891 = vadd.f32 %v2889, %v2890
    %v2892 = vrot.slane %v2891, 2
    %v2893 = vadd.f32 %v2891, %v2892
    %v2894 = vrot.slane %v2893, 1
    %v2895 = vadd.f32 %v2893, %v2894
    %v2896 = vadd.f32 %v2616, %v2620
    %v2897 = vadd.f32 %v2896, %v2624
    %v2898 = vadd.f32 %v2897, %v2628
    %v2899 = vadd.f32 %v2898, %v2632
    %v2900 = vadd.f32 %v2899, %v2636
    %v2901 = vadd.f32 %v2900, %v2640
    %v2902 = vadd.f32 %v2901, %v2644
    %v2903 = vadd.f32 %v2902, %v2648
    %v2904 = vadd.f32 %v2903, %v2652
    %v2905 = vadd.f32 %v2904, %v2656
    %v2906 = vadd.f32 %v2905, %v2660
    %v2907 = vadd.f32 %v2906, %v2664
    %v2908 = vadd.f32 %v2907, %v2668
    %v2909 = vadd.f32 %v2908, %v2672
    %v2910 = vadd.f32 %v2909, %v2676
    %v2911 = vrot.slane %v2910, 4
    %v2912 = vadd.f32 %v2910, %v2911
    %v2913 = vrot.slane %v2912, 2
    %v2914 = vadd.f32 %v2912, %v2913
    %v2915 = vrot.slane %v2914, 1
    %v2916 = vadd.f32 %v2914, %v2915
    %v2917 = vrcp.pop %v2853
    %v2918 = vrcp.pop %v2874
    %v2919 = vrcp.pop %v2895
    %v2920 = vrcp.pop %v2916
    %v2921 = vmul.f32 %v2746, %v2917
    %v2922 = vmul.f32 %v2748, %v2918
    %v2923 = vmul.f32 %v2823, %v2919
    %v2924 = vmul.f32 %v2825, %v2920
    %v2925 = vmul.f32 %v2752, %v2917
    %v2926 = vmul.f32 %v2754, %v2918
    %v2927 = vmul.f32 %v2829, %v2919
    %v2928 = vmul.f32 %v2831, %v2920
    %v2929 = vld [vmem:[%s4] sm:$0xff]
    %v2930 = vld [vmem:[%s4 + $0x8] sm:$0xff]
    %v2931 = vld [vmem:[%s3] sm:$0xff]
    %v2932 = vld [vmem:[%s3 + $0x8] sm:$0xff]
    %v2933 = vld [vmem:[%s3 + $0x10] sm:$0xff]
    %v2934 = vld [vmem:[%s3 + $0x18] sm:$0xff]
    %v2935 = vld [vmem:[%s3 + $0x20] sm:$0xff]
    %v2936 = vld [vmem:[%s3 + $0x28] sm:$0xff]
    %v2937 = vld [vmem:[%s3 + $0x30] sm:$0xff]
    %v2938 = vld [vmem:[%s3 + $0x38] sm:$0xff]
    %vm2939 = vcmask 130048
    %v2941 = vsel %vm2939, %v2929, 0
    %v2944 = vsel %vm2939, %v2930, 0
    %2946 = vmatprep.subr.mxu0 0.0
    %2947 = vmatpush1.msra.mxu0 0.0
    %2948 = vmatprep.subr.mxu0 0.0
    %2949 = vmatpush1.msra.mxu0 0.0
    %2950 = vmatprep.subr.mxu0 0.0
    %2951 = vmatpush1.msra.mxu0 0.0
    %2952 = vmatprep.subr.mxu0 0.0
    %2953 = vmatpush1.msra.mxu0 0.0
    %2954 = vmatprep.subr.mxu0 0.0
    %2955 = vmatpush1.msra.mxu0 0.0
    %2956 = vmatprep.subr.mxu0 0.0
    %2957 = vmatpush1.msra.mxu0 0.0
    %2958 = vmatprep.subr.mxu0 0.0
    %2959 = vmatpush1.msra.mxu0 0.0
    %2960 = vmatprep.subr.mxu0 0.0
    %2961 = vmatpush1.msra.mxu0 0.0
    %2962 = vmatprep.subr.mxu0 0.0
    %2963 = vmatpush1.msra.mxu0 0.0
    %2964 = vmatprep.subr.mxu0 0.0
    %2965 = vmatpush1.msra.mxu0 0.0
    %2966 = vmatprep.subr.mxu0 0.0
    %2967 = vmatpush1.msra.mxu0 0.0
    %2968 = vmatprep.subr.mxu0 0.0
    %2969 = vmatpush1.msra.mxu0 0.0
    %2970 = vmatprep.subr.mxu0 0.0
    %2971 = vmatpush1.msra.mxu0 0.0
    %2972 = vmatprep.subr.mxu0 0.0
    %2973 = vmatpush1.msra.mxu0 0.0
    %2974 = vmatprep.subr.mxu0 %v2936
    %2975 = vmatpush1.msra.mxu0 %v2935
    %2976 = vmatprep.subr.mxu0 %v2932
    %2977 = vmatpush1.msra.mxu0 %v2931
    %2978 = vmatprep.subr.mxu0 0.0
    %2979 = vmatpush2.msra.mxu0 0.0
    %2980 = vmatprep.subr.mxu0 0.0
    %2981 = vmatpush2.msra.mxu0 0.0
    %2982 = vmatprep.subr.mxu0 0.0
    %2983 = vmatpush2.msra.mxu0 0.0
    %2984 = vmatprep.subr.mxu0 0.0
    %2985 = vmatpush2.msra.mxu0 0.0
    %2986 = vmatprep.subr.mxu0 0.0
    %2987 = vmatpush2.msra.mxu0 0.0
    %2988 = vmatprep.subr.mxu0 0.0
    %2989 = vmatpush2.msra.mxu0 0.0
    %2990 = vmatprep.subr.mxu0 0.0
    %2991 = vmatpush2.msra.mxu0 0.0
    %2992 = vmatprep.subr.mxu0 0.0
    %2993 = vmatpush2.msra.mxu0 0.0
    %2994 = vmatprep.subr.mxu0 0.0
    %2995 = vmatpush2.msra.mxu0 0.0
    %2996 = vmatprep.subr.mxu0 0.0
    %2997 = vmatpush2.msra.mxu0 0.0
    %2998 = vmatprep.subr.mxu0 0.0
    %2999 = vmatpush2.msra.mxu0 0.0
    %3000 = vmatprep.subr.mxu0 0.0
    %3001 = vmatpush2.msra.mxu0 0.0
    %3002 = vmatprep.subr.mxu0 0.0
    %3003 = vmatpush2.msra.mxu0 0.0
    %3004 = vmatprep.subr.mxu0 0.0
    %3005 = vmatpush2.msra.mxu0 0.0
    %3006 = vmatprep.subr.mxu0 0.0
    %3007 = vmatpush2.msra.mxu0 0.0
    %3008 = vmatprep.subr.mxu0 0.0
    %3009 = vmatpush2.msra.mxu0 0.0
    %3010 = vmatprep.mubr.f32.mxu0 0.0
    %3011 = vmatmul.mubr.f32.gmra.mxu0 %v2941
    %v3012 = vpop.f32.mrf.mxu0
    %v3013 = vadd.f32 0.0, %v3012
    %v3014 = vpop.f32.mrf.mxu0
    %v3015 = vadd.f32 0.0, %v3014
    %3016 = vmatprep.mubr.f32.mxu0 0.0
    %3017 = vmatmul.mubr.f32.gmra.mxu0 %v2944
    %v3018 = vpop.f32.mrf.mxu0
    %v3019 = vadd.f32 0.0, %v3018
    %v3020 = vpop.f32.mrf.mxu0
    %v3021 = vadd.f32 0.0, %v3020
    %3022 = vdwg.mxu0
    %3023 = vmatprep.subr.mxu0 0.0
    %3024 = vmatpush1.msra.mxu0 0.0
    %3025 = vmatprep.subr.mxu0 0.0
    %3026 = vmatpush1.msra.mxu0 0.0
    %3027 = vmatprep.subr.mxu0 0.0
    %3028 = vmatpush1.msra.mxu0 0.0
    %3029 = vmatprep.subr.mxu0 0.0
    %3030 = vmatpush1.msra.mxu0 0.0
    %3031 = vmatprep.subr.mxu0 0.0
    %3032 = vmatpush1.msra.mxu0 0.0
    %3033 = vmatprep.subr.mxu0 0.0
    %3034 = vmatpush1.msra.mxu0 0.0
    %3035 = vmatprep.subr.mxu0 0.0
    %3036 = vmatpush1.msra.mxu0 0.0
    %3037 = vmatprep.subr.mxu0 0.0
    %3038 = vmatpush1.msra.mxu0 0.0
    %3039 = vmatprep.subr.mxu0 0.0
    %3040 = vmatpush1.msra.mxu0 0.0
    %3041 = vmatprep.subr.mxu0 0.0
    %3042 = vmatpush1.msra.mxu0 0.0
    %3043 = vmatprep.subr.mxu0 0.0
    %3044 = vmatpush1.msra.mxu0 0.0
    %3045 = vmatprep.subr.mxu0 0.0
    %3046 = vmatpush1.msra.mxu0 0.0
    %3047 = vmatprep.subr.mxu0 0.0
    %3048 = vmatpush1.msra.mxu0 0.0
    %3049 = vmatprep.subr.mxu0 0.0
    %3050 = vmatpush1.msra.mxu0 0.0
    %3051 = vmatprep.subr.mxu0 %v2938
    %3052 = vmatpush1.msra.mxu0 %v2937
    %3053 = vmatprep.subr.mxu0 %v2934
    %3054 = vmatpush1.msra.mxu0 %v2933
    %3055 = vmatprep.subr.mxu0 0.0
    %3056 = vmatpush2.msra.mxu0 0.0
    %3057 = vmatprep.subr.mxu0 0.0
    %3058 = vmatpush2.msra.mxu0 0.0
    %3059 = vmatprep.subr.mxu0 0.0
    %3060 = vmatpush2.msra.mxu0 0.0
    %3061 = vmatprep.subr.mxu0 0.0
    %3062 = vmatpush2.msra.mxu0 0.0
    %3063 = vmatprep.subr.mxu0 0.0
    %3064 = vmatpush2.msra.mxu0 0.0
    %3065 = vmatprep.subr.mxu0 0.0
    %3066 = vmatpush2.msra.mxu0 0.0
    %3067 = vmatprep.subr.mxu0 0.0
    %3068 = vmatpush2.msra.mxu0 0.0
    %3069 = vmatprep.subr.mxu0 0.0
    %3070 = vmatpush2.msra.mxu0 0.0
    %3071 = vmatprep.subr.mxu0 0.0
    %3072 = vmatpush2.msra.mxu0 0.0
    %3073 = vmatprep.subr.mxu0 0.0
    %3074 = vmatpush2.msra.mxu0 0.0
    %3075 = vmatprep.subr.mxu0 0.0
    %3076 = vmatpush2.msra.mxu0 0.0
    %3077 = vmatprep.subr.mxu0 0.0
    %3078 = vmatpush2.msra.mxu0 0.0
    %3079 = vmatprep.subr.mxu0 0.0
    %3080 = vmatpush2.msra.mxu0 0.0
    %3081 = vmatprep.subr.mxu0 0.0
    %3082 = vmatpush2.msra.mxu0 0.0
    %3083 = vmatprep.subr.mxu0 0.0
    %3084 = vmatpush2.msra.mxu0 0.0
    %3085 = vmatprep.subr.mxu0 0.0
    %3086 = vmatpush2.msra.mxu0 0.0
    %3087 = vmatprep.mubr.f32.mxu0 0.0
    %3088 = vmatmul.mubr.f32.gmra.mxu0 %v2941
    %v3089 = vpop.f32.mrf.mxu0
    %v3090 = vadd.f32 0.0, %v3089
    %v3091 = vpop.f32.mrf.mxu0
    %v3092 = vadd.f32 0.0, %v3091
    %3093 = vmatprep.mubr.f32.mxu0 0.0
    %3094 = vmatmul.mubr.f32.gmra.mxu0 %v2944
    %v3095 = vpop.f32.mrf.mxu0
    %v3096 = vadd.f32 0.0, %v3095
    %v3097 = vpop.f32.mrf.mxu0
    %v3098 = vadd.f32 0.0, %v3097
    %3099 = vdwg.mxu0
    %v3100 = vld [vmem:[%s5] sm:$0xff]
    %v3101 = vld [vmem:[%s5 + $0x8] sm:$0xff]
    %3103 = vset.pattern.permute.xlu0 0
    %3104 = vperm.xlu0 %3103, %v3100
    %v3105 = vpop.permute.xlu0 %3104
    %3108 = vset.pattern.permute.xlu0 0
    %3109 = vperm.xlu0 %3108, %v3101
    %v3110 = vpop.permute.xlu0 %3109
    %v3112 = vmul.f32 %v3013, %v3105
    %v3113 = vmul.f32 %v3015, %v3105
    %v3114 = vmul.f32 %v3090, %v3105
    %v3115 = vmul.f32 %v3092, %v3105
    %v3116 = vmul.f32 %v3019, %v3110
    %v3117 = vmul.f32 %v3021, %v3110
    %v3118 = vmul.f32 %v3096, %v3110
    %v3119 = vmul.f32 %v3098, %v3110
    %3120 = vset.pattern.permute.xlu0 1
    %3121 = vperm.xlu0 %3120, %v3100
    %v3122 = vpop.permute.xlu0 %3121
    %3124 = vset.pattern.permute.xlu0 1
    %3125 = vperm.xlu0 %3124, %v3101
    %v3126 = vpop.permute.xlu0 %3125
    %v3128 = vadd.f32 %v3112, %v3122
    %v3129 = vadd.f32 %v3113, %v3122
    %v3130 = vadd.f32 %v3114, %v3122
    %v3131 = vadd.f32 %v3115, %v3122
    %v3132 = vadd.f32 %v3116, %v3126
    %v3133 = vadd.f32 %v3117, %v3126
    %v3134 = vadd.f32 %v3118, %v3126
    %v3135 = vadd.f32 %v3119, %v3126
    %v3136 = vmax.f32 %v3128, 0.0
    %v3137 = vmax.f32 %v3129, 0.0
    %v3138 = vmax.f32 %v3130, 0.0
    %v3139 = vmax.f32 %v3131, 0.0
    %v3140 = vmax.f32 %v3132, 0.0
    %v3141 = vmax.f32 %v3133, 0.0
    %v3142 = vmax.f32 %v3134, 0.0
    %v3143 = vmax.f32 %v3135, 0.0
    %v3144 = vadd.f32 %v3136, %v2921
    %v3145 = vadd.f32 %v3137, %v2922
    %v3146 = vadd.f32 %v3138, %v2923
    %v3147 = vadd.f32 %v3139, %v2924
    %v3148 = vadd.f32 %v3140, %v2925
    %v3149 = vadd.f32 %v3141, %v2926
    %v3150 = vadd.f32 %v3142, %v2927
    %v3151 = vadd.f32 %v3143, %v2928
    %3152 = vst [vmem:[#allocation2] sm:$0xff] %v3144
    %3153 = vst [vmem:[#allocation2 + $0x8] sm:$0xff] %v3145
    %3154 = vst [vmem:[#allocation2 + $0x10] sm:$0xff] %v3146
    %3155 = vst [vmem:[#allocation2 + $0x18] sm:$0xff] %v3147
    %3156 = vst [vmem:[#allocation2 + $0x20] sm:$0xff] %v3148
    %3157 = vst [vmem:[#allocation2 + $0x28] sm:$0xff] %v3149
    %3158 = vst [vmem:[#allocation2 + $0x30] sm:$0xff] %v3150
    %3159 = vst [vmem:[#allocation2 + $0x38] sm:$0xff] %v3151
    // Predicated region
    $region26: #{transition_up.7} parent=1 // pred_check
      _
    $region27: #{transition_up.7} parent=1 // pred_check_branch
      %3161 = sbr.rel (0) target = $region29
    $region28: #{transition_up.7} parent=1 // pred_region
      %s3163 = ssub.s32 1024, 1024
      %3164 = vsyncadd [#allocation3], %s3163
      %s3165 = sshll.u32 [#allocation2], 4
      %s3166 = int_to_ptr.vmem [resolvable:$true] %s3165
      %3171 = dma.vmem_to_hbm [thread:$0]  %s3166, 1024, %s6, [#allocation3], 512, 512, 32
    $region29: #{transition_up.7} parent=1 // pred_fallthru
      _
    // Predicated region
    $region30: #{transition_up.7} parent=1 // pred_check
      _
    $region31: #{transition_up.7} parent=1 // pred_check_branch
      %3173 = sbr.rel (0) target = $region33
    $region32: #{transition_up.7} parent=1 // pred_region
      %3174 = dma.done [#allocation3], 1024
    $region33: #{transition_up.7} parent=1 // pred_fallthru
      _
    %3175 = vsyncpa [#allocation3], 1

</llo_original>
